<compile_context>
chip_gen: v7x
topology: tpu7x:2x2x1
jax: 0.10.0
libtpu: 0.0.40
codegen_flags: <defaults>
</compile_context>

<pallas_src>
import functools

import numpy as np
import jax
import jax.numpy as jnp
from jax.experimental import pallas as pl
from jax.experimental.pallas import tpu as pltpu


_COMPUTE_DTYPE = jnp.bfloat16          # MXU operand dtype (accumulate in f32)
_VMEM_LIMIT_BYTES = 48 * 1024 * 1024   # explicit scoped-VMEM budget (fits v7x)
_INV_SQRT2 = 0.7071067811865476
_LN_EPS = 1e-5


# ---------------------------------------------------------------------------
# Fused linear kernel:  [LN] -> x @ w -> [+bias] -> [GELU] -> [+residual]
# ---------------------------------------------------------------------------
def _make_linear_kernel(nk, has_ln, has_bias, activation, has_residual,
                        compute_dtype):
    def kernel(*refs):
        refs = list(refs)
        x_ref = refs.pop(0)
        w_ref = refs.pop(0)
        g_ref = refs.pop(0) if has_ln else None
        bln_ref = refs.pop(0) if has_ln else None
        b_ref = refs.pop(0) if has_bias else None
        r_ref = refs.pop(0) if has_residual else None
        o_ref = refs.pop(0)
        acc_ref = refs.pop(0) if nk > 1 else None

        x = x_ref[...].astype(jnp.float32)
        if has_ln:
            mu = jnp.mean(x, axis=-1, keepdims=True)
            var = jnp.mean((x - mu) * (x - mu), axis=-1, keepdims=True)
            x = (x - mu) * jax.lax.rsqrt(var + _LN_EPS)
            x = x * g_ref[...] + bln_ref[...]

        part = jnp.dot(x.astype(compute_dtype),
                       w_ref[...].astype(compute_dtype),
                       preferred_element_type=jnp.float32)

        def epilogue(y):
            if has_bias:
                y = y + b_ref[...]
            if activation == "gelu":
                # exact GELU (PyTorch nn.GELU default): 0.5*x*(1+erf(x/sqrt(2)))
                y = 0.5 * y * (1.0 + jax.lax.erf(y * _INV_SQRT2))
            if has_residual:
                y = y + r_ref[...].astype(jnp.float32)
            o_ref[...] = y.astype(o_ref.dtype)

        if nk == 1:
            epilogue(part)
        else:
            kk = pl.program_id(1)

            @pl.when(kk == 0)
            def _():
                acc_ref[...] = jnp.zeros_like(acc_ref)

            acc_ref[...] += part

            @pl.when(kk == nk - 1)
            def _():
                epilogue(acc_ref[...])

    return kernel


def _pick_tile_m(m, tm=512):
    tm = min(tm, m)
    if tm % 8 != 0:
        tm = m
    return tm


def _pick_tile_k(k, has_ln):
    if has_ln or k <= 2048:
        return k                      # single K tile (LN needs the full row)
    for cand in (2048, 1024, 512, 256, 128):
        if k % cand == 0:
            return cand
    return k


def fused_linear(x, w, b=None, ln=None, activation=None, residual=None,
                 tm=512, compute_dtype=_COMPUTE_DTYPE, out_dtype=jnp.float32):
    """y = [LN](x) @ w [+ b] [-> GELU] [+ residual];  x:(M,K)  w:(K,N)."""
    M, K = x.shape
    Kw, N = w.shape
    assert K == Kw
    assert activation in (None, "gelu")

    has_ln = ln is not None
    has_bias = b is not None
    has_res = residual is not None

    tm_eff = _pick_tile_m(M, tm)
    tk = _pick_tile_k(K, has_ln)
    nm = pl.cdiv(M, tm_eff)
    nk = pl.cdiv(K, tk)

    kernel = _make_linear_kernel(nk, has_ln, has_bias, activation, has_res,
                                 compute_dtype)

    in_specs = [
        pl.BlockSpec((tm_eff, tk), lambda i, k: (i, k)),
        pl.BlockSpec((tk, N), lambda i, k: (k, 0)),
    ]
    args = [x, w]
    if has_ln:
        g, bt = ln
        in_specs += [pl.BlockSpec((1, K), lambda i, k: (0, 0)),
                     pl.BlockSpec((1, K), lambda i, k: (0, 0))]
        args += [g.reshape(1, K), bt.reshape(1, K)]
    if has_bias:
        in_specs.append(pl.BlockSpec((1, N), lambda i, k: (0, 0)))
        args.append(b.reshape(1, N))
    if has_res:
        in_specs.append(pl.BlockSpec((tm_eff, N), lambda i, k: (i, 0)))
        args.append(residual)

    scratch = [pltpu.VMEM((tm_eff, N), jnp.float32)] if nk > 1 else []

    return pl.pallas_call(
        kernel,
        out_shape=jax.ShapeDtypeStruct((M, N), out_dtype),
        grid=(nm, nk),
        in_specs=in_specs,
        out_specs=pl.BlockSpec((tm_eff, N), lambda i, k: (i, 0)),
        scratch_shapes=scratch,
        compiler_params=pltpu.CompilerParams(
            dimension_semantics=("parallel", "arbitrary"),
            vmem_limit_bytes=_VMEM_LIMIT_BYTES),
    )(*args)


# ---------------------------------------------------------------------------
# Window attention kernel: batched over many (batch*head) groups per window
# ---------------------------------------------------------------------------
def _make_window_attn_kernel(scale, compute_dtype):
    def kernel(q_ref, k_ref, v_ref, bias_ref, o_ref):
        q = q_ref[0].astype(compute_dtype)        # (gb, S, D)
        k = k_ref[0].astype(compute_dtype)
        v = v_ref[0].astype(compute_dtype)
        bias = bias_ref[0]                        # (S, S) f32, may hold -inf

        s = jnp.einsum("gsd,gtd->gst", q, k,
                       preferred_element_type=jnp.float32)
        s = s * scale + bias[None]
        m = jnp.max(s, axis=-1, keepdims=True)
        p = jnp.exp(s - m)
        denom = jnp.sum(p, axis=-1, keepdims=True)
        p = p * pl.reciprocal(denom, approx=True)
        o = jnp.einsum("gst,gtd->gsd", p.astype(compute_dtype), v,
                       preferred_element_type=jnp.float32)
        o_ref[0] = o.astype(o_ref.dtype)

    return kernel


def window_attention(q, k, v, win_bias, scale, gb=32,
                     compute_dtype=_COMPUTE_DTYPE):
    """q,k,v: (nw, G, S, D)  win_bias: (nw, S, S)  ->  (nw, G, S, D)."""
    nw, G, S, D = q.shape
    gb = min(gb, G)
    ng = pl.cdiv(G, gb)
    kern = _make_window_attn_kernel(scale, compute_dtype)
    return pl.pallas_call(
        kern,
        out_shape=jax.ShapeDtypeStruct((nw, G, S, D), jnp.float32),
        grid=(nw, ng),
        in_specs=[
            pl.BlockSpec((1, gb, S, D), lambda w, g: (w, g, 0, 0)),
            pl.BlockSpec((1, gb, S, D), lambda w, g: (w, g, 0, 0)),
            pl.BlockSpec((1, gb, S, D), lambda w, g: (w, g, 0, 0)),
            pl.BlockSpec((1, S, S), lambda w, g: (w, 0, 0)),
        ],
        out_specs=pl.BlockSpec((1, gb, S, D), lambda w, g: (w, g, 0, 0)),
        compiler_params=pltpu.CompilerParams(
            dimension_semantics=("parallel", "parallel"),
            vmem_limit_bytes=_VMEM_LIMIT_BYTES),
    )(q, k, v, win_bias)


# ---------------------------------------------------------------------------
# Swin helpers (numpy constants)
# ---------------------------------------------------------------------------
def create_mask_np(window_size, displacement, upper_lower, left_right):
    ws = window_size
    mask = np.zeros((ws * ws, ws * ws), dtype=np.float32)
    if upper_lower:
        mask[-displacement * ws:, :-displacement * ws] = -np.inf
        mask[:-displacement * ws, -displacement * ws:] = -np.inf
    if left_right:
        m = mask.reshape(ws, ws, ws, ws)
        m[:, -displacement:, :, :-displacement] = -np.inf
        m[:, :-displacement, :, -displacement:] = -np.inf
        mask = m.reshape(ws * ws, ws * ws)
    return mask


def relative_indices_np(window_size):
    idx = np.array([[x, y] for x in range(window_size) for y in range(window_size)])
    dist = idx[None, :, :] - idx[:, None, :]
    return dist + window_size - 1          # (S, S, 2) in [0, 2*ws-2]


def build_window_bias(pos_emb, rel_idx, shifted, nw_h, nw_w, ul_mask, lr_mask):
    """Per-window additive bias (nw, S, S): rel-pos bias (+ shift masks)."""
    pos = pos_emb[rel_idx[..., 0], rel_idx[..., 1]]          # (S, S)
    nw = nw_h * nw_w
    bias = jnp.broadcast_to(pos, (nw,) + pos.shape)
    if shifted:
        wr = jnp.arange(nw) // nw_w
        wc = jnp.arange(nw) % nw_w
        bias = bias + jnp.where((wr == nw_h - 1)[:, None, None], ul_mask, 0.0)
        bias = bias + jnp.where((wc == nw_w - 1)[:, None, None], lr_mask, 0.0)
    return bias


# ---------------------------------------------------------------------------
# Module forward (JAX glue around the Pallas kernels)
# ---------------------------------------------------------------------------
def patch_merging(x, w, b, df):
    """x: (B, C, H, W) NCHW -> (B, H/df, W/df, out). Unfold (c-major) + linear."""
    B, C, H, W = x.shape
    nh, nw = H // df, W // df
    xf = x.reshape(B, C, nh, df, nw, df)
    xf = xf.transpose(0, 2, 4, 1, 3, 5).reshape(B * nh * nw, C * df * df)
    y = fused_linear(xf, w, b=b)
    return y.reshape(B, nh, nw, -1)


def swin_block(x, p, shifted, heads, head_dim, ws, win_bias):
    B, n_h, n_w, dim = x.shape
    inner = heads * head_dim
    S = ws * ws
    nw_h, nw_w = n_h // ws, n_w // ws
    nw = nw_h * nw_w
    scale = head_dim ** (-0.5)
    disp = ws // 2

    x_flat = x.reshape(-1, dim)

    # ---- attention block: Residual(PreNorm(WindowAttention)) ----
    # Cyclic shift and per-token LayerNorm commute, so shift first and fuse
    # the LN into the to_qkv matmul prologue (to_qkv has no bias).
    xs = jnp.roll(x, shift=(-disp, -disp), axis=(1, 2)) if shifted else x
    qkv = fused_linear(xs.reshape(-1, dim), p["qkv_w"], b=None,
                       ln=(p["ln1_g"], p["ln1_b"]))            # (M, 3*inner)
    qkv = qkv.reshape(B, n_h, n_w, 3, heads, head_dim)

    def to_windows(t):  # (B, n_h, n_w, heads, D) -> (nw, B*heads, S, D)
        t = t.reshape(B, nw_h, ws, nw_w, ws, heads, head_dim)
        t = t.transpose(1, 3, 0, 5, 2, 4, 6)
        return t.reshape(nw, B * heads, S, head_dim)

    q = to_windows(qkv[:, :, :, 0])
    k = to_windows(qkv[:, :, :, 1])
    v = to_windows(qkv[:, :, :, 2])

    ow = window_attention(q, k, v, win_bias, scale)            # (nw, B*heads, S, D)

    o = ow.reshape(nw_h, nw_w, B, heads, ws, ws, head_dim)
    o = o.transpose(2, 0, 4, 1, 5, 3, 6).reshape(B, n_h, n_w, inner)  # (h d)
    if shifted:
        o = jnp.roll(o, shift=(disp, disp), axis=(1, 2))
    # to_out commutes with the cyclic back-shift; fuse the residual add.
    x = fused_linear(o.reshape(-1, inner), p["out_w"], b=p["out_b"],
                     residual=x_flat).reshape(B, n_h, n_w, dim)

    # ---- MLP block: Residual(PreNorm(FeedForward)) ----
    x_flat = x.reshape(-1, dim)
    h1 = fused_linear(x_flat, p["ff1_w"], b=p["ff1_b"],
                      ln=(p["ln2_g"], p["ln2_b"]), activation="gelu")
    x = fused_linear(h1, p["ff2_w"], b=p["ff2_b"],
                     residual=x_flat).reshape(B, n_h, n_w, dim)
    return x


def stage_module_forward(x, params, cfg):
    df = cfg["downscaling_factor"]
    ws = cfg["window_size"]
    heads = cfg["num_heads"]
    head_dim = cfg["head_dim"]
    assert cfg["relative_pos_embedding"], "only relative_pos_embedding=True implemented"

    B, C, H, W = x.shape
    n_h, n_w = H // df, W // df
    nw_h, nw_w = n_h // ws, n_w // ws

    rel_idx = relative_indices_np(ws)
    ul_mask = jnp.asarray(create_mask_np(ws, ws // 2, True, False))
    lr_mask = jnp.asarray(create_mask_np(ws, ws // 2, False, True))

    x = patch_merging(x, params["pm_w"], params["pm_b"], df)
    for i, p in enumerate(params["blocks"]):
        shifted = (i % 2 == 1)
        win_bias = build_window_bias(p["pos_emb"], rel_idx, shifted,
                                     nw_h, nw_w, ul_mask, lr_mask)
        x = swin_block(x, p, shifted, heads, head_dim, ws, win_bias)
    return jnp.transpose(x, (0, 3, 1, 2))  # -> NCHW


# ---------------------------------------------------------------------------
# Deterministic parameter init (synthetic; shapes follow the PyTorch __init__)
# ---------------------------------------------------------------------------
def init_params(key, cfg):
    in_channels = cfg["in_channels"]
    dim = cfg["hidden_dimension"]
    layers = cfg["layers"]
    df = cfg["downscaling_factor"]
    heads = cfg["num_heads"]
    head_dim = cfg["head_dim"]
    ws = cfg["window_size"]
    inner = heads * head_dim

    keys = iter(jax.random.split(key, 128))

    def nrm(shape, scale=0.05):
        return scale * jax.random.normal(next(keys), shape, jnp.float32)

    params = {
        "pm_w": nrm((in_channels * df * df, dim)),
        "pm_b": jnp.zeros((dim,), jnp.float32),
        "blocks": [],
    }
    for _ in range(layers):
        params["blocks"].append({
            "ln1_g": jnp.ones((dim,), jnp.float32),
            "ln1_b": jnp.zeros((dim,), jnp.float32),
            "qkv_w": nrm((dim, 3 * inner)),
            "pos_emb": jax.random.normal(next(keys), (2 * ws - 1, 2 * ws - 1),
                                         jnp.float32),
            "out_w": nrm((inner, dim)),
            "out_b": jnp.zeros((dim,), jnp.float32),
            "ln2_g": jnp.ones((dim,), jnp.float32),
            "ln2_b": jnp.zeros((dim,), jnp.float32),
            "ff1_w": nrm((dim, 4 * dim)),
            "ff1_b": jnp.zeros((4 * dim,), jnp.float32),
            "ff2_w": nrm((4 * dim, dim)),
            "ff2_b": jnp.zeros((dim,), jnp.float32),
        })
    return params


# ---------------------------------------------------------------------------
if __name__ == "__main__":
    cfg = dict(
        in_channels=4,
        hidden_dimension=32,
        layers=2,                 # one (regular, shifted) pair
        downscaling_factor=2,
        num_heads=2,
        head_dim=16,
        window_size=4,
        relative_pos_embedding=True,
    )
    B, C, H, W = 2, cfg["in_channels"], 16, 16

    root = jax.random.PRNGKey(0)
    kp, kx = jax.random.split(root)
    params = init_params(kp, cfg)
    x = jax.random.normal(kx, (B, C, H, W), jnp.float32)

    fwd = jax.jit(functools.partial(stage_module_forward, cfg=cfg))
    out = jax.block_until_ready(fwd(x, params))

    expected = (B, cfg["hidden_dimension"], H // cfg["downscaling_factor"],
                W // cfg["downscaling_factor"])
    assert out.shape == expected, (out.shape, expected)
    assert bool(jnp.all(jnp.isfinite(out)))
    print("KERNEL_OK")
</pallas_src>

<mosaic_0001>
module attributes {stable_mosaic.version = 11 : i64} {
  func.func @kernel(%arg0: i32, %arg1: i32, %arg2: memref<128x16xf32, #tpu.memory_space<vmem>>, %arg3: memref<16x32xf32, #tpu.memory_space<vmem>>, %arg4: memref<1x32xf32, #tpu.memory_space<vmem>>, %arg5: memref<128x32xf32, #tpu.memory_space<vmem>>) attributes {dimension_semantics = [#tpu.dimension_semantics<parallel>, #tpu.dimension_semantics<arbitrary>], iteration_bounds = array<i64: 1, 1>, scalar_prefetch = 0 : i64, scratch_operands = 0 : i64, tpu.core_type = #tpu.core_type<tc>, window_params = [{transform_indices = @transform_0, window_bounds = array<i64: 128, 16>}, {transform_indices = @transform_1, window_bounds = array<i64: 16, 32>}, {pipeline_mode = #tpu.pipeline_mode<synchronous>, transform_indices = @transform_2, window_bounds = array<i64: 1, 32>}, {transform_indices = @transform_3, window_bounds = array<i64: 128, 32>}]} {
    %c0 = arith.constant 0 : index
    %c0_0 = arith.constant 0 : index
    %0 = vector.load %arg2[%c0, %c0_0] : memref<128x16xf32, #tpu.memory_space<vmem>>, vector<128x16xf32>
    %1 = arith.truncf %0 : vector<128x16xf32> to vector<128x16xbf16>
    %c0_1 = arith.constant 0 : index
    %c0_2 = arith.constant 0 : index
    %2 = vector.load %arg3[%c0_1, %c0_2] : memref<16x32xf32, #tpu.memory_space<vmem>>, vector<16x32xf32>
    %3 = arith.truncf %2 : vector<16x32xf32> to vector<16x32xbf16>
    %cst = arith.constant dense<0.000000e+00> : vector<128x32xf32>
    %4 = tpu.matmul %1, %3, %cst {dimension_numbers = #tpu.dot_dimension_numbers<[1], [0], [0], [1], [0, 0, 1, 1], [], []>} : vector<128x16xbf16>, vector<16x32xbf16>, vector<128x32xf32> -> vector<128x32xf32>
    %c0_3 = arith.constant 0 : index
    %c0_4 = arith.constant 0 : index
    %5 = vector.load %arg4[%c0_3, %c0_4] : memref<1x32xf32, #tpu.memory_space<vmem>>, vector<1x32xf32>
    %6 = vector.broadcast %5 : vector<1x32xf32> to vector<128x32xf32>
    %7 = arith.addf %4, %6 : vector<128x32xf32>
    %c0_5 = arith.constant 0 : index
    %c0_6 = arith.constant 0 : index
    %8 = vector.load %arg5[%c0_5, %c0_6] : memref<128x32xf32, #tpu.memory_space<vmem>>, vector<128x32xf32>
    tpu.vector_store %arg5[%c0_5, %c0_6], %7 {strides = array<i32>} : memref<128x32xf32, #tpu.memory_space<vmem>>, vector<128x32xf32>,
    return
  }
  func.func @transform_0(%arg0: i32, %arg1: i32) -> (i32, i32) {
    %c0_i32 = arith.constant 0 : i32
    return %arg0, %arg1 : i32, i32
  }
  func.func @transform_1(%arg0: i32, %arg1: i32) -> (i32, i32) {
    %c0_i32 = arith.constant 0 : i32
    %c0_i32_0 = arith.constant 0 : i32
    return %arg1, %c0_i32 : i32, i32
  }
  func.func @transform_2(%arg0: i32, %arg1: i32) -> (i32, i32) {
    %c0_i32 = arith.constant 0 : i32
    %c0_i32_0 = arith.constant 0 : i32
    %c0_i32_1 = arith.constant 0 : i32
    return %c0_i32, %c0_i32_0 : i32, i32
  }
  func.func @transform_3(%arg0: i32, %arg1: i32) -> (i32, i32) {
    %c0_i32 = arith.constant 0 : i32
    %c0_i32_0 = arith.constant 0 : i32
    return %arg0, %c0_i32 : i32, i32
  }
}

module attributes {stable_mosaic.version = 11 : i64} {
  func.func @kernel(%arg0: i32, %arg1: i32, %arg2: memref<128x32xf32, #tpu.memory_space<vmem>>, %arg3: memref<32x96xf32, #tpu.memory_space<vmem>>, %arg4: memref<1x32xf32, #tpu.memory_space<vmem>>, %arg5: memref<1x32xf32, #tpu.memory_space<vmem>>, %arg6: memref<128x96xf32, #tpu.memory_space<vmem>>) attributes {dimension_semantics = [#tpu.dimension_semantics<parallel>, #tpu.dimension_semantics<arbitrary>], iteration_bounds = array<i64: 1, 1>, scalar_prefetch = 0 : i64, scratch_operands = 0 : i64, tpu.core_type = #tpu.core_type<tc>, window_params = [{transform_indices = @transform_0, window_bounds = array<i64: 128, 32>}, {transform_indices = @transform_1, window_bounds = array<i64: 32, 96>}, {pipeline_mode = #tpu.pipeline_mode<synchronous>, transform_indices = @transform_2, window_bounds = array<i64: 1, 32>}, {pipeline_mode = #tpu.pipeline_mode<synchronous>, transform_indices = @transform_3, window_bounds = array<i64: 1, 32>}, {transform_indices = @transform_4, window_bounds = array<i64: 128, 96>}]} {
    %c0 = arith.constant 0 : index
    %c0_0 = arith.constant 0 : index
    %0 = vector.load %arg2[%c0, %c0_0] : memref<128x32xf32, #tpu.memory_space<vmem>>, vector<128x32xf32>
    %cst = arith.constant dense<0.000000e+00> : vector<128xf32>
    %1 = vector.multi_reduction <add>, %0, %cst [1] : vector<128x32xf32> to vector<128xf32>
    %2 = vector.shape_cast %1 : vector<128xf32> to vector<128x1xf32>
    %cst_1 = arith.constant 3.200000e+01 : f32
    %3 = vector.broadcast %cst_1 : f32 to vector<128x1xf32>
    %4 = arith.divf %2, %3 : vector<128x1xf32>
    %5 = vector.broadcast %4 : vector<128x1xf32> to vector<128x32xf32>
    %6 = arith.subf %0, %5 : vector<128x32xf32>
    %7 = vector.broadcast %4 : vector<128x1xf32> to vector<128x32xf32>
    %8 = arith.subf %0, %7 : vector<128x32xf32>
    %9 = arith.mulf %6, %8 : vector<128x32xf32>
    %cst_2 = arith.constant dense<0.000000e+00> : vector<128xf32>
    %10 = vector.multi_reduction <add>, %9, %cst_2 [1] : vector<128x32xf32> to vector<128xf32>
    %11 = vector.shape_cast %10 : vector<128xf32> to vector<128x1xf32>
    %cst_3 = arith.constant 3.200000e+01 : f32
    %12 = vector.broadcast %cst_3 : f32 to vector<128x1xf32>
    %13 = arith.divf %11, %12 : vector<128x1xf32>
    %14 = vector.broadcast %4 : vector<128x1xf32> to vector<128x32xf32>
    %15 = arith.subf %0, %14 : vector<128x32xf32>
    %cst_4 = arith.constant 9.99999974E-6 : f32
    %16 = vector.broadcast %cst_4 : f32 to vector<128x1xf32>
    %17 = arith.addf %13, %16 : vector<128x1xf32>
    %18 = math.rsqrt %17 : vector<128x1xf32>
    %19 = vector.broadcast %18 : vector<128x1xf32> to vector<128x32xf32>
    %20 = arith.mulf %15, %19 : vector<128x32xf32>
    %c0_5 = arith.constant 0 : index
    %c0_6 = arith.constant 0 : index
    %21 = vector.load %arg4[%c0_5, %c0_6] : memref<1x32xf32, #tpu.memory_space<vmem>>, vector<1x32xf32>
    %22 = vector.broadcast %21 : vector<1x32xf32> to vector<128x32xf32>
    %23 = arith.mulf %20, %22 : vector<128x32xf32>
    %c0_7 = arith.constant 0 : index
    %c0_8 = arith.constant 0 : index
    %24 = vector.load %arg5[%c0_7, %c0_8] : memref<1x32xf32, #tpu.memory_space<vmem>>, vector<1x32xf32>
    %25 = vector.broadcast %24 : vector<1x32xf32> to vector<128x32xf32>
    %26 = arith.addf %23, %25 : vector<128x32xf32>
    %27 = arith.truncf %26 : vector<128x32xf32> to vector<128x32xbf16>
    %c0_9 = arith.constant 0 : index
    %c0_10 = arith.constant 0 : index
    %28 = vector.load %arg3[%c0_9, %c0_10] : memref<32x96xf32, #tpu.memory_space<vmem>>, vector<32x96xf32>
    %29 = arith.truncf %28 : vector<32x96xf32> to vector<32x96xbf16>
    %cst_11 = arith.constant dense<0.000000e+00> : vector<128x96xf32>
    %30 = tpu.matmul %27, %29, %cst_11 {dimension_numbers = #tpu.dot_dimension_numbers<[1], [0], [0], [1], [0, 0, 1, 1], [], []>} : vector<128x32xbf16>, vector<32x96xbf16>, vector<128x96xf32> -> vector<128x96xf32>
    %c0_12 = arith.constant 0 : index
    %c0_13 = arith.constant 0 : index
    %31 = vector.load %arg6[%c0_12, %c0_13] : memref<128x96xf32, #tpu.memory_space<vmem>>, vector<128x96xf32>
    tpu.vector_store %arg6[%c0_12, %c0_13], %30 {strides = array<i32>} : memref<128x96xf32, #tpu.memory_space<vmem>>, vector<128x96xf32>,
    return
  }
  func.func @transform_0(%arg0: i32, %arg1: i32) -> (i32, i32) {
    %c0_i32 = arith.constant 0 : i32
    return %arg0, %arg1 : i32, i32
  }
  func.func @transform_1(%arg0: i32, %arg1: i32) -> (i32, i32) {
    %c0_i32 = arith.constant 0 : i32
    %c0_i32_0 = arith.constant 0 : i32
    return %arg1, %c0_i32 : i32, i32
  }
  func.func @transform_2(%arg0: i32, %arg1: i32) -> (i32, i32) {
    %c0_i32 = arith.constant 0 : i32
    %c0_i32_0 = arith.constant 0 : i32
    %c0_i32_1 = arith.constant 0 : i32
    return %c0_i32, %c0_i32_0 : i32, i32
  }
  func.func @transform_3(%arg0: i32, %arg1: i32) -> (i32, i32) {
    %c0_i32 = arith.constant 0 : i32
    %c0_i32_0 = arith.constant 0 : i32
    %c0_i32_1 = arith.constant 0 : i32
    return %c0_i32, %c0_i32_0 : i32, i32
  }
  func.func @transform_4(%arg0: i32, %arg1: i32) -> (i32, i32) {
    %c0_i32 = arith.constant 0 : i32
    %c0_i32_0 = arith.constant 0 : i32
    return %arg0, %c0_i32 : i32, i32
  }
}

module attributes {stable_mosaic.version = 11 : i64} {
  func.func @kernel(%arg0: i32, %arg1: i32, %arg2: memref<1x4x16x16xf32, #tpu.memory_space<vmem>>, %arg3: memref<1x4x16x16xf32, #tpu.memory_space<vmem>>, %arg4: memref<1x4x16x16xf32, #tpu.memory_space<vmem>>, %arg5: memref<1x16x16xf32, #tpu.memory_space<vmem>>, %arg6: memref<1x4x16x16xf32, #tpu.memory_space<vmem>>) attributes {dimension_semantics = [#tpu.dimension_semantics<parallel>, #tpu.dimension_semantics<parallel>], iteration_bounds = array<i64: 4, 1>, scalar_prefetch = 0 : i64, scratch_operands = 0 : i64, tpu.core_type = #tpu.core_type<tc>, window_params = [{transform_indices = @transform_0, window_bounds = array<i64: 1, 4, 16, 16>}, {transform_indices = @transform_1, window_bounds = array<i64: 1, 4, 16, 16>}, {transform_indices = @transform_2, window_bounds = array<i64: 1, 4, 16, 16>}, {transform_indices = @transform_3, window_bounds = array<i64: 1, 16, 16>}, {transform_indices = @transform_4, window_bounds = array<i64: 1, 4, 16, 16>}]} {
    %c0 = arith.constant 0 : index
    %c0_0 = arith.constant 0 : index
    %c0_1 = arith.constant 0 : index
    %c0_2 = arith.constant 0 : index
    %0 = vector.load %arg2[%c0, %c0_0, %c0_1, %c0_2] : memref<1x4x16x16xf32, #tpu.memory_space<vmem>>, vector<1x4x16x16xf32>
    %1 = vector.shape_cast %0 : vector<1x4x16x16xf32> to vector<4x16x16xf32>
    %2 = arith.truncf %1 : vector<4x16x16xf32> to vector<4x16x16xbf16>
    %c0_3 = arith.constant 0 : index
    %c0_4 = arith.constant 0 : index
    %c0_5 = arith.constant 0 : index
    %c0_6 = arith.constant 0 : index
    %3 = vector.load %arg3[%c0_3, %c0_4, %c0_5, %c0_6] : memref<1x4x16x16xf32, #tpu.memory_space<vmem>>, vector<1x4x16x16xf32>
    %4 = vector.shape_cast %3 : vector<1x4x16x16xf32> to vector<4x16x16xf32>
    %5 = arith.truncf %4 : vector<4x16x16xf32> to vector<4x16x16xbf16>
    %c0_7 = arith.constant 0 : index
    %c0_8 = arith.constant 0 : index
    %c0_9 = arith.constant 0 : index
    %c0_10 = arith.constant 0 : index
    %6 = vector.load %arg4[%c0_7, %c0_8, %c0_9, %c0_10] : memref<1x4x16x16xf32, #tpu.memory_space<vmem>>, vector<1x4x16x16xf32>
    %7 = vector.shape_cast %6 : vector<1x4x16x16xf32> to vector<4x16x16xf32>
    %8 = arith.truncf %7 : vector<4x16x16xf32> to vector<4x16x16xbf16>
    %c0_11 = arith.constant 0 : index
    %c0_12 = arith.constant 0 : index
    %c0_13 = arith.constant 0 : index
    %9 = vector.load %arg5[%c0_11, %c0_12, %c0_13] : memref<1x16x16xf32, #tpu.memory_space<vmem>>, vector<1x16x16xf32>
    %10 = vector.shape_cast %9 : vector<1x16x16xf32> to vector<16x16xf32>
    "tpu.trace_start"() <{level = 10 : i32, message = "gsd,gtd->gst"}> : () -> ()
    %cst = arith.constant dense<0.000000e+00> : vector<4x16x16xf32>
    %11 = tpu.matmul %2, %5, %cst {dimension_numbers = #tpu.dot_dimension_numbers<[2], [2], [1], [1], [0, 0, 0, 1, 1, 1], [0], [0]>} : vector<4x16x16xbf16>, vector<4x16x16xbf16>, vector<4x16x16xf32> -> vector<4x16x16xf32>
    "tpu.trace_stop"() : () -> ()
    %cst_14 = arith.constant 2.500000e-01 : f32
    %12 = vector.broadcast %cst_14 : f32 to vector<4x16x16xf32>
    %13 = arith.mulf %11, %12 : vector<4x16x16xf32>
    %14 = vector.shape_cast %10 : vector<16x16xf32> to vector<1x16x16xf32>
    %15 = vector.broadcast %14 : vector<1x16x16xf32> to vector<4x16x16xf32>
    %16 = arith.addf %13, %15 : vector<4x16x16xf32>
    %cst_15 = arith.constant dense<0xFF800000> : vector<4x16xf32>
    %17 = vector.multi_reduction <maximumf>, %16, %cst_15 [2] : vector<4x16x16xf32> to vector<4x16xf32>
    %18 = vector.shape_cast %17 : vector<4x16xf32> to vector<4x16x1xf32>
    %19 = vector.broadcast %18 : vector<4x16x1xf32> to vector<4x16x16xf32>
    %20 = arith.subf %16, %19 : vector<4x16x16xf32>
    %21 = math.exp %20 : vector<4x16x16xf32>
    %cst_16 = arith.constant dense<0.000000e+00> : vector<4x16xf32>
    %22 = vector.multi_reduction <add>, %21, %cst_16 [2] : vector<4x16x16xf32> to vector<4x16xf32>
    %23 = vector.shape_cast %22 : vector<4x16xf32> to vector<4x16x1xf32>
    %24 = tpu.reciprocal %23 {approx = true} : vector<4x16x1xf32> -> vector<4x16x1xf32>
    %25 = vector.broadcast %24 : vector<4x16x1xf32> to vector<4x16x16xf32>
    %26 = arith.mulf %21, %25 : vector<4x16x16xf32>
    %27 = arith.truncf %26 : vector<4x16x16xf32> to vector<4x16x16xbf16>
    "tpu.trace_start"() <{level = 10 : i32, message = "gst,gtd->gsd"}> : () -> ()
    %cst_17 = arith.constant dense<0.000000e+00> : vector<4x16x16xf32>
    %28 = tpu.matmul %27, %8, %cst_17 {dimension_numbers = #tpu.dot_dimension_numbers<[2], [1], [1], [2], [0, 0, 0, 1, 1, 2], [0], [0]>} : vector<4x16x16xbf16>, vector<4x16x16xbf16>, vector<4x16x16xf32> -> vector<4x16x16xf32>
    "tpu.trace_stop"() : () -> ()
    %c0_18 = arith.constant 0 : index
    %c0_19 = arith.constant 0 : index
    %c0_20 = arith.constant 0 : index
    %c0_21 = arith.constant 0 : index
    %29 = vector.load %arg6[%c0_18, %c0_19, %c0_20, %c0_21] : memref<1x4x16x16xf32, #tpu.memory_space<vmem>>, vector<1x4x16x16xf32>
    %30 = vector.shape_cast %29 : vector<1x4x16x16xf32> to vector<4x16x16xf32>
    %31 = vector.shape_cast %28 : vector<4x16x16xf32> to vector<1x4x16x16xf32>
    tpu.vector_store %arg6[%c0_18, %c0_19, %c0_20, %c0_21], %31 {strides = array<i32>} : memref<1x4x16x16xf32, #tpu.memory_space<vmem>>, vector<1x4x16x16xf32>,
    return
  }
  func.func @transform_0(%arg0: i32, %arg1: i32) -> (i32, i32, i32, i32) {
    %c0_i32 = arith.constant 0 : i32
    %c0_i32_0 = arith.constant 0 : i32
    %c0_i32_1 = arith.constant 0 : i32
    return %arg0, %arg1, %c0_i32, %c0_i32_0 : i32, i32, i32, i32
  }
  func.func @transform_1(%arg0: i32, %arg1: i32) -> (i32, i32, i32, i32) {
    %c0_i32 = arith.constant 0 : i32
    %c0_i32_0 = arith.constant 0 : i32
    %c0_i32_1 = arith.constant 0 : i32
    return %arg0, %arg1, %c0_i32, %c0_i32_0 : i32, i32, i32, i32
  }
  func.func @transform_2(%arg0: i32, %arg1: i32) -> (i32, i32, i32, i32) {
    %c0_i32 = arith.constant 0 : i32
    %c0_i32_0 = arith.constant 0 : i32
    %c0_i32_1 = arith.constant 0 : i32
    return %arg0, %arg1, %c0_i32, %c0_i32_0 : i32, i32, i32, i32
  }
  func.func @transform_3(%arg0: i32, %arg1: i32) -> (i32, i32, i32) {
    %c0_i32 = arith.constant 0 : i32
    %c0_i32_0 = arith.constant 0 : i32
    %c0_i32_1 = arith.constant 0 : i32
    return %arg0, %c0_i32, %c0_i32_0 : i32, i32, i32
  }
  func.func @transform_4(%arg0: i32, %arg1: i32) -> (i32, i32, i32, i32) {
    %c0_i32 = arith.constant 0 : i32
    %c0_i32_0 = arith.constant 0 : i32
    %c0_i32_1 = arith.constant 0 : i32
    return %arg0, %arg1, %c0_i32, %c0_i32_0 : i32, i32, i32, i32
  }
}

module attributes {stable_mosaic.version = 11 : i64} {
  func.func @kernel(%arg0: i32, %arg1: i32, %arg2: memref<128x32xf32, #tpu.memory_space<vmem>>, %arg3: memref<32x32xf32, #tpu.memory_space<vmem>>, %arg4: memref<1x32xf32, #tpu.memory_space<vmem>>, %arg5: memref<128x32xf32, #tpu.memory_space<vmem>>, %arg6: memref<128x32xf32, #tpu.memory_space<vmem>>) attributes {dimension_semantics = [#tpu.dimension_semantics<parallel>, #tpu.dimension_semantics<arbitrary>], iteration_bounds = array<i64: 1, 1>, scalar_prefetch = 0 : i64, scratch_operands = 0 : i64, tpu.core_type = #tpu.core_type<tc>, window_params = [{transform_indices = @transform_0, window_bounds = array<i64: 128, 32>}, {transform_indices = @transform_1, window_bounds = array<i64: 32, 32>}, {pipeline_mode = #tpu.pipeline_mode<synchronous>, transform_indices = @transform_2, window_bounds = array<i64: 1, 32>}, {transform_indices = @transform_3, window_bounds = array<i64: 128, 32>}, {transform_indices = @transform_4, window_bounds = array<i64: 128, 32>}]} {
    %c0 = arith.constant 0 : index
    %c0_0 = arith.constant 0 : index
    %0 = vector.load %arg2[%c0, %c0_0] : memref<128x32xf32, #tpu.memory_space<vmem>>, vector<128x32xf32>
    %1 = arith.truncf %0 : vector<128x32xf32> to vector<128x32xbf16>
    %c0_1 = arith.constant 0 : index
    %c0_2 = arith.constant 0 : index
    %2 = vector.load %arg3[%c0_1, %c0_2] : memref<32x32xf32, #tpu.memory_space<vmem>>, vector<32x32xf32>
    %3 = arith.truncf %2 : vector<32x32xf32> to vector<32x32xbf16>
    %cst = arith.constant dense<0.000000e+00> : vector<128x32xf32>
    %4 = tpu.matmul %1, %3, %cst {dimension_numbers = #tpu.dot_dimension_numbers<[1], [0], [0], [1], [0, 0, 1, 1], [], []>} : vector<128x32xbf16>, vector<32x32xbf16>, vector<128x32xf32> -> vector<128x32xf32>
    %c0_3 = arith.constant 0 : index
    %c0_4 = arith.constant 0 : index
    %5 = vector.load %arg4[%c0_3, %c0_4] : memref<1x32xf32, #tpu.memory_space<vmem>>, vector<1x32xf32>
    %6 = vector.broadcast %5 : vector<1x32xf32> to vector<128x32xf32>
    %7 = arith.addf %4, %6 : vector<128x32xf32>
    %c0_5 = arith.constant 0 : index
    %c0_6 = arith.constant 0 : index
    %8 = vector.load %arg5[%c0_5, %c0_6] : memref<128x32xf32, #tpu.memory_space<vmem>>, vector<128x32xf32>
    %9 = arith.addf %7, %8 : vector<128x32xf32>
    %c0_7 = arith.constant 0 : index
    %c0_8 = arith.constant 0 : index
    %10 = vector.load %arg6[%c0_7, %c0_8] : memref<128x32xf32, #tpu.memory_space<vmem>>, vector<128x32xf32>
    tpu.vector_store %arg6[%c0_7, %c0_8], %9 {strides = array<i32>} : memref<128x32xf32, #tpu.memory_space<vmem>>, vector<128x32xf32>,
    return
  }
  func.func @transform_0(%arg0: i32, %arg1: i32) -> (i32, i32) {
    %c0_i32 = arith.constant 0 : i32
    return %arg0, %arg1 : i32, i32
  }
  func.func @transform_1(%arg0: i32, %arg1: i32) -> (i32, i32) {
    %c0_i32 = arith.constant 0 : i32
    %c0_i32_0 = arith.constant 0 : i32
    return %arg1, %c0_i32 : i32, i32
  }
  func.func @transform_2(%arg0: i32, %arg1: i32) -> (i32, i32) {
    %c0_i32 = arith.constant 0 : i32
    %c0_i32_0 = arith.constant 0 : i32
    %c0_i32_1 = arith.constant 0 : i32
    return %c0_i32, %c0_i32_0 : i32, i32
  }
  func.func @transform_3(%arg0: i32, %arg1: i32) -> (i32, i32) {
    %c0_i32 = arith.constant 0 : i32
    %c0_i32_0 = arith.constant 0 : i32
    return %arg0, %c0_i32 : i32, i32
  }
  func.func @transform_4(%arg0: i32, %arg1: i32) -> (i32, i32) {
    %c0_i32 = arith.constant 0 : i32
    %c0_i32_0 = arith.constant 0 : i32
    return %arg0, %c0_i32 : i32, i32
  }
}

module attributes {stable_mosaic.version = 11 : i64} {
  func.func @kernel(%arg0: i32, %arg1: i32, %arg2: memref<128x32xf32, #tpu.memory_space<vmem>>, %arg3: memref<32x128xf32, #tpu.memory_space<vmem>>, %arg4: memref<1x32xf32, #tpu.memory_space<vmem>>, %arg5: memref<1x32xf32, #tpu.memory_space<vmem>>, %arg6: memref<1x128xf32, #tpu.memory_space<vmem>>, %arg7: memref<128x128xf32, #tpu.memory_space<vmem>>) attributes {dimension_semantics = [#tpu.dimension_semantics<parallel>, #tpu.dimension_semantics<arbitrary>], iteration_bounds = array<i64: 1, 1>, scalar_prefetch = 0 : i64, scratch_operands = 0 : i64, tpu.core_type = #tpu.core_type<tc>, window_params = [{transform_indices = @transform_0, window_bounds = array<i64: 128, 32>}, {transform_indices = @transform_1, window_bounds = array<i64: 32, 128>}, {pipeline_mode = #tpu.pipeline_mode<synchronous>, transform_indices = @transform_2, window_bounds = array<i64: 1, 32>}, {pipeline_mode = #tpu.pipeline_mode<synchronous>, transform_indices = @transform_3, window_bounds = array<i64: 1, 32>}, {pipeline_mode = #tpu.pipeline_mode<synchronous>, transform_indices = @transform_4, window_bounds = array<i64: 1, 128>}, {transform_indices = @transform_5, window_bounds = array<i64: 128, 128>}]} {
    %c0 = arith.constant 0 : index
    %c0_0 = arith.constant 0 : index
    %0 = vector.load %arg2[%c0, %c0_0] : memref<128x32xf32, #tpu.memory_space<vmem>>, vector<128x32xf32>
    %cst = arith.constant dense<0.000000e+00> : vector<128xf32>
    %1 = vector.multi_reduction <add>, %0, %cst [1] : vector<128x32xf32> to vector<128xf32>
    %2 = vector.shape_cast %1 : vector<128xf32> to vector<128x1xf32>
    %cst_1 = arith.constant 3.200000e+01 : f32
    %3 = vector.broadcast %cst_1 : f32 to vector<128x1xf32>
    %4 = arith.divf %2, %3 : vector<128x1xf32>
    %5 = vector.broadcast %4 : vector<128x1xf32> to vector<128x32xf32>
    %6 = arith.subf %0, %5 : vector<128x32xf32>
    %7 = vector.broadcast %4 : vector<128x1xf32> to vector<128x32xf32>
    %8 = arith.subf %0, %7 : vector<128x32xf32>
    %9 = arith.mulf %6, %8 : vector<128x32xf32>
    %cst_2 = arith.constant dense<0.000000e+00> : vector<128xf32>
    %10 = vector.multi_reduction <add>, %9, %cst_2 [1] : vector<128x32xf32> to vector<128xf32>
    %11 = vector.shape_cast %10 : vector<128xf32> to vector<128x1xf32>
    %cst_3 = arith.constant 3.200000e+01 : f32
    %12 = vector.broadcast %cst_3 : f32 to vector<128x1xf32>
    %13 = arith.divf %11, %12 : vector<128x1xf32>
    %14 = vector.broadcast %4 : vector<128x1xf32> to vector<128x32xf32>
    %15 = arith.subf %0, %14 : vector<128x32xf32>
    %cst_4 = arith.constant 9.99999974E-6 : f32
    %16 = vector.broadcast %cst_4 : f32 to vector<128x1xf32>
    %17 = arith.addf %13, %16 : vector<128x1xf32>
    %18 = math.rsqrt %17 : vector<128x1xf32>
    %19 = vector.broadcast %18 : vector<128x1xf32> to vector<128x32xf32>
    %20 = arith.mulf %15, %19 : vector<128x32xf32>
    %c0_5 = arith.constant 0 : index
    %c0_6 = arith.constant 0 : index
    %21 = vector.load %arg4[%c0_5, %c0_6] : memref<1x32xf32, #tpu.memory_space<vmem>>, vector<1x32xf32>
    %22 = vector.broadcast %21 : vector<1x32xf32> to vector<128x32xf32>
    %23 = arith.mulf %20, %22 : vector<128x32xf32>
    %c0_7 = arith.constant 0 : index
    %c0_8 = arith.constant 0 : index
    %24 = vector.load %arg5[%c0_7, %c0_8] : memref<1x32xf32, #tpu.memory_space<vmem>>, vector<1x32xf32>
    %25 = vector.broadcast %24 : vector<1x32xf32> to vector<128x32xf32>
    %26 = arith.addf %23, %25 : vector<128x32xf32>
    %27 = arith.truncf %26 : vector<128x32xf32> to vector<128x32xbf16>
    %c0_9 = arith.constant 0 : index
    %c0_10 = arith.constant 0 : index
    %28 = vector.load %arg3[%c0_9, %c0_10] : memref<32x128xf32, #tpu.memory_space<vmem>>, vector<32x128xf32>
    %29 = arith.truncf %28 : vector<32x128xf32> to vector<32x128xbf16>
    %cst_11 = arith.constant dense<0.000000e+00> : vector<128x128xf32>
    %30 = tpu.matmul %27, %29, %cst_11 {dimension_numbers = #tpu.dot_dimension_numbers<[1], [0], [0], [1], [0, 0, 1, 1], [], []>} : vector<128x32xbf16>, vector<32x128xbf16>, vector<128x128xf32> -> vector<128x128xf32>
    %c0_12 = arith.constant 0 : index
    %c0_13 = arith.constant 0 : index
    %31 = vector.load %arg6[%c0_12, %c0_13] : memref<1x128xf32, #tpu.memory_space<vmem>>, vector<1x128xf32>
    %32 = vector.broadcast %31 : vector<1x128xf32> to vector<128x128xf32>
    %33 = arith.addf %30, %32 : vector<128x128xf32>
    %cst_14 = arith.constant 5.000000e-01 : f32
    %34 = vector.broadcast %cst_14 : f32 to vector<128x128xf32>
    %35 = arith.mulf %34, %33 : vector<128x128xf32>
    %cst_15 = arith.constant 0.707106769 : f32
    %36 = vector.broadcast %cst_15 : f32 to vector<128x128xf32>
    %37 = arith.mulf %33, %36 : vector<128x128xf32>
    %38 = math.erf %37 : vector<128x128xf32>
    %cst_16 = arith.constant 1.000000e+00 : f32
    %39 = vector.broadcast %cst_16 : f32 to vector<128x128xf32>
    %40 = arith.addf %39, %38 : vector<128x128xf32>
    %41 = arith.mulf %35, %40 : vector<128x128xf32>
    %c0_17 = arith.constant 0 : index
    %c0_18 = arith.constant 0 : index
    %42 = vector.load %arg7[%c0_17, %c0_18] : memref<128x128xf32, #tpu.memory_space<vmem>>, vector<128x128xf32>
    tpu.vector_store %arg7[%c0_17, %c0_18], %41 {strides = array<i32>} : memref<128x128xf32, #tpu.memory_space<vmem>>, vector<128x128xf32>,
    return
  }
  func.func @transform_0(%arg0: i32, %arg1: i32) -> (i32, i32) {
    %c0_i32 = arith.constant 0 : i32
    return %arg0, %arg1 : i32, i32
  }
  func.func @transform_1(%arg0: i32, %arg1: i32) -> (i32, i32) {
    %c0_i32 = arith.constant 0 : i32
    %c0_i32_0 = arith.constant 0 : i32
    return %arg1, %c0_i32 : i32, i32
  }
  func.func @transform_2(%arg0: i32, %arg1: i32) -> (i32, i32) {
    %c0_i32 = arith.constant 0 : i32
    %c0_i32_0 = arith.constant 0 : i32
    %c0_i32_1 = arith.constant 0 : i32
    return %c0_i32, %c0_i32_0 : i32, i32
  }
  func.func @transform_3(%arg0: i32, %arg1: i32) -> (i32, i32) {
    %c0_i32 = arith.constant 0 : i32
    %c0_i32_0 = arith.constant 0 : i32
    %c0_i32_1 = arith.constant 0 : i32
    return %c0_i32, %c0_i32_0 : i32, i32
  }
  func.func @transform_4(%arg0: i32, %arg1: i32) -> (i32, i32) {
    %c0_i32 = arith.constant 0 : i32
    %c0_i32_0 = arith.constant 0 : i32
    %c0_i32_1 = arith.constant 0 : i32
    return %c0_i32, %c0_i32_0 : i32, i32
  }
  func.func @transform_5(%arg0: i32, %arg1: i32) -> (i32, i32) {
    %c0_i32 = arith.constant 0 : i32
    %c0_i32_0 = arith.constant 0 : i32
    return %arg0, %c0_i32 : i32, i32
  }
}

module attributes {stable_mosaic.version = 11 : i64} {
  func.func @kernel(%arg0: i32, %arg1: i32, %arg2: memref<128x128xf32, #tpu.memory_space<vmem>>, %arg3: memref<128x32xf32, #tpu.memory_space<vmem>>, %arg4: memref<1x32xf32, #tpu.memory_space<vmem>>, %arg5: memref<128x32xf32, #tpu.memory_space<vmem>>, %arg6: memref<128x32xf32, #tpu.memory_space<vmem>>) attributes {dimension_semantics = [#tpu.dimension_semantics<parallel>, #tpu.dimension_semantics<arbitrary>], iteration_bounds = array<i64: 1, 1>, scalar_prefetch = 0 : i64, scratch_operands = 0 : i64, tpu.core_type = #tpu.core_type<tc>, window_params = [{transform_indices = @transform_0, window_bounds = array<i64: 128, 128>}, {transform_indices = @transform_1, window_bounds = array<i64: 128, 32>}, {pipeline_mode = #tpu.pipeline_mode<synchronous>, transform_indices = @transform_2, window_bounds = array<i64: 1, 32>}, {transform_indices = @transform_3, window_bounds = array<i64: 128, 32>}, {transform_indices = @transform_4, window_bounds = array<i64: 128, 32>}]} {
    %c0 = arith.constant 0 : index
    %c0_0 = arith.constant 0 : index
    %0 = vector.load %arg2[%c0, %c0_0] : memref<128x128xf32, #tpu.memory_space<vmem>>, vector<128x128xf32>
    %1 = arith.truncf %0 : vector<128x128xf32> to vector<128x128xbf16>
    %c0_1 = arith.constant 0 : index
    %c0_2 = arith.constant 0 : index
    %2 = vector.load %arg3[%c0_1, %c0_2] : memref<128x32xf32, #tpu.memory_space<vmem>>, vector<128x32xf32>
    %3 = arith.truncf %2 : vector<128x32xf32> to vector<128x32xbf16>
    %cst = arith.constant dense<0.000000e+00> : vector<128x32xf32>
    %4 = tpu.matmul %1, %3, %cst {dimension_numbers = #tpu.dot_dimension_numbers<[1], [0], [0], [1], [0, 0, 1, 1], [], []>} : vector<128x128xbf16>, vector<128x32xbf16>, vector<128x32xf32> -> vector<128x32xf32>
    %c0_3 = arith.constant 0 : index
    %c0_4 = arith.constant 0 : index
    %5 = vector.load %arg4[%c0_3, %c0_4] : memref<1x32xf32, #tpu.memory_space<vmem>>, vector<1x32xf32>
    %6 = vector.broadcast %5 : vector<1x32xf32> to vector<128x32xf32>
    %7 = arith.addf %4, %6 : vector<128x32xf32>
    %c0_5 = arith.constant 0 : index
    %c0_6 = arith.constant 0 : index
    %8 = vector.load %arg5[%c0_5, %c0_6] : memref<128x32xf32, #tpu.memory_space<vmem>>, vector<128x32xf32>
    %9 = arith.addf %7, %8 : vector<128x32xf32>
    %c0_7 = arith.constant 0 : index
    %c0_8 = arith.constant 0 : index
    %10 = vector.load %arg6[%c0_7, %c0_8] : memref<128x32xf32, #tpu.memory_space<vmem>>, vector<128x32xf32>
    tpu.vector_store %arg6[%c0_7, %c0_8], %9 {strides = array<i32>} : memref<128x32xf32, #tpu.memory_space<vmem>>, vector<128x32xf32>,
    return
  }
  func.func @transform_0(%arg0: i32, %arg1: i32) -> (i32, i32) {
    %c0_i32 = arith.constant 0 : i32
    return %arg0, %arg1 : i32, i32
  }
  func.func @transform_1(%arg0: i32, %arg1: i32) -> (i32, i32) {
    %c0_i32 = arith.constant 0 : i32
    %c0_i32_0 = arith.constant 0 : i32
    return %arg1, %c0_i32 : i32, i32
  }
  func.func @transform_2(%arg0: i32, %arg1: i32) -> (i32, i32) {
    %c0_i32 = arith.constant 0 : i32
    %c0_i32_0 = arith.constant 0 : i32
    %c0_i32_1 = arith.constant 0 : i32
    return %c0_i32, %c0_i32_0 : i32, i32
  }
  func.func @transform_3(%arg0: i32, %arg1: i32) -> (i32, i32) {
    %c0_i32 = arith.constant 0 : i32
    %c0_i32_0 = arith.constant 0 : i32
    return %arg0, %c0_i32 : i32, i32
  }
  func.func @transform_4(%arg0: i32, %arg1: i32) -> (i32, i32) {
    %c0_i32 = arith.constant 0 : i32
    %c0_i32_0 = arith.constant 0 : i32
    return %arg0, %c0_i32 : i32, i32
  }
}

module attributes {stable_mosaic.version = 11 : i64} {
  func.func @kernel(%arg0: i32, %arg1: i32, %arg2: memref<128x128xf32, #tpu.memory_space<vmem>>, %arg3: memref<128x32xf32, #tpu.memory_space<vmem>>, %arg4: memref<1x32xf32, #tpu.memory_space<vmem>>, %arg5: memref<128x32xf32, #tpu.memory_space<vmem>>, %arg6: memref<128x32xf32, #tpu.memory_space<vmem>>) attributes {dimension_semantics = [#tpu.dimension_semantics<parallel>, #tpu.dimension_semantics<arbitrary>], iteration_bounds = array<i64: 1, 1>, scalar_prefetch = 0 : i64, scratch_operands = 0 : i64, tpu.core_type = #tpu.core_type<tc>, window_params = [{transform_indices = @transform_0, window_bounds = array<i64: 128, 128>}, {transform_indices = @transform_1, window_bounds = array<i64: 128, 32>}, {pipeline_mode = #tpu.pipeline_mode<synchronous>, transform_indices = @transform_2, window_bounds = array<i64: 1, 32>}, {transform_indices = @transform_3, window_bounds = array<i64: 128, 32>}, {transform_indices = @transform_4, window_bounds = array<i64: 128, 32>}]} {
    %c0 = arith.constant 0 : index
    %c0_0 = arith.constant 0 : index
    %0 = vector.load %arg2[%c0, %c0_0] : memref<128x128xf32, #tpu.memory_space<vmem>>, vector<128x128xf32>
    %1 = arith.truncf %0 : vector<128x128xf32> to vector<128x128xbf16>
    %c0_1 = arith.constant 0 : index
    %c0_2 = arith.constant 0 : index
    %2 = vector.load %arg3[%c0_1, %c0_2] : memref<128x32xf32, #tpu.memory_space<vmem>>, vector<128x32xf32>
    %3 = arith.truncf %2 : vector<128x32xf32> to vector<128x32xbf16>
    %cst = arith.constant dense<0.000000e+00> : vector<128x32xf32>
    %4 = tpu.matmul %1, %3, %cst {dimension_numbers = #tpu.dot_dimension_numbers<[1], [0], [0], [1], [0, 0, 1, 1], [], []>} : vector<128x128xbf16>, vector<128x32xbf16>, vector<128x32xf32> -> vector<128x32xf32>
    %c0_3 = arith.constant 0 : index
    %c0_4 = arith.constant 0 : index
    %5 = vector.load %arg4[%c0_3, %c0_4] : memref<1x32xf32, #tpu.memory_space<vmem>>, vector<1x32xf32>
    %6 = vector.broadcast %5 : vector<1x32xf32> to vector<128x32xf32>
    %7 = arith.addf %4, %6 : vector<128x32xf32>
    %c0_5 = arith.constant 0 : index
    %c0_6 = arith.constant 0 : index
    %8 = vector.load %arg5[%c0_5, %c0_6] : memref<128x32xf32, #tpu.memory_space<vmem>>, vector<128x32xf32>
    %9 = arith.addf %7, %8 : vector<128x32xf32>
    %c0_7 = arith.constant 0 : index
    %c0_8 = arith.constant 0 : index
    %10 = vector.load %arg6[%c0_7, %c0_8] : memref<128x32xf32, #tpu.memory_space<vmem>>, vector<128x32xf32>
    tpu.vector_store %arg6[%c0_7, %c0_8], %9 {strides = array<i32>} : memref<128x32xf32, #tpu.memory_space<vmem>>, vector<128x32xf32>,
    return
  }
  func.func @transform_0(%arg0: i32, %arg1: i32) -> (i32, i32) {
    %c0_i32 = arith.constant 0 : i32
    return %arg0, %arg1 : i32, i32
  }
  func.func @transform_1(%arg0: i32, %arg1: i32) -> (i32, i32) {
    %c0_i32 = arith.constant 0 : i32
    %c0_i32_0 = arith.constant 0 : i32
    return %arg1, %c0_i32 : i32, i32
  }
  func.func @transform_2(%arg0: i32, %arg1: i32) -> (i32, i32) {
    %c0_i32 = arith.constant 0 : i32
    %c0_i32_0 = arith.constant 0 : i32
    %c0_i32_1 = arith.constant 0 : i32
    return %c0_i32, %c0_i32_0 : i32, i32
  }
  func.func @transform_3(%arg0: i32, %arg1: i32) -> (i32, i32) {
    %c0_i32 = arith.constant 0 : i32
    %c0_i32_0 = arith.constant 0 : i32
    return %arg0, %c0_i32 : i32, i32
  }
  func.func @transform_4(%arg0: i32, %arg1: i32) -> (i32, i32) {
    %c0_i32 = arith.constant 0 : i32
    %c0_i32_0 = arith.constant 0 : i32
    return %arg0, %c0_i32 : i32, i32
  }
}

</mosaic_0001>

<llo_original>
// kernel: stage_module_forward.11
$region0: #{stage_module_forward.11}
  #allocation0 [shape = 'u32[]', space=smem, size = 0x4, offset = 0x4, fixed_abs, tag = 'smem constant byte address 0x4 - core index']
  #allocation1 [shape = 'u32[144,128]{1,0:T(1,128)}', space=vmem, size = 0x12000, scoped, tag = 'internal scratch']
  %s0 = inlined_call_operand.vmem [shape: f32[128,16], index: 0, kind: input, shape index: {}]
  %s1 = inlined_call_operand.vmem [shape: f32[16,32], index: 1, kind: input, shape index: {}]
  %s2 = inlined_call_operand.vmem [shape: f32[1,32], index: 2, kind: input, shape index: {}]
  %s3 = inlined_call_operand.vmem [shape: f32[128,32], index: 3, kind: output, shape index: {}]
  %s4 = sld [smem:[#allocation0]]
  $region22: #{stage_module_forward.11} parent=0
    _
  %s6 = ssub.s32 1, %s4
  %s7 = scalar_select 0, %s6, %s4
  // Predicated region
  $region2: #{stage_module_forward.11} parent=0 // pred_check
    _
  $region3: #{stage_module_forward.11} parent=0 // pred_check_branch
    %9 = sbr.rel (0) target = $region5
  $region4: #{stage_module_forward.11} parent=0 // pred_region
    _
  $region5: #{stage_module_forward.11} parent=0 // pred_fallthru
    _
  // Predicated region
  $region6: #{stage_module_forward.11} parent=0 // pred_check
    _
  $region7: #{stage_module_forward.11} parent=0 // pred_check_branch
    %11 = sbr.rel (0) target = $region9
  $region8: #{stage_module_forward.11} parent=0 // pred_region
    _
  $region9: #{stage_module_forward.11} parent=0 // pred_fallthru
    _
  // Predicated region
  $region10: #{stage_module_forward.11} parent=0 // pred_check
    _
  $region11: #{stage_module_forward.11} parent=0 // pred_check_branch
    %13 = sbr.rel (0) target = $region13
  $region12: #{stage_module_forward.11} parent=0 // pred_region
    _
  $region13: #{stage_module_forward.11} parent=0 // pred_fallthru
    _
  %v15 = vld [vmem:[%s0] sm:$0xff]
  %v16 = vld [vmem:[%s0 + $0x8] sm:$0xff]
  %v17 = vld [vmem:[%s0 + $0x10] sm:$0xff]
  %v18 = vld [vmem:[%s0 + $0x18] sm:$0xff]
  %v19 = vld [vmem:[%s0 + $0x20] sm:$0xff]
  %v20 = vld [vmem:[%s0 + $0x28] sm:$0xff]
  %v21 = vld [vmem:[%s0 + $0x30] sm:$0xff]
  %v22 = vld [vmem:[%s0 + $0x38] sm:$0xff]
  %v23 = vld [vmem:[%s0 + $0x40] sm:$0xff]
  %v24 = vld [vmem:[%s0 + $0x48] sm:$0xff]
  %v25 = vld [vmem:[%s0 + $0x50] sm:$0xff]
  %v26 = vld [vmem:[%s0 + $0x58] sm:$0xff]
  %v27 = vld [vmem:[%s0 + $0x60] sm:$0xff]
  %v28 = vld [vmem:[%s0 + $0x68] sm:$0xff]
  %v29 = vld [vmem:[%s0 + $0x70] sm:$0xff]
  %v30 = vld [vmem:[%s0 + $0x78] sm:$0xff]
  %v31 = vpack.c.bf16 %v16, %v15
  %v32 = vpack.c.bf16 %v18, %v17
  %v33 = vpack.c.bf16 %v20, %v19
  %v34 = vpack.c.bf16 %v22, %v21
  %v35 = vpack.c.bf16 %v24, %v23
  %v36 = vpack.c.bf16 %v26, %v25
  %v37 = vpack.c.bf16 %v28, %v27
  %v38 = vpack.c.bf16 %v30, %v29
  %v39 = vld [vmem:[%s1] sm:$0xff]
  %v40 = vld [vmem:[%s1 + $0x8] sm:$0xff]
  %v41 = vpack.c.bf16 %v40, %v39
  %v42 = vld [vmem:[%s2] sm:$0x1]
  %v44 = vlaneseq
  %v45 = vshrl.u32 %v44, 7
  %v46 = vsub.s32 0, %v45
  %v47 = vrot.slane %v42, %v46
  %vm49 = vcmask 130048
  %v51 = vsel %vm49, %v31, 0
  %v54 = vsel %vm49, %v32, 0
  %v57 = vsel %vm49, %v33, 0
  %v60 = vsel %vm49, %v34, 0
  %v63 = vsel %vm49, %v35, 0
  %v66 = vsel %vm49, %v36, 0
  %v69 = vsel %vm49, %v37, 0
  %v72 = vsel %vm49, %v38, 0
  %74 = vmatprep.subr.bf16.mxu0 0
  %75 = vmatpush1.bf16.msra.mxu0 %v41
  %76 = vmatprep.subr.bf16.mxu0 0
  %77 = vmatpush1.bf16.msra.mxu0 0
  %78 = vmatprep.subr.bf16.mxu0 0
  %79 = vmatpush1.bf16.msra.mxu0 0
  %80 = vmatprep.subr.bf16.mxu0 0
  %81 = vmatpush1.bf16.msra.mxu0 0
  %82 = vmatprep.subr.bf16.mxu0 0
  %83 = vmatpush1.bf16.msra.mxu0 0
  %84 = vmatprep.subr.bf16.mxu0 0
  %85 = vmatpush1.bf16.msra.mxu0 0
  %86 = vmatprep.subr.bf16.mxu0 0
  %87 = vmatpush1.bf16.msra.mxu0 0
  %88 = vmatprep.subr.bf16.mxu0 0
  %89 = vmatpush1.bf16.msra.mxu0 0
  %90 = vmatprep.subr.bf16.mxu0 0
  %91 = vmatpush1.bf16.msra.mxu0 0
  %92 = vmatprep.subr.bf16.mxu0 0
  %93 = vmatpush1.bf16.msra.mxu0 0
  %94 = vmatprep.subr.bf16.mxu0 0
  %95 = vmatpush1.bf16.msra.mxu0 0
  %96 = vmatprep.subr.bf16.mxu0 0
  %97 = vmatpush1.bf16.msra.mxu0 0
  %98 = vmatprep.subr.bf16.mxu0 0
  %99 = vmatpush1.bf16.msra.mxu0 0
  %100 = vmatprep.subr.bf16.mxu0 0
  %101 = vmatpush1.bf16.msra.mxu0 0
  %102 = vmatprep.subr.bf16.mxu0 0
  %103 = vmatpush1.bf16.msra.mxu0 0
  %104 = vmatprep.subr.bf16.mxu0 0
  %105 = vmatpush1.bf16.msra.mxu0 0
  %106 = vmatprep.mubr.bf16.mxu0 0
  %107 = vmatmul.mubr.bf16.gmra.mrb[0].mxu0 %v51
  %v108 = vpop.f32.mrb[0].mxu0
  %v109 = vadd.f32 %v47, %v108
  %v110 = vpop.f32.mrb[0].mxu0
  %v111 = vpop.f32.mrb[0].mxu0
  %v112 = vadd.f32 %v47, %v111
  %v113 = vpop.f32.mrb[0].mxu0
  %114 = vmatprep.mubr.bf16.mxu0 0
  %115 = vmatmul.mubr.bf16.gmra.mrb[0].mxu0 %v54
  %v116 = vpop.f32.mrb[0].mxu0
  %v117 = vadd.f32 %v47, %v116
  %v118 = vpop.f32.mrb[0].mxu0
  %v119 = vpop.f32.mrb[0].mxu0
  %v120 = vadd.f32 %v47, %v119
  %v121 = vpop.f32.mrb[0].mxu0
  %122 = vmatprep.mubr.bf16.mxu0 0
  %123 = vmatmul.mubr.bf16.gmra.mrb[0].mxu0 %v57
  %v124 = vpop.f32.mrb[0].mxu0
  %v125 = vadd.f32 %v47, %v124
  %v126 = vpop.f32.mrb[0].mxu0
  %v127 = vpop.f32.mrb[0].mxu0
  %v128 = vadd.f32 %v47, %v127
  %v129 = vpop.f32.mrb[0].mxu0
  %130 = vmatprep.mubr.bf16.mxu0 0
  %131 = vmatmul.mubr.bf16.gmra.mrb[0].mxu0 %v60
  %v132 = vpop.f32.mrb[0].mxu0
  %v133 = vadd.f32 %v47, %v132
  %v134 = vpop.f32.mrb[0].mxu0
  %v135 = vpop.f32.mrb[0].mxu0
  %v136 = vadd.f32 %v47, %v135
  %v137 = vpop.f32.mrb[0].mxu0
  %138 = vmatprep.mubr.bf16.mxu0 0
  %139 = vmatmul.mubr.bf16.gmra.mrb[0].mxu0 %v63
  %v140 = vpop.f32.mrb[0].mxu0
  %v141 = vadd.f32 %v47, %v140
  %v142 = vpop.f32.mrb[0].mxu0
  %v143 = vpop.f32.mrb[0].mxu0
  %v144 = vadd.f32 %v47, %v143
  %v145 = vpop.f32.mrb[0].mxu0
  %146 = vmatprep.mubr.bf16.mxu0 0
  %147 = vmatmul.mubr.bf16.gmra.mrb[0].mxu0 %v66
  %v148 = vpop.f32.mrb[0].mxu0
  %v149 = vadd.f32 %v47, %v148
  %v150 = vpop.f32.mrb[0].mxu0
  %v151 = vpop.f32.mrb[0].mxu0
  %v152 = vadd.f32 %v47, %v151
  %v153 = vpop.f32.mrb[0].mxu0
  %154 = vmatprep.mubr.bf16.mxu0 0
  %155 = vmatmul.mubr.bf16.gmra.mrb[0].mxu0 %v69
  %v156 = vpop.f32.mrb[0].mxu0
  %v157 = vadd.f32 %v47, %v156
  %v158 = vpop.f32.mrb[0].mxu0
  %v159 = vpop.f32.mrb[0].mxu0
  %v160 = vadd.f32 %v47, %v159
  %v161 = vpop.f32.mrb[0].mxu0
  %162 = vmatprep.mubr.bf16.mxu0 0
  %163 = vmatmul.mubr.bf16.gmra.mrb[0].mxu0 %v72
  %v164 = vpop.f32.mrb[0].mxu0
  %v165 = vadd.f32 %v47, %v164
  %v166 = vpop.f32.mrb[0].mxu0
  %v167 = vpop.f32.mrb[0].mxu0
  %v168 = vadd.f32 %v47, %v167
  %v169 = vpop.f32.mrb[0].mxu0
  %170 = vdwg.mxu0
  %vm171 = vcmask 261120
  %172 = vst.msk [vmem:[%s3] sm:$0xff] %vm171, %v109
  %173 = vst.msk [vmem:[%s3 + $0x8] sm:$0xff] %vm171, %v112
  %174 = vst.msk [vmem:[%s3 + $0x10] sm:$0xff] %vm171, %v117
  %175 = vst.msk [vmem:[%s3 + $0x18] sm:$0xff] %vm171, %v120
  %176 = vst.msk [vmem:[%s3 + $0x20] sm:$0xff] %vm171, %v125
  %177 = vst.msk [vmem:[%s3 + $0x28] sm:$0xff] %vm171, %v128
  %178 = vst.msk [vmem:[%s3 + $0x30] sm:$0xff] %vm171, %v133
  %179 = vst.msk [vmem:[%s3 + $0x38] sm:$0xff] %vm171, %v136
  %180 = vst.msk [vmem:[%s3 + $0x40] sm:$0xff] %vm171, %v141
  %181 = vst.msk [vmem:[%s3 + $0x48] sm:$0xff] %vm171, %v144
  %182 = vst.msk [vmem:[%s3 + $0x50] sm:$0xff] %vm171, %v149
  %183 = vst.msk [vmem:[%s3 + $0x58] sm:$0xff] %vm171, %v152
  %184 = vst.msk [vmem:[%s3 + $0x60] sm:$0xff] %vm171, %v157
  %185 = vst.msk [vmem:[%s3 + $0x68] sm:$0xff] %vm171, %v160
  %186 = vst.msk [vmem:[%s3 + $0x70] sm:$0xff] %vm171, %v165
  %187 = vst.msk [vmem:[%s3 + $0x78] sm:$0xff] %vm171, %v168
  // Predicated region
  $region14: #{stage_module_forward.11} parent=0 // pred_check
    _
  $region15: #{stage_module_forward.11} parent=0 // pred_check_branch
    %189 = sbr.rel (0) target = $region17
  $region16: #{stage_module_forward.11} parent=0 // pred_region
    _
  $region17: #{stage_module_forward.11} parent=0 // pred_fallthru
    _
  // Predicated region
  $region18: #{stage_module_forward.11} parent=0 // pred_check
    _
  $region19: #{stage_module_forward.11} parent=0 // pred_check_branch
    %191 = sbr.rel (0) target = $region21
  $region20: #{stage_module_forward.11} parent=0 // pred_region
    _
  $region21: #{stage_module_forward.11} parent=0 // pred_fallthru
    _

// kernel: stage_module_forward.12
$region0: #{stage_module_forward.12}
  #allocation0 [shape = 'u32[]', space=smem, size = 0x4, offset = 0x4, fixed_abs, tag = 'smem constant byte address 0x4 - core index']
  #allocation1 [shape = 'u32[144,128]{1,0:T(1,128)}', space=vmem, size = 0x12000, scoped, tag = 'internal scratch']
  %s0 = inlined_call_operand.vmem [shape: f32[128,32], index: 0, kind: input, shape index: {}]
  %s1 = inlined_call_operand.vmem [shape: f32[32,96], index: 1, kind: input, shape index: {}]
  %s2 = inlined_call_operand.vmem [shape: f32[1,32], index: 2, kind: input, shape index: {}]
  %s3 = inlined_call_operand.vmem [shape: f32[1,32], index: 3, kind: input, shape index: {}]
  %s4 = inlined_call_operand.vmem [shape: f32[128,96], index: 4, kind: output, shape index: {}]
  %s5 = sld [smem:[#allocation0]]
  $region26: #{stage_module_forward.12} parent=0
    _
  %s7 = ssub.s32 1, %s5
  %s8 = scalar_select 0, %s7, %s5
  // Predicated region
  $region2: #{stage_module_forward.12} parent=0 // pred_check
    _
  $region3: #{stage_module_forward.12} parent=0 // pred_check_branch
    %10 = sbr.rel (0) target = $region5
  $region4: #{stage_module_forward.12} parent=0 // pred_region
    _
  $region5: #{stage_module_forward.12} parent=0 // pred_fallthru
    _
  // Predicated region
  $region6: #{stage_module_forward.12} parent=0 // pred_check
    _
  $region7: #{stage_module_forward.12} parent=0 // pred_check_branch
    %12 = sbr.rel (0) target = $region9
  $region8: #{stage_module_forward.12} parent=0 // pred_region
    _
  $region9: #{stage_module_forward.12} parent=0 // pred_fallthru
    _
  // Predicated region
  $region10: #{stage_module_forward.12} parent=0 // pred_check
    _
  $region11: #{stage_module_forward.12} parent=0 // pred_check_branch
    %14 = sbr.rel (0) target = $region13
  $region12: #{stage_module_forward.12} parent=0 // pred_region
    _
  $region13: #{stage_module_forward.12} parent=0 // pred_fallthru
    _
  // Predicated region
  $region14: #{stage_module_forward.12} parent=0 // pred_check
    _
  $region15: #{stage_module_forward.12} parent=0 // pred_check_branch
    %16 = sbr.rel (0) target = $region17
  $region16: #{stage_module_forward.12} parent=0 // pred_region
    _
  $region17: #{stage_module_forward.12} parent=0 // pred_fallthru
    _
  %v18 = vld [vmem:[%s0] sm:$0xff]
  %v19 = vld [vmem:[%s0 + $0x8] sm:$0xff]
  %v20 = vld [vmem:[%s0 + $0x10] sm:$0xff]
  %v21 = vld [vmem:[%s0 + $0x18] sm:$0xff]
  %v22 = vld [vmem:[%s0 + $0x20] sm:$0xff]
  %v23 = vld [vmem:[%s0 + $0x28] sm:$0xff]
  %v24 = vld [vmem:[%s0 + $0x30] sm:$0xff]
  %v25 = vld [vmem:[%s0 + $0x38] sm:$0xff]
  %v26 = vld [vmem:[%s0 + $0x40] sm:$0xff]
  %v27 = vld [vmem:[%s0 + $0x48] sm:$0xff]
  %v28 = vld [vmem:[%s0 + $0x50] sm:$0xff]
  %v29 = vld [vmem:[%s0 + $0x58] sm:$0xff]
  %v30 = vld [vmem:[%s0 + $0x60] sm:$0xff]
  %v31 = vld [vmem:[%s0 + $0x68] sm:$0xff]
  %v32 = vld [vmem:[%s0 + $0x70] sm:$0xff]
  %v33 = vld [vmem:[%s0 + $0x78] sm:$0xff]
  %vm34 = vcmask 261120
  %v35 = vsel %vm34, %v18, 0.0
  %36 = vadd.xlane.f32.xlu0 %v35
  %v37 = vpop.xlane.xlu0 %36
  %v38 = vsel %vm34, %v19, 0.0
  %39 = vadd.xlane.f32.xlu0 %v38
  %v40 = vpop.xlane.xlu0 %39
  %v41 = vsel %vm34, %v20, 0.0
  %42 = vadd.xlane.f32.xlu0 %v41
  %v43 = vpop.xlane.xlu0 %42
  %v44 = vsel %vm34, %v21, 0.0
  %45 = vadd.xlane.f32.xlu0 %v44
  %v46 = vpop.xlane.xlu0 %45
  %v47 = vsel %vm34, %v22, 0.0
  %48 = vadd.xlane.f32.xlu0 %v47
  %v49 = vpop.xlane.xlu0 %48
  %v50 = vsel %vm34, %v23, 0.0
  %51 = vadd.xlane.f32.xlu0 %v50
  %v52 = vpop.xlane.xlu0 %51
  %v53 = vsel %vm34, %v24, 0.0
  %54 = vadd.xlane.f32.xlu0 %v53
  %v55 = vpop.xlane.xlu0 %54
  %v56 = vsel %vm34, %v25, 0.0
  %57 = vadd.xlane.f32.xlu0 %v56
  %v58 = vpop.xlane.xlu0 %57
  %v59 = vsel %vm34, %v26, 0.0
  %60 = vadd.xlane.f32.xlu0 %v59
  %v61 = vpop.xlane.xlu0 %60
  %v62 = vsel %vm34, %v27, 0.0
  %63 = vadd.xlane.f32.xlu0 %v62
  %v64 = vpop.xlane.xlu0 %63
  %v65 = vsel %vm34, %v28, 0.0
  %66 = vadd.xlane.f32.xlu0 %v65
  %v67 = vpop.xlane.xlu0 %66
  %v68 = vsel %vm34, %v29, 0.0
  %69 = vadd.xlane.f32.xlu0 %v68
  %v70 = vpop.xlane.xlu0 %69
  %v71 = vsel %vm34, %v30, 0.0
  %72 = vadd.xlane.f32.xlu0 %v71
  %v73 = vpop.xlane.xlu0 %72
  %v74 = vsel %vm34, %v31, 0.0
  %75 = vadd.xlane.f32.xlu0 %v74
  %v76 = vpop.xlane.xlu0 %75
  %v77 = vsel %vm34, %v32, 0.0
  %78 = vadd.xlane.f32.xlu0 %v77
  %v79 = vpop.xlane.xlu0 %78
  %v80 = vsel %vm34, %v33, 0.0
  %81 = vadd.xlane.f32.xlu0 %v80
  %v82 = vpop.xlane.xlu0 %81
  %v83 = vrcp.pop 32.0
  %v84 = vmul.f32 %v37, %v83
  %v85 = vmul.f32 %v40, %v83
  %v86 = vmul.f32 %v43, %v83
  %v87 = vmul.f32 %v46, %v83
  %v88 = vmul.f32 %v49, %v83
  %v89 = vmul.f32 %v52, %v83
  %v90 = vmul.f32 %v55, %v83
  %v91 = vmul.f32 %v58, %v83
  %v92 = vmul.f32 %v61, %v83
  %v93 = vmul.f32 %v64, %v83
  %v94 = vmul.f32 %v67, %v83
  %v95 = vmul.f32 %v70, %v83
  %v96 = vmul.f32 %v73, %v83
  %v97 = vmul.f32 %v76, %v83
  %v98 = vmul.f32 %v79, %v83
  %v99 = vmul.f32 %v82, %v83
  %v100 = vsub.f32 %v18, %v84
  %v101 = vsub.f32 %v19, %v85
  %v102 = vsub.f32 %v20, %v86
  %v103 = vsub.f32 %v21, %v87
  %v104 = vsub.f32 %v22, %v88
  %v105 = vsub.f32 %v23, %v89
  %v106 = vsub.f32 %v24, %v90
  %v107 = vsub.f32 %v25, %v91
  %v108 = vsub.f32 %v26, %v92
  %v109 = vsub.f32 %v27, %v93
  %v110 = vsub.f32 %v28, %v94
  %v111 = vsub.f32 %v29, %v95
  %v112 = vsub.f32 %v30, %v96
  %v113 = vsub.f32 %v31, %v97
  %v114 = vsub.f32 %v32, %v98
  %v115 = vsub.f32 %v33, %v99
  %v116 = vmul.f32 %v100, %v100
  %v117 = vmul.f32 %v101, %v101
  %v118 = vmul.f32 %v102, %v102
  %v119 = vmul.f32 %v103, %v103
  %v120 = vmul.f32 %v104, %v104
  %v121 = vmul.f32 %v105, %v105
  %v122 = vmul.f32 %v106, %v106
  %v123 = vmul.f32 %v107, %v107
  %v124 = vmul.f32 %v108, %v108
  %v125 = vmul.f32 %v109, %v109
  %v126 = vmul.f32 %v110, %v110
  %v127 = vmul.f32 %v111, %v111
  %v128 = vmul.f32 %v112, %v112
  %v129 = vmul.f32 %v113, %v113
  %v130 = vmul.f32 %v114, %v114
  %v131 = vmul.f32 %v115, %v115
  %v132 = vsel %vm34, %v116, 0.0
  %133 = vadd.xlane.f32.xlu0 %v132
  %v134 = vpop.xlane.xlu0 %133
  %v135 = vsel %vm34, %v117, 0.0
  %136 = vadd.xlane.f32.xlu0 %v135
  %v137 = vpop.xlane.xlu0 %136
  %v138 = vsel %vm34, %v118, 0.0
  %139 = vadd.xlane.f32.xlu0 %v138
  %v140 = vpop.xlane.xlu0 %139
  %v141 = vsel %vm34, %v119, 0.0
  %142 = vadd.xlane.f32.xlu0 %v141
  %v143 = vpop.xlane.xlu0 %142
  %v144 = vsel %vm34, %v120, 0.0
  %145 = vadd.xlane.f32.xlu0 %v144
  %v146 = vpop.xlane.xlu0 %145
  %v147 = vsel %vm34, %v121, 0.0
  %148 = vadd.xlane.f32.xlu0 %v147
  %v149 = vpop.xlane.xlu0 %148
  %v150 = vsel %vm34, %v122, 0.0
  %151 = vadd.xlane.f32.xlu0 %v150
  %v152 = vpop.xlane.xlu0 %151
  %v153 = vsel %vm34, %v123, 0.0
  %154 = vadd.xlane.f32.xlu0 %v153
  %v155 = vpop.xlane.xlu0 %154
  %v156 = vsel %vm34, %v124, 0.0
  %157 = vadd.xlane.f32.xlu0 %v156
  %v158 = vpop.xlane.xlu0 %157
  %v159 = vsel %vm34, %v125, 0.0
  %160 = vadd.xlane.f32.xlu0 %v159
  %v161 = vpop.xlane.xlu0 %160
  %v162 = vsel %vm34, %v126, 0.0
  %163 = vadd.xlane.f32.xlu0 %v162
  %v164 = vpop.xlane.xlu0 %163
  %v165 = vsel %vm34, %v127, 0.0
  %166 = vadd.xlane.f32.xlu0 %v165
  %v167 = vpop.xlane.xlu0 %166
  %v168 = vsel %vm34, %v128, 0.0
  %169 = vadd.xlane.f32.xlu0 %v168
  %v170 = vpop.xlane.xlu0 %169
  %v171 = vsel %vm34, %v129, 0.0
  %172 = vadd.xlane.f32.xlu0 %v171
  %v173 = vpop.xlane.xlu0 %172
  %v174 = vsel %vm34, %v130, 0.0
  %175 = vadd.xlane.f32.xlu0 %v174
  %v176 = vpop.xlane.xlu0 %175
  %v177 = vsel %vm34, %v131, 0.0
  %178 = vadd.xlane.f32.xlu0 %v177
  %v179 = vpop.xlane.xlu0 %178
  %v180 = vmul.f32 %v134, %v83
  %v181 = vmul.f32 %v137, %v83
  %v182 = vmul.f32 %v140, %v83
  %v183 = vmul.f32 %v143, %v83
  %v184 = vmul.f32 %v146, %v83
  %v185 = vmul.f32 %v149, %v83
  %v186 = vmul.f32 %v152, %v83
  %v187 = vmul.f32 %v155, %v83
  %v188 = vmul.f32 %v158, %v83
  %v189 = vmul.f32 %v161, %v83
  %v190 = vmul.f32 %v164, %v83
  %v191 = vmul.f32 %v167, %v83
  %v192 = vmul.f32 %v170, %v83
  %v193 = vmul.f32 %v173, %v83
  %v194 = vmul.f32 %v176, %v83
  %v195 = vmul.f32 %v179, %v83
  %v196 = vadd.f32 %v180, 1e-05
  %v197 = vadd.f32 %v181, 1e-05
  %v198 = vadd.f32 %v182, 1e-05
  %v199 = vadd.f32 %v183, 1e-05
  %v200 = vadd.f32 %v184, 1e-05
  %v201 = vadd.f32 %v185, 1e-05
  %v202 = vadd.f32 %v186, 1e-05
  %v203 = vadd.f32 %v187, 1e-05
  %v204 = vadd.f32 %v188, 1e-05
  %v205 = vadd.f32 %v189, 1e-05
  %v206 = vadd.f32 %v190, 1e-05
  %v207 = vadd.f32 %v191, 1e-05
  %v208 = vadd.f32 %v192, 1e-05
  %v209 = vadd.f32 %v193, 1e-05
  %v210 = vadd.f32 %v194, 1e-05
  %v211 = vadd.f32 %v195, 1e-05
  %v212 = vrsqrt.pop %v196
  %v213 = vrsqrt.pop %v197
  %v214 = vrsqrt.pop %v198
  %v215 = vrsqrt.pop %v199
  %v216 = vrsqrt.pop %v200
  %v217 = vrsqrt.pop %v201
  %v218 = vrsqrt.pop %v202
  %v219 = vrsqrt.pop %v203
  %v220 = vrsqrt.pop %v204
  %v221 = vrsqrt.pop %v205
  %v222 = vrsqrt.pop %v206
  %v223 = vrsqrt.pop %v207
  %v224 = vrsqrt.pop %v208
  %v225 = vrsqrt.pop %v209
  %v226 = vrsqrt.pop %v210
  %v227 = vrsqrt.pop %v211
  %v228 = vmul.f32 %v100, %v212
  %v229 = vmul.f32 %v101, %v213
  %v230 = vmul.f32 %v102, %v214
  %v231 = vmul.f32 %v103, %v215
  %v232 = vmul.f32 %v104, %v216
  %v233 = vmul.f32 %v105, %v217
  %v234 = vmul.f32 %v106, %v218
  %v235 = vmul.f32 %v107, %v219
  %v236 = vmul.f32 %v108, %v220
  %v237 = vmul.f32 %v109, %v221
  %v238 = vmul.f32 %v110, %v222
  %v239 = vmul.f32 %v111, %v223
  %v240 = vmul.f32 %v112, %v224
  %v241 = vmul.f32 %v113, %v225
  %v242 = vmul.f32 %v114, %v226
  %v243 = vmul.f32 %v115, %v227
  %v244 = vld [vmem:[%s2] sm:$0x1]
  %v246 = vlaneseq
  %v247 = vshrl.u32 %v246, 7
  %v248 = vsub.s32 0, %v247
  %v249 = vrot.slane %v244, %v248
  %v251 = vmul.f32 %v228, %v249
  %v252 = vmul.f32 %v229, %v249
  %v253 = vmul.f32 %v230, %v249
  %v254 = vmul.f32 %v231, %v249
  %v255 = vmul.f32 %v232, %v249
  %v256 = vmul.f32 %v233, %v249
  %v257 = vmul.f32 %v234, %v249
  %v258 = vmul.f32 %v235, %v249
  %v259 = vmul.f32 %v236, %v249
  %v260 = vmul.f32 %v237, %v249
  %v261 = vmul.f32 %v238, %v249
  %v262 = vmul.f32 %v239, %v249
  %v263 = vmul.f32 %v240, %v249
  %v264 = vmul.f32 %v241, %v249
  %v265 = vmul.f32 %v242, %v249
  %v266 = vmul.f32 %v243, %v249
  %v267 = vld [vmem:[%s3] sm:$0x1]
  %v269 = vlaneseq
  %v270 = vshrl.u32 %v269, 7
  %v271 = vsub.s32 0, %v270
  %v272 = vrot.slane %v267, %v271
  %v274 = vadd.f32 %v251, %v272
  %v275 = vadd.f32 %v252, %v272
  %v276 = vadd.f32 %v253, %v272
  %v277 = vadd.f32 %v254, %v272
  %v278 = vadd.f32 %v255, %v272
  %v279 = vadd.f32 %v256, %v272
  %v280 = vadd.f32 %v257, %v272
  %v281 = vadd.f32 %v258, %v272
  %v282 = vadd.f32 %v259, %v272
  %v283 = vadd.f32 %v260, %v272
  %v284 = vadd.f32 %v261, %v272
  %v285 = vadd.f32 %v262, %v272
  %v286 = vadd.f32 %v263, %v272
  %v287 = vadd.f32 %v264, %v272
  %v288 = vadd.f32 %v265, %v272
  %v289 = vadd.f32 %v266, %v272
  %v290 = vpack.c.bf16 %v275, %v274
  %v291 = vpack.c.bf16 %v277, %v276
  %v292 = vpack.c.bf16 %v279, %v278
  %v293 = vpack.c.bf16 %v281, %v280
  %v294 = vpack.c.bf16 %v283, %v282
  %v295 = vpack.c.bf16 %v285, %v284
  %v296 = vpack.c.bf16 %v287, %v286
  %v297 = vpack.c.bf16 %v289, %v288
  %v298 = vld [vmem:[%s1] sm:$0xff]
  %v299 = vld [vmem:[%s1 + $0x8] sm:$0xff]
  %v300 = vld [vmem:[%s1 + $0x10] sm:$0xff]
  %v301 = vld [vmem:[%s1 + $0x18] sm:$0xff]
  %v302 = vpack.c.bf16 %v299, %v298
  %v303 = vpack.c.bf16 %v301, %v300
  %v305 = vsel %vm34, %v290, 0
  %v308 = vsel %vm34, %v291, 0
  %v311 = vsel %vm34, %v292, 0
  %v314 = vsel %vm34, %v293, 0
  %v317 = vsel %vm34, %v294, 0
  %v320 = vsel %vm34, %v295, 0
  %v323 = vsel %vm34, %v296, 0
  %v326 = vsel %vm34, %v297, 0
  %328 = vmatprep.subr.bf16.mxu0 0
  %329 = vmatpush1.bf16.msra.mxu0 %v302
  %330 = vmatprep.subr.bf16.mxu0 0
  %331 = vmatpush1.bf16.msra.mxu0 %v303
  %332 = vmatprep.subr.bf16.mxu0 0
  %333 = vmatpush1.bf16.msra.mxu0 0
  %334 = vmatprep.subr.bf16.mxu0 0
  %335 = vmatpush1.bf16.msra.mxu0 0
  %336 = vmatprep.subr.bf16.mxu0 0
  %337 = vmatpush1.bf16.msra.mxu0 0
  %338 = vmatprep.subr.bf16.mxu0 0
  %339 = vmatpush1.bf16.msra.mxu0 0
  %340 = vmatprep.subr.bf16.mxu0 0
  %341 = vmatpush1.bf16.msra.mxu0 0
  %342 = vmatprep.subr.bf16.mxu0 0
  %343 = vmatpush1.bf16.msra.mxu0 0
  %344 = vmatprep.subr.bf16.mxu0 0
  %345 = vmatpush1.bf16.msra.mxu0 0
  %346 = vmatprep.subr.bf16.mxu0 0
  %347 = vmatpush1.bf16.msra.mxu0 0
  %348 = vmatprep.subr.bf16.mxu0 0
  %349 = vmatpush1.bf16.msra.mxu0 0
  %350 = vmatprep.subr.bf16.mxu0 0
  %351 = vmatpush1.bf16.msra.mxu0 0
  %352 = vmatprep.subr.bf16.mxu0 0
  %353 = vmatpush1.bf16.msra.mxu0 0
  %354 = vmatprep.subr.bf16.mxu0 0
  %355 = vmatpush1.bf16.msra.mxu0 0
  %356 = vmatprep.subr.bf16.mxu0 0
  %357 = vmatpush1.bf16.msra.mxu0 0
  %358 = vmatprep.subr.bf16.mxu0 0
  %359 = vmatpush1.bf16.msra.mxu0 0
  %360 = vmatprep.mubr.bf16.mxu0 0
  %361 = vmatmul.mubr.bf16.gmra.mrb[0].mxu0 %v305
  %v362 = vpop.f32.mrb[0].mxu0
  %v363 = vadd.f32 0.0, %v362
  %v364 = vpop.f32.mrb[0].mxu0
  %v365 = vpop.f32.mrb[0].mxu0
  %v366 = vadd.f32 0.0, %v365
  %v367 = vpop.f32.mrb[0].mxu0
  %368 = vmatprep.mubr.bf16.mxu0 0
  %369 = vmatmul.mubr.bf16.gmra.mrb[0].mxu0 %v308
  %v370 = vpop.f32.mrb[0].mxu0
  %v371 = vadd.f32 0.0, %v370
  %v372 = vpop.f32.mrb[0].mxu0
  %v373 = vpop.f32.mrb[0].mxu0
  %v374 = vadd.f32 0.0, %v373
  %v375 = vpop.f32.mrb[0].mxu0
  %376 = vmatprep.mubr.bf16.mxu0 0
  %377 = vmatmul.mubr.bf16.gmra.mrb[0].mxu0 %v311
  %v378 = vpop.f32.mrb[0].mxu0
  %v379 = vadd.f32 0.0, %v378
  %v380 = vpop.f32.mrb[0].mxu0
  %v381 = vpop.f32.mrb[0].mxu0
  %v382 = vadd.f32 0.0, %v381
  %v383 = vpop.f32.mrb[0].mxu0
  %384 = vmatprep.mubr.bf16.mxu0 0
  %385 = vmatmul.mubr.bf16.gmra.mrb[0].mxu0 %v314
  %v386 = vpop.f32.mrb[0].mxu0
  %v387 = vadd.f32 0.0, %v386
  %v388 = vpop.f32.mrb[0].mxu0
  %v389 = vpop.f32.mrb[0].mxu0
  %v390 = vadd.f32 0.0, %v389
  %v391 = vpop.f32.mrb[0].mxu0
  %392 = vmatprep.mubr.bf16.mxu0 0
  %393 = vmatmul.mubr.bf16.gmra.mrb[0].mxu0 %v317
  %v394 = vpop.f32.mrb[0].mxu0
  %v395 = vadd.f32 0.0, %v394
  %v396 = vpop.f32.mrb[0].mxu0
  %v397 = vpop.f32.mrb[0].mxu0
  %v398 = vadd.f32 0.0, %v397
  %v399 = vpop.f32.mrb[0].mxu0
  %400 = vmatprep.mubr.bf16.mxu0 0
  %401 = vmatmul.mubr.bf16.gmra.mrb[0].mxu0 %v320
  %v402 = vpop.f32.mrb[0].mxu0
  %v403 = vadd.f32 0.0, %v402
  %v404 = vpop.f32.mrb[0].mxu0
  %v405 = vpop.f32.mrb[0].mxu0
  %v406 = vadd.f32 0.0, %v405
  %v407 = vpop.f32.mrb[0].mxu0
  %408 = vmatprep.mubr.bf16.mxu0 0
  %409 = vmatmul.mubr.bf16.gmra.mrb[0].mxu0 %v323
  %v410 = vpop.f32.mrb[0].mxu0
  %v411 = vadd.f32 0.0, %v410
  %v412 = vpop.f32.mrb[0].mxu0
  %v413 = vpop.f32.mrb[0].mxu0
  %v414 = vadd.f32 0.0, %v413
  %v415 = vpop.f32.mrb[0].mxu0
  %416 = vmatprep.mubr.bf16.mxu0 0
  %417 = vmatmul.mubr.bf16.gmra.mrb[0].mxu0 %v326
  %v418 = vpop.f32.mrb[0].mxu0
  %v419 = vadd.f32 0.0, %v418
  %v420 = vpop.f32.mrb[0].mxu0
  %v421 = vpop.f32.mrb[0].mxu0
  %v422 = vadd.f32 0.0, %v421
  %v423 = vpop.f32.mrb[0].mxu0
  %424 = vdwg.mxu0
  %vm425 = vcmask 785408
  %426 = vst.msk [vmem:[%s4] sm:$0xff] %vm425, %v363
  %427 = vst.msk [vmem:[%s4 + $0x8] sm:$0xff] %vm425, %v366
  %428 = vst.msk [vmem:[%s4 + $0x10] sm:$0xff] %vm425, %v371
  %429 = vst.msk [vmem:[%s4 + $0x18] sm:$0xff] %vm425, %v374
  %430 = vst.msk [vmem:[%s4 + $0x20] sm:$0xff] %vm425, %v379
  %431 = vst.msk [vmem:[%s4 + $0x28] sm:$0xff] %vm425, %v382
  %432 = vst.msk [vmem:[%s4 + $0x30] sm:$0xff] %vm425, %v387
  %433 = vst.msk [vmem:[%s4 + $0x38] sm:$0xff] %vm425, %v390
  %434 = vst.msk [vmem:[%s4 + $0x40] sm:$0xff] %vm425, %v395
  %435 = vst.msk [vmem:[%s4 + $0x48] sm:$0xff] %vm425, %v398
  %436 = vst.msk [vmem:[%s4 + $0x50] sm:$0xff] %vm425, %v403
  %437 = vst.msk [vmem:[%s4 + $0x58] sm:$0xff] %vm425, %v406
  %438 = vst.msk [vmem:[%s4 + $0x60] sm:$0xff] %vm425, %v411
  %439 = vst.msk [vmem:[%s4 + $0x68] sm:$0xff] %vm425, %v414
  %440 = vst.msk [vmem:[%s4 + $0x70] sm:$0xff] %vm425, %v419
  %441 = vst.msk [vmem:[%s4 + $0x78] sm:$0xff] %vm425, %v422
  // Predicated region
  $region18: #{stage_module_forward.12} parent=0 // pred_check
    _
  $region19: #{stage_module_forward.12} parent=0 // pred_check_branch
    %443 = sbr.rel (0) target = $region21
  $region20: #{stage_module_forward.12} parent=0 // pred_region
    _
  $region21: #{stage_module_forward.12} parent=0 // pred_fallthru
    _
  // Predicated region
  $region22: #{stage_module_forward.12} parent=0 // pred_check
    _
  $region23: #{stage_module_forward.12} parent=0 // pred_check_branch
    %445 = sbr.rel (0) target = $region25
  $region24: #{stage_module_forward.12} parent=0 // pred_region
    _
  $region25: #{stage_module_forward.12} parent=0 // pred_fallthru
    _

// kernel: stage_module_forward.13
$region0: #{stage_module_forward.13}
  #allocation0 [shape = 'u32[]', space=smem, size = 0x4, offset = 0x4, fixed_abs, tag = 'smem constant byte address 0x4 - core index']
  #allocation1 [shape = 'u32[144,128]{1,0:T(1,128)}', space=vmem, size = 0x12000, scoped, tag = 'internal scratch']
  %s0 = inlined_call_operand.vmem [shape: f32[4,4,16,16], index: 0, kind: input, shape index: {}]
  %s1 = inlined_call_operand.vmem [shape: f32[4,4,16,16], index: 1, kind: input, shape index: {}]
  %s2 = inlined_call_operand.vmem [shape: f32[4,4,16,16], index: 2, kind: input, shape index: {}]
  %s3 = inlined_call_operand.vmem [shape: f32[4,16,16], index: 3, kind: input, shape index: {}]
  %s4 = inlined_call_operand.vmem [shape: f32[4,4,16,16], index: 4, kind: output, shape index: {}]
  %s5 = sld [smem:[#allocation0]]
  $region49: #{stage_module_forward.13} parent=0
    _
  %s7 = ssub.s32 1, %s5
  %s8 = scalar_select 0, %s7, %s5
  loop: start=0, step=1, limit=6
  $region2: #{stage_module_forward.13} parent=0 // loop_pre_header
    _
  $region3: #{stage_module_forward.13} parent=0 // loop_header
    %s10 = sphi 0, %s14
    %p11 = scmp.ge.s32.totalorder %s10, 6
    %s17 = sphi 0, %s29
    %s18 = sphi 0, %s25
    %s19 = sphi 0, %s17
    %s20 = sphi 0, %s18
    %s21 = sphi 0, %s19
    %s22 = sphi 0, %s20
    %s34 = sphi 0, %s36
    %s37 = sphi 0, %s34
    %s38 = sphi 0, %s37
    %s54 = sphi 0, %s38
    %s62 = sphi 0, %s64
    %s65 = sphi 0, %s62
    %s66 = sphi 0, %s65
    %s82 = sphi 0, %s66
    %s90 = sphi 0, %s92
    %s93 = sphi 0, %s90
    %s94 = sphi 0, %s93
    %s110 = sphi 0, %s94
    %s116 = sphi 0, %s118
    %s119 = sphi 0, %s116
    %s120 = sphi 0, %s119
    %s136 = sphi 0, %s120
    %s144 = sphi 0, %s146
    %s147 = sphi 0, %s144
    %s148 = sphi 0, %s147
    %s164 = sphi 0, %s148
  $region4: #{stage_module_forward.13} parent=0 // loop_header_branch
    %13 = sbr.rel (%p11) target = $region8
  $region5: #{stage_module_forward.13} parent=0 // loop_body
    %s15 = ssub.s32 %s10, 1
    %s16 = ssub.s32 %s10, 2
    %s23 = sadd.s32 1, %s18
    %p24 = scmp.ge.s32.totalorder %s23, 1
    %s25 = scalar_select %p24, 0, %s23
    %s26 = sadd.s32 1, %s17
    %s27 = scalar_select %p24, %s26, %s17
    %p28 = scmp.ge.s32.totalorder %s27, 4
    %s29 = scalar_select %p28, 0, %s27
    %s30 = ssub.s32 %s17, %s29
    %s31 = ssub.s32 %s18, %s25
    %s32 = sor.u32 %s30, %s31
    %p33 = scmp.eq.s32.totalorder %s32, 0
    %s35 = sadd.s32 %s34, 1
    %s36 = scalar_select %p33, %s34, %s35
    %p39 = pneg %p33
    %p40 = scmp.eq.s32.totalorder %s10, 3
    %p41 = por %p39, %p40
    %p42 = scmp.ne.s32.totalorder %s34, %s37
    %p43 = scmp.eq.s32.totalorder %s10, 0
    %p44 = por %p42, %p43
    %p45 = scmp.ne.s32.totalorder %s34, %s37
    %p46 = scmp.eq.s32.totalorder %s15, 3
    %p47 = por %p45, %p46
    %p48 = scmp.ne.s32.totalorder %s37, %s38
    %p49 = scmp.eq.s32.totalorder %s15, 0
    %p50 = por %p48, %p49
    %p51 = scmp.ne.s32.totalorder %s37, %s38
    %p52 = scmp.eq.s32.totalorder %s16, 3
    %p53 = por %p51, %p52
    %p55 = scmp.ne.s32.totalorder %s38, %s54
    %p56 = scmp.eq.s32.totalorder %s16, 0
    %p57 = por %p55, %p56
    %s58 = ssub.s32 %s17, %s29
    %s59 = ssub.s32 %s18, %s25
    %s60 = sor.u32 %s58, %s59
    %p61 = scmp.eq.s32.totalorder %s60, 0
    %s63 = sadd.s32 %s62, 1
    %s64 = scalar_select %p61, %s62, %s63
    %p67 = pneg %p61
    %p68 = scmp.eq.s32.totalorder %s10, 3
    %p69 = por %p67, %p68
    %p70 = scmp.ne.s32.totalorder %s62, %s65
    %p71 = scmp.eq.s32.totalorder %s10, 0
    %p72 = por %p70, %p71
    %p73 = scmp.ne.s32.totalorder %s62, %s65
    %p74 = scmp.eq.s32.totalorder %s15, 3
    %p75 = por %p73, %p74
    %p76 = scmp.ne.s32.totalorder %s65, %s66
    %p77 = scmp.eq.s32.totalorder %s15, 0
    %p78 = por %p76, %p77
    %p79 = scmp.ne.s32.totalorder %s65, %s66
    %p80 = scmp.eq.s32.totalorder %s16, 3
    %p81 = por %p79, %p80
    %p83 = scmp.ne.s32.totalorder %s66, %s82
    %p84 = scmp.eq.s32.totalorder %s16, 0
    %p85 = por %p83, %p84
    %s86 = ssub.s32 %s17, %s29
    %s87 = ssub.s32 %s18, %s25
    %s88 = sor.u32 %s86, %s87
    %p89 = scmp.eq.s32.totalorder %s88, 0
    %s91 = sadd.s32 %s90, 1
    %s92 = scalar_select %p89, %s90, %s91
    %p95 = pneg %p89
    %p96 = scmp.eq.s32.totalorder %s10, 3
    %p97 = por %p95, %p96
    %p98 = scmp.ne.s32.totalorder %s90, %s93
    %p99 = scmp.eq.s32.totalorder %s10, 0
    %p100 = por %p98, %p99
    %p101 = scmp.ne.s32.totalorder %s90, %s93
    %p102 = scmp.eq.s32.totalorder %s15, 3
    %p103 = por %p101, %p102
    %p104 = scmp.ne.s32.totalorder %s93, %s94
    %p105 = scmp.eq.s32.totalorder %s15, 0
    %p106 = por %p104, %p105
    %p107 = scmp.ne.s32.totalorder %s93, %s94
    %p108 = scmp.eq.s32.totalorder %s16, 3
    %p109 = por %p107, %p108
    %p111 = scmp.ne.s32.totalorder %s94, %s110
    %p112 = scmp.eq.s32.totalorder %s16, 0
    %p113 = por %p111, %p112
    %s114 = ssub.s32 %s17, %s29
    %p115 = scmp.eq.s32.totalorder %s114, 0
    %s117 = sadd.s32 %s116, 1
    %s118 = scalar_select %p115, %s116, %s117
    %p121 = pneg %p115
    %p122 = scmp.eq.s32.totalorder %s10, 3
    %p123 = por %p121, %p122
    %p124 = scmp.ne.s32.totalorder %s116, %s119
    %p125 = scmp.eq.s32.totalorder %s10, 0
    %p126 = por %p124, %p125
    %p127 = scmp.ne.s32.totalorder %s116, %s119
    %p128 = scmp.eq.s32.totalorder %s15, 3
    %p129 = por %p127, %p128
    %p130 = scmp.ne.s32.totalorder %s119, %s120
    %p131 = scmp.eq.s32.totalorder %s15, 0
    %p132 = por %p130, %p131
    %p133 = scmp.ne.s32.totalorder %s119, %s120
    %p134 = scmp.eq.s32.totalorder %s16, 3
    %p135 = por %p133, %p134
    %p137 = scmp.ne.s32.totalorder %s120, %s136
    %p138 = scmp.eq.s32.totalorder %s16, 0
    %p139 = por %p137, %p138
    %s140 = ssub.s32 %s17, %s29
    %s141 = ssub.s32 %s18, %s25
    %s142 = sor.u32 %s140, %s141
    %p143 = scmp.eq.s32.totalorder %s142, 0
    %s145 = sadd.s32 %s144, 1
    %s146 = scalar_select %p143, %s144, %s145
    %p149 = pneg %p143
    %p150 = scmp.eq.s32.totalorder %s10, 3
    %p151 = por %p149, %p150
    %p152 = scmp.ne.s32.totalorder %s144, %s147
    %p153 = scmp.eq.s32.totalorder %s10, 0
    %p154 = por %p152, %p153
    %p155 = scmp.ne.s32.totalorder %s144, %s147
    %p156 = scmp.eq.s32.totalorder %s15, 3
    %p157 = por %p155, %p156
    %p158 = scmp.ne.s32.totalorder %s147, %s148
    %p159 = scmp.eq.s32.totalorder %s15, 0
    %p160 = por %p158, %p159
    %p161 = scmp.ne.s32.totalorder %s147, %s148
    %p162 = scmp.eq.s32.totalorder %s16, 3
    %p163 = por %p161, %p162
    %p165 = scmp.ne.s32.totalorder %s148, %s164
    %p166 = scmp.eq.s32.totalorder %s16, 0
    %p167 = por %p165, %p166
    %p168 = scmp.le.s32.totalorder 1, %s10
    %p169 = scmp.lt.s32.totalorder %s10, 5
    %p170 = pnand %p168, %p169
    %p171 = pneg %p170
    // Predicated region
    $region9: #{stage_module_forward.13} parent=5 // pred_check
      _
    $region10: #{stage_module_forward.13} parent=5 // pred_check_branch
      %173 = sbr.rel (%p170) target = $region12
    $region11: #{stage_module_forward.13} parent=5 // pred_region
      %s174 = ssub.s32 %s10, 1
    $region12: #{stage_module_forward.13} parent=5 // pred_fallthru
      _
    %p175 = scmp.lt.s32.totalorder %s10, 4
    // Predicated region
    $region13: #{stage_module_forward.13} parent=5 // pred_check
      %p176 = pneg %p175
    $region14: #{stage_module_forward.13} parent=5 // pred_check_branch
      %178 = sbr.rel (%p176) target = $region16
    $region15: #{stage_module_forward.13} parent=5 // pred_region
      // Predicated region
      $region17: #{stage_module_forward.13} parent=15 // pred_check
        %p179 = pneg %p44
      $region18: #{stage_module_forward.13} parent=15 // pred_check_branch
        %181 = sbr.rel (%p179) target = $region20
      $region19: #{stage_module_forward.13} parent=15 // pred_region
        %s182 = smul.u32 4, %s18
        %p183 = scmp.lt.s32.totalorder %s17, 3
        %s184 = scalar_select %p183, %s17, 3
        %p185 = scmp.lt.s32.totalorder %s182, 3
        %s186 = scalar_select %p185, %s182, 3
        %s187 = smul.addr %s186, 2
        %s188 = smul.addr %s184, 8
        %s189 = sadd.s32 %s187, %s188
        %s190 = smul.addr %s189, 8
        %s191 = scalar_lea.vmem %s0, %s190
        %s192 = smul.u32 4, %s18
      $region20: #{stage_module_forward.13} parent=15 // pred_fallthru
        _
      // Predicated region
      $region21: #{stage_module_forward.13} parent=15 // pred_check
        %p193 = pneg %p72
      $region22: #{stage_module_forward.13} parent=15 // pred_check_branch
        %195 = sbr.rel (%p193) target = $region24
      $region23: #{stage_module_forward.13} parent=15 // pred_region
        %s196 = smul.u32 4, %s18
        %p197 = scmp.lt.s32.totalorder %s17, 3
        %s198 = scalar_select %p197, %s17, 3
        %p199 = scmp.lt.s32.totalorder %s196, 3
        %s200 = scalar_select %p199, %s196, 3
        %s201 = smul.addr %s200, 2
        %s202 = smul.addr %s198, 8
        %s203 = sadd.s32 %s201, %s202
        %s204 = smul.addr %s203, 8
        %s205 = scalar_lea.vmem %s1, %s204
        %s206 = smul.u32 4, %s18
      $region24: #{stage_module_forward.13} parent=15 // pred_fallthru
        _
      // Predicated region
      $region25: #{stage_module_forward.13} parent=15 // pred_check
        %p207 = pneg %p100
      $region26: #{stage_module_forward.13} parent=15 // pred_check_branch
        %209 = sbr.rel (%p207) target = $region28
      $region27: #{stage_module_forward.13} parent=15 // pred_region
        %s210 = smul.u32 4, %s18
        %p211 = scmp.lt.s32.totalorder %s17, 3
        %s212 = scalar_select %p211, %s17, 3
        %p213 = scmp.lt.s32.totalorder %s210, 3
        %s214 = scalar_select %p213, %s210, 3
        %s215 = smul.addr %s214, 2
        %s216 = smul.addr %s212, 8
        %s217 = sadd.s32 %s215, %s216
        %s218 = smul.addr %s217, 8
        %s219 = scalar_lea.vmem %s2, %s218
        %s220 = smul.u32 4, %s18
      $region28: #{stage_module_forward.13} parent=15 // pred_fallthru
        _
      // Predicated region
      $region29: #{stage_module_forward.13} parent=15 // pred_check
        %p221 = pneg %p126
      $region30: #{stage_module_forward.13} parent=15 // pred_check_branch
        %223 = sbr.rel (%p221) target = $region32
      $region31: #{stage_module_forward.13} parent=15 // pred_region
        %p224 = scmp.lt.s32.totalorder %s17, 3
        %s225 = scalar_select %p224, %s17, 3
        %s226 = smul.addr %s225, 2
        %s227 = smul.addr %s226, 8
        %s228 = scalar_lea.vmem %s3, %s227
      $region32: #{stage_module_forward.13} parent=15 // pred_fallthru
        _
    $region16: #{stage_module_forward.13} parent=5 // pred_fallthru
      _
    %p229 = scmp.le.s32.totalorder 1, %s10
    %p230 = scmp.lt.s32.totalorder %s10, 5
    %p231 = pnand %p229, %p230
    %p232 = pneg %p231
    // Predicated region
    $region33: #{stage_module_forward.13} parent=5 // pred_check
      _
    $region34: #{stage_module_forward.13} parent=5 // pred_check_branch
      %234 = sbr.rel (%p231) target = $region36
    $region35: #{stage_module_forward.13} parent=5 // pred_region
      %s235 = ssub.s32 %s10, 1
      %s236 = smul.u32 4, %s20
      %p237 = scmp.lt.s32.totalorder %s19, 3
      %s238 = scalar_select %p237, %s19, 3
      %p239 = scmp.lt.s32.totalorder %s236, 3
      %s240 = scalar_select %p239, %s236, 3
      %s241 = smul.addr %s240, 2
      %s242 = smul.addr %s238, 8
      %s243 = sadd.s32 %s241, %s242
      %s244 = smul.addr %s243, 8
      %s245 = scalar_lea.vmem %s0, %s244
      %p246 = pneg %p50
      %p247 = pneg %p47
      %s248 = smul.u32 4, %s20
      %p249 = scmp.lt.s32.totalorder %s19, 3
      %s250 = scalar_select %p249, %s19, 3
      %p251 = scmp.lt.s32.totalorder %s248, 3
      %s252 = scalar_select %p251, %s248, 3
      %s253 = smul.addr %s252, 2
      %s254 = smul.addr %s250, 8
      %s255 = sadd.s32 %s253, %s254
      %s256 = smul.addr %s255, 8
      %s257 = scalar_lea.vmem %s1, %s256
      %p258 = pneg %p78
      %p259 = pneg %p75
      %s260 = smul.u32 4, %s20
      %p261 = scmp.lt.s32.totalorder %s19, 3
      %s262 = scalar_select %p261, %s19, 3
      %p263 = scmp.lt.s32.totalorder %s260, 3
      %s264 = scalar_select %p263, %s260, 3
      %s265 = smul.addr %s264, 2
      %s266 = smul.addr %s262, 8
      %s267 = sadd.s32 %s265, %s266
      %s268 = smul.addr %s267, 8
      %s269 = scalar_lea.vmem %s2, %s268
      %p270 = pneg %p106
      %p271 = pneg %p103
      %p272 = scmp.lt.s32.totalorder %s19, 3
      %s273 = scalar_select %p272, %s19, 3
      %s274 = smul.addr %s273, 2
      %s275 = smul.addr %s274, 8
      %s276 = scalar_lea.vmem %s3, %s275
      %p277 = pneg %p132
      %p278 = pneg %p129
      %p279 = pneg %p160
      %p280 = pneg %p157
      %s281 = smul.u32 4, %s20
      %p282 = scmp.lt.s32.totalorder %s19, 3
      %s283 = scalar_select %p282, %s19, 3
      %p284 = scmp.lt.s32.totalorder %s281, 3
      %s285 = scalar_select %p284, %s281, 3
      %s286 = smul.addr %s285, 2
      %s287 = smul.addr %s283, 8
      %s288 = sadd.s32 %s286, %s287
      %s289 = smul.addr %s288, 8
      %s290 = scalar_lea.vmem %s4, %s289
      %s291 = smul.u32 4, %s20
      %p292 = scmp.lt.s32.totalorder %s19, 3
      %s293 = scalar_select %p292, %s19, 3
      %p294 = scmp.lt.s32.totalorder %s291, 3
      %s295 = scalar_select %p294, %s291, 3
      %s296 = smul.addr %s295, 2
      %s297 = smul.addr %s293, 8
      %s298 = sadd.s32 %s296, %s297
      %s299 = smul.addr %s298, 8
      %s300 = scalar_lea.vmem %s0, %s299
      %s301 = smul.u32 4, %s20
      %s302 = smul.u32 4, %s20
      %p303 = scmp.lt.s32.totalorder %s19, 3
      %s304 = scalar_select %p303, %s19, 3
      %p305 = scmp.lt.s32.totalorder %s302, 3
      %s306 = scalar_select %p305, %s302, 3
      %s307 = smul.addr %s306, 2
      %s308 = smul.addr %s304, 8
      %s309 = sadd.s32 %s307, %s308
      %s310 = smul.addr %s309, 8
      %s311 = scalar_lea.vmem %s1, %s310
      %s312 = smul.u32 4, %s20
      %s313 = smul.u32 4, %s20
      %p314 = scmp.lt.s32.totalorder %s19, 3
      %s315 = scalar_select %p314, %s19, 3
      %p316 = scmp.lt.s32.totalorder %s313, 3
      %s317 = scalar_select %p316, %s313, 3
      %s318 = smul.addr %s317, 2
      %s319 = smul.addr %s315, 8
      %s320 = sadd.s32 %s318, %s319
      %s321 = smul.addr %s320, 8
      %s322 = scalar_lea.vmem %s2, %s321
      %s323 = smul.u32 4, %s20
      %p324 = scmp.lt.s32.totalorder %s19, 3
      %s325 = scalar_select %p324, %s19, 3
      %s326 = smul.addr %s325, 2
      %s327 = smul.addr %s326, 8
      %s328 = scalar_lea.vmem %s3, %s327
      %s329 = smul.u32 4, %s20
      %p330 = scmp.lt.s32.totalorder %s19, 3
      %s331 = scalar_select %p330, %s19, 3
      %p332 = scmp.lt.s32.totalorder %s329, 3
      %s333 = scalar_select %p332, %s329, 3
      %s334 = smul.addr %s333, 2
      %s335 = smul.addr %s331, 8
      %s336 = sadd.s32 %s334, %s335
      %s337 = smul.addr %s336, 8
      %s338 = scalar_lea.vmem %s4, %s337
      %s339 = smul.u32 4, %s20
      %v341 = vld [vmem:[%s300] sm:$0xff]
      %v342 = vld [vmem:[%s300 + $0x8] sm:$0xff]
      %v343 = vld [vmem:[%s300 + $0x10] sm:$0xff]
      %v344 = vld [vmem:[%s300 + $0x18] sm:$0xff]
      %v345 = vld [vmem:[%s300 + $0x20] sm:$0xff]
      %v346 = vld [vmem:[%s300 + $0x28] sm:$0xff]
      %v347 = vld [vmem:[%s300 + $0x30] sm:$0xff]
      %v348 = vld [vmem:[%s300 + $0x38] sm:$0xff]
      %v349 = vpack.c.bf16 %v342, %v341
      %v350 = vpack.c.bf16 %v344, %v343
      %v351 = vpack.c.bf16 %v346, %v345
      %v352 = vpack.c.bf16 %v348, %v347
      %v353 = vld [vmem:[%s311] sm:$0xff]
      %v354 = vld [vmem:[%s311 + $0x8] sm:$0xff]
      %v355 = vld [vmem:[%s311 + $0x10] sm:$0xff]
      %v356 = vld [vmem:[%s311 + $0x18] sm:$0xff]
      %v357 = vld [vmem:[%s311 + $0x20] sm:$0xff]
      %v358 = vld [vmem:[%s311 + $0x28] sm:$0xff]
      %v359 = vld [vmem:[%s311 + $0x30] sm:$0xff]
      %v360 = vld [vmem:[%s311 + $0x38] sm:$0xff]
      %v361 = vpack.c.bf16 %v354, %v353
      %v362 = vpack.c.bf16 %v356, %v355
      %v363 = vpack.c.bf16 %v358, %v357
      %v364 = vpack.c.bf16 %v360, %v359
      %v365 = vld [vmem:[%s322] sm:$0xff]
      %v366 = vld [vmem:[%s322 + $0x8] sm:$0xff]
      %v367 = vld [vmem:[%s322 + $0x10] sm:$0xff]
      %v368 = vld [vmem:[%s322 + $0x18] sm:$0xff]
      %v369 = vld [vmem:[%s322 + $0x20] sm:$0xff]
      %v370 = vld [vmem:[%s322 + $0x28] sm:$0xff]
      %v371 = vld [vmem:[%s322 + $0x30] sm:$0xff]
      %v372 = vld [vmem:[%s322 + $0x38] sm:$0xff]
      %v373 = vpack.c.bf16 %v366, %v365
      %v374 = vpack.c.bf16 %v368, %v367
      %v375 = vpack.c.bf16 %v370, %v369
      %v376 = vpack.c.bf16 %v372, %v371
      %v377 = vld [vmem:[%s328] sm:$0xff]
      %v378 = vld [vmem:[%s328 + $0x8] sm:$0xff]
      %vm379 = vcmask 130048
      %v381 = vsel %vm379, %v349, 0
      %v384 = vsel %vm379, %v361, 0
      %386 = vmatprep.subr.bf16.mxu0 0
      %387 = vmatpush1.bf16.xpose.msra.mxu0 %v384
      %388 = vmatprep.subr.bf16.mxu0 0
      %389 = vmatpush1.bf16.xpose.msra.mxu0 0
      %390 = vmatprep.subr.bf16.mxu0 0
      %391 = vmatpush1.bf16.xpose.msra.mxu0 0
      %392 = vmatprep.subr.bf16.mxu0 0
      %393 = vmatpush1.bf16.xpose.msra.mxu0 0
      %394 = vmatprep.subr.bf16.mxu0 0
      %395 = vmatpush1.bf16.xpose.msra.mxu0 0
      %396 = vmatprep.subr.bf16.mxu0 0
      %397 = vmatpush1.bf16.xpose.msra.mxu0 0
      %398 = vmatprep.subr.bf16.mxu0 0
      %399 = vmatpush1.bf16.xpose.msra.mxu0 0
      %400 = vmatprep.subr.bf16.mxu0 0
      %401 = vmatpush1.bf16.xpose.msra.mxu0 0
      %402 = vmatprep.subr.bf16.mxu0 0
      %403 = vmatpush1.bf16.xpose.msra.mxu0 0
      %404 = vmatprep.subr.bf16.mxu0 0
      %405 = vmatpush1.bf16.xpose.msra.mxu0 0
      %406 = vmatprep.subr.bf16.mxu0 0
      %407 = vmatpush1.bf16.xpose.msra.mxu0 0
      %408 = vmatprep.subr.bf16.mxu0 0
      %409 = vmatpush1.bf16.xpose.msra.mxu0 0
      %410 = vmatprep.subr.bf16.mxu0 0
      %411 = vmatpush1.bf16.xpose.msra.mxu0 0
      %412 = vmatprep.subr.bf16.mxu0 0
      %413 = vmatpush1.bf16.xpose.msra.mxu0 0
      %414 = vmatprep.subr.bf16.mxu0 0
      %415 = vmatpush1.bf16.xpose.msra.mxu0 0
      %416 = vmatprep.subr.bf16.mxu0 0
      %417 = vmatpush1.bf16.xpose.msra.mxu0 0
      %418 = vmatprep.mubr.bf16.mxu0 0
      %419 = vmatmul.mubr.bf16.gmra.mrb[0].mxu0 %v381
      %v420 = vpop.f32.mrb[0].mxu0
      %v421 = vadd.f32 0.0, %v420
      %v422 = vpop.f32.mrb[0].mxu0
      %v423 = vpop.f32.mrb[0].mxu0
      %v424 = vadd.f32 0.0, %v423
      %v425 = vpop.f32.mrb[0].mxu0
      %426 = vdwg.mxu0
      %v428 = vsel %vm379, %v350, 0
      %v431 = vsel %vm379, %v362, 0
      %433 = vmatprep.subr.bf16.mxu0 0
      %434 = vmatpush1.bf16.xpose.msra.mxu0 %v431
      %435 = vmatprep.subr.bf16.mxu0 0
      %436 = vmatpush1.bf16.xpose.msra.mxu0 0
      %437 = vmatprep.subr.bf16.mxu0 0
      %438 = vmatpush1.bf16.xpose.msra.mxu0 0
      %439 = vmatprep.subr.bf16.mxu0 0
      %440 = vmatpush1.bf16.xpose.msra.mxu0 0
      %441 = vmatprep.subr.bf16.mxu0 0
      %442 = vmatpush1.bf16.xpose.msra.mxu0 0
      %443 = vmatprep.subr.bf16.mxu0 0
      %444 = vmatpush1.bf16.xpose.msra.mxu0 0
      %445 = vmatprep.subr.bf16.mxu0 0
      %446 = vmatpush1.bf16.xpose.msra.mxu0 0
      %447 = vmatprep.subr.bf16.mxu0 0
      %448 = vmatpush1.bf16.xpose.msra.mxu0 0
      %449 = vmatprep.subr.bf16.mxu0 0
      %450 = vmatpush1.bf16.xpose.msra.mxu0 0
      %451 = vmatprep.subr.bf16.mxu0 0
      %452 = vmatpush1.bf16.xpose.msra.mxu0 0
      %453 = vmatprep.subr.bf16.mxu0 0
      %454 = vmatpush1.bf16.xpose.msra.mxu0 0
      %455 = vmatprep.subr.bf16.mxu0 0
      %456 = vmatpush1.bf16.xpose.msra.mxu0 0
      %457 = vmatprep.subr.bf16.mxu0 0
      %458 = vmatpush1.bf16.xpose.msra.mxu0 0
      %459 = vmatprep.subr.bf16.mxu0 0
      %460 = vmatpush1.bf16.xpose.msra.mxu0 0
      %461 = vmatprep.subr.bf16.mxu0 0
      %462 = vmatpush1.bf16.xpose.msra.mxu0 0
      %463 = vmatprep.subr.bf16.mxu0 0
      %464 = vmatpush1.bf16.xpose.msra.mxu0 0
      %465 = vmatprep.mubr.bf16.mxu0 0
      %466 = vmatmul.mubr.bf16.gmra.mrb[0].mxu0 %v428
      %v467 = vpop.f32.mrb[0].mxu0
      %v468 = vadd.f32 0.0, %v467
      %v469 = vpop.f32.mrb[0].mxu0
      %v470 = vpop.f32.mrb[0].mxu0
      %v471 = vadd.f32 0.0, %v470
      %v472 = vpop.f32.mrb[0].mxu0
      %473 = vdwg.mxu0
      %v475 = vsel %vm379, %v351, 0
      %v478 = vsel %vm379, %v363, 0
      %480 = vmatprep.subr.bf16.mxu0 0
      %481 = vmatpush1.bf16.xpose.msra.mxu0 %v478
      %482 = vmatprep.subr.bf16.mxu0 0
      %483 = vmatpush1.bf16.xpose.msra.mxu0 0
      %484 = vmatprep.subr.bf16.mxu0 0
      %485 = vmatpush1.bf16.xpose.msra.mxu0 0
      %486 = vmatprep.subr.bf16.mxu0 0
      %487 = vmatpush1.bf16.xpose.msra.mxu0 0
      %488 = vmatprep.subr.bf16.mxu0 0
      %489 = vmatpush1.bf16.xpose.msra.mxu0 0
      %490 = vmatprep.subr.bf16.mxu0 0
      %491 = vmatpush1.bf16.xpose.msra.mxu0 0
      %492 = vmatprep.subr.bf16.mxu0 0
      %493 = vmatpush1.bf16.xpose.msra.mxu0 0
      %494 = vmatprep.subr.bf16.mxu0 0
      %495 = vmatpush1.bf16.xpose.msra.mxu0 0
      %496 = vmatprep.subr.bf16.mxu0 0
      %497 = vmatpush1.bf16.xpose.msra.mxu0 0
      %498 = vmatprep.subr.bf16.mxu0 0
      %499 = vmatpush1.bf16.xpose.msra.mxu0 0
      %500 = vmatprep.subr.bf16.mxu0 0
      %501 = vmatpush1.bf16.xpose.msra.mxu0 0
      %502 = vmatprep.subr.bf16.mxu0 0
      %503 = vmatpush1.bf16.xpose.msra.mxu0 0
      %504 = vmatprep.subr.bf16.mxu0 0
      %505 = vmatpush1.bf16.xpose.msra.mxu0 0
      %506 = vmatprep.subr.bf16.mxu0 0
      %507 = vmatpush1.bf16.xpose.msra.mxu0 0
      %508 = vmatprep.subr.bf16.mxu0 0
      %509 = vmatpush1.bf16.xpose.msra.mxu0 0
      %510 = vmatprep.subr.bf16.mxu0 0
      %511 = vmatpush1.bf16.xpose.msra.mxu0 0
      %512 = vmatprep.mubr.bf16.mxu0 0
      %513 = vmatmul.mubr.bf16.gmra.mrb[0].mxu0 %v475
      %v514 = vpop.f32.mrb[0].mxu0
      %v515 = vadd.f32 0.0, %v514
      %v516 = vpop.f32.mrb[0].mxu0
      %v517 = vpop.f32.mrb[0].mxu0
      %v518 = vadd.f32 0.0, %v517
      %v519 = vpop.f32.mrb[0].mxu0
      %520 = vdwg.mxu0
      %v522 = vsel %vm379, %v352, 0
      %v525 = vsel %vm379, %v364, 0
      %527 = vmatprep.subr.bf16.mxu0 0
      %528 = vmatpush1.bf16.xpose.msra.mxu0 %v525
      %529 = vmatprep.subr.bf16.mxu0 0
      %530 = vmatpush1.bf16.xpose.msra.mxu0 0
      %531 = vmatprep.subr.bf16.mxu0 0
      %532 = vmatpush1.bf16.xpose.msra.mxu0 0
      %533 = vmatprep.subr.bf16.mxu0 0
      %534 = vmatpush1.bf16.xpose.msra.mxu0 0
      %535 = vmatprep.subr.bf16.mxu0 0
      %536 = vmatpush1.bf16.xpose.msra.mxu0 0
      %537 = vmatprep.subr.bf16.mxu0 0
      %538 = vmatpush1.bf16.xpose.msra.mxu0 0
      %539 = vmatprep.subr.bf16.mxu0 0
      %540 = vmatpush1.bf16.xpose.msra.mxu0 0
      %541 = vmatprep.subr.bf16.mxu0 0
      %542 = vmatpush1.bf16.xpose.msra.mxu0 0
      %543 = vmatprep.subr.bf16.mxu0 0
      %544 = vmatpush1.bf16.xpose.msra.mxu0 0
      %545 = vmatprep.subr.bf16.mxu0 0
      %546 = vmatpush1.bf16.xpose.msra.mxu0 0
      %547 = vmatprep.subr.bf16.mxu0 0
      %548 = vmatpush1.bf16.xpose.msra.mxu0 0
      %549 = vmatprep.subr.bf16.mxu0 0
      %550 = vmatpush1.bf16.xpose.msra.mxu0 0
      %551 = vmatprep.subr.bf16.mxu0 0
      %552 = vmatpush1.bf16.xpose.msra.mxu0 0
      %553 = vmatprep.subr.bf16.mxu0 0
      %554 = vmatpush1.bf16.xpose.msra.mxu0 0
      %555 = vmatprep.subr.bf16.mxu0 0
      %556 = vmatpush1.bf16.xpose.msra.mxu0 0
      %557 = vmatprep.subr.bf16.mxu0 0
      %558 = vmatpush1.bf16.xpose.msra.mxu0 0
      %559 = vmatprep.mubr.bf16.mxu0 0
      %560 = vmatmul.mubr.bf16.gmra.mrb[0].mxu0 %v522
      %v561 = vpop.f32.mrb[0].mxu0
      %v562 = vadd.f32 0.0, %v561
      %v563 = vpop.f32.mrb[0].mxu0
      %v564 = vpop.f32.mrb[0].mxu0
      %v565 = vadd.f32 0.0, %v564
      %v566 = vpop.f32.mrb[0].mxu0
      %567 = vdwg.mxu0
      %v568 = vmul.f32 %v421, 0.25
      %v569 = vmul.f32 %v424, 0.25
      %v570 = vmul.f32 %v468, 0.25
      %v571 = vmul.f32 %v471, 0.25
      %v572 = vmul.f32 %v515, 0.25
      %v573 = vmul.f32 %v518, 0.25
      %v574 = vmul.f32 %v562, 0.25
      %v575 = vmul.f32 %v565, 0.25
      %v576 = vadd.f32 %v568, %v377
      %v577 = vadd.f32 %v569, %v378
      %v578 = vadd.f32 %v570, %v377
      %v579 = vadd.f32 %v571, %v378
      %v580 = vadd.f32 %v572, %v377
      %v581 = vadd.f32 %v573, %v378
      %v582 = vadd.f32 %v574, %v377
      %v583 = vadd.f32 %v575, %v378
      %v584 = vsel %vm379, %v576, -inf
      %585 = vmax.xlane.f32.xlu0 %v584
      %v586 = vpop.xlane.xlu0 %585
      %v587 = vsel %vm379, %v577, -inf
      %588 = vmax.xlane.f32.xlu0 %v587
      %v589 = vpop.xlane.xlu0 %588
      %v590 = vsel %vm379, %v578, -inf
      %591 = vmax.xlane.f32.xlu0 %v590
      %v592 = vpop.xlane.xlu0 %591
      %v593 = vsel %vm379, %v579, -inf
      %594 = vmax.xlane.f32.xlu0 %v593
      %v595 = vpop.xlane.xlu0 %594
      %v596 = vsel %vm379, %v580, -inf
      %597 = vmax.xlane.f32.xlu0 %v596
      %v598 = vpop.xlane.xlu0 %597
      %v599 = vsel %vm379, %v581, -inf
      %600 = vmax.xlane.f32.xlu0 %v599
      %v601 = vpop.xlane.xlu0 %600
      %v602 = vsel %vm379, %v582, -inf
      %603 = vmax.xlane.f32.xlu0 %v602
      %v604 = vpop.xlane.xlu0 %603
      %v605 = vsel %vm379, %v583, -inf
      %606 = vmax.xlane.f32.xlu0 %v605
      %v607 = vpop.xlane.xlu0 %606
      %v608 = vsub.f32 %v576, %v586
      %v609 = vsub.f32 %v577, %v589
      %v610 = vsub.f32 %v578, %v592
      %v611 = vsub.f32 %v579, %v595
      %v612 = vsub.f32 %v580, %v598
      %v613 = vsub.f32 %v581, %v601
      %v614 = vsub.f32 %v582, %v604
      %v615 = vsub.f32 %v583, %v607
      %v616 = vmul.f32 %v608, 1.442695
      %v617 = vpow.pop %v616
      %v618 = vmul.f32 %v609, 1.442695
      %v619 = vpow.pop %v618
      %v620 = vmul.f32 %v610, 1.442695
      %v621 = vpow.pop %v620
      %v622 = vmul.f32 %v611, 1.442695
      %v623 = vpow.pop %v622
      %v624 = vmul.f32 %v612, 1.442695
      %v625 = vpow.pop %v624
      %v626 = vmul.f32 %v613, 1.442695
      %v627 = vpow.pop %v626
      %v628 = vmul.f32 %v614, 1.442695
      %v629 = vpow.pop %v628
      %v630 = vmul.f32 %v615, 1.442695
      %v631 = vpow.pop %v630
      %v632 = vsel %vm379, %v617, 0.0
      %633 = vadd.xlane.f32.xlu0 %v632
      %v634 = vpop.xlane.xlu0 %633
      %v635 = vsel %vm379, %v619, 0.0
      %636 = vadd.xlane.f32.xlu0 %v635
      %v637 = vpop.xlane.xlu0 %636
      %v638 = vsel %vm379, %v621, 0.0
      %639 = vadd.xlane.f32.xlu0 %v638
      %v640 = vpop.xlane.xlu0 %639
      %v641 = vsel %vm379, %v623, 0.0
      %642 = vadd.xlane.f32.xlu0 %v641
      %v643 = vpop.xlane.xlu0 %642
      %v644 = vsel %vm379, %v625, 0.0
      %645 = vadd.xlane.f32.xlu0 %v644
      %v646 = vpop.xlane.xlu0 %645
      %v647 = vsel %vm379, %v627, 0.0
      %648 = vadd.xlane.f32.xlu0 %v647
      %v649 = vpop.xlane.xlu0 %648
      %v650 = vsel %vm379, %v629, 0.0
      %651 = vadd.xlane.f32.xlu0 %v650
      %v652 = vpop.xlane.xlu0 %651
      %v653 = vsel %vm379, %v631, 0.0
      %654 = vadd.xlane.f32.xlu0 %v653
      %v655 = vpop.xlane.xlu0 %654
      %v656 = vrcp.pop %v634
      %v657 = vrcp.pop %v637
      %v658 = vrcp.pop %v640
      %v659 = vrcp.pop %v643
      %v660 = vrcp.pop %v646
      %v661 = vrcp.pop %v649
      %v662 = vrcp.pop %v652
      %v663 = vrcp.pop %v655
      %v664 = vmul.f32 %v617, %v656
      %v665 = vmul.f32 %v619, %v657
      %v666 = vmul.f32 %v621, %v658
      %v667 = vmul.f32 %v623, %v659
      %v668 = vmul.f32 %v625, %v660
      %v669 = vmul.f32 %v627, %v661
      %v670 = vmul.f32 %v629, %v662
      %v671 = vmul.f32 %v631, %v663
      %v672 = vpack.c.bf16 %v665, %v664
      %v673 = vpack.c.bf16 %v667, %v666
      %v674 = vpack.c.bf16 %v669, %v668
      %v675 = vpack.c.bf16 %v671, %v670
      %v677 = vsel %vm379, %v672, 0
      %679 = vmatprep.subr.bf16.mxu0 0
      %680 = vmatpush1.bf16.msra.mxu0 %v373
      %681 = vmatprep.subr.bf16.mxu0 0
      %682 = vmatpush1.bf16.msra.mxu0 0
      %683 = vmatprep.subr.bf16.mxu0 0
      %684 = vmatpush1.bf16.msra.mxu0 0
      %685 = vmatprep.subr.bf16.mxu0 0
      %686 = vmatpush1.bf16.msra.mxu0 0
      %687 = vmatprep.subr.bf16.mxu0 0
      %688 = vmatpush1.bf16.msra.mxu0 0
      %689 = vmatprep.subr.bf16.mxu0 0
      %690 = vmatpush1.bf16.msra.mxu0 0
      %691 = vmatprep.subr.bf16.mxu0 0
      %692 = vmatpush1.bf16.msra.mxu0 0
      %693 = vmatprep.subr.bf16.mxu0 0
      %694 = vmatpush1.bf16.msra.mxu0 0
      %695 = vmatprep.subr.bf16.mxu0 0
      %696 = vmatpush1.bf16.msra.mxu0 0
      %697 = vmatprep.subr.bf16.mxu0 0
      %698 = vmatpush1.bf16.msra.mxu0 0
      %699 = vmatprep.subr.bf16.mxu0 0
      %700 = vmatpush1.bf16.msra.mxu0 0
      %701 = vmatprep.subr.bf16.mxu0 0
      %702 = vmatpush1.bf16.msra.mxu0 0
      %703 = vmatprep.subr.bf16.mxu0 0
      %704 = vmatpush1.bf16.msra.mxu0 0
      %705 = vmatprep.subr.bf16.mxu0 0
      %706 = vmatpush1.bf16.msra.mxu0 0
      %707 = vmatprep.subr.bf16.mxu0 0
      %708 = vmatpush1.bf16.msra.mxu0 0
      %709 = vmatprep.subr.bf16.mxu0 0
      %710 = vmatpush1.bf16.msra.mxu0 0
      %711 = vmatprep.mubr.bf16.mxu0 0
      %712 = vmatmul.mubr.bf16.gmra.mrb[0].mxu0 %v677
      %v713 = vpop.f32.mrb[0].mxu0
      %v714 = vadd.f32 0.0, %v713
      %v715 = vpop.f32.mrb[0].mxu0
      %v716 = vpop.f32.mrb[0].mxu0
      %v717 = vadd.f32 0.0, %v716
      %v718 = vpop.f32.mrb[0].mxu0
      %719 = vdwg.mxu0
      %v721 = vsel %vm379, %v673, 0
      %723 = vmatprep.subr.bf16.mxu0 0
      %724 = vmatpush1.bf16.msra.mxu0 %v374
      %725 = vmatprep.subr.bf16.mxu0 0
      %726 = vmatpush1.bf16.msra.mxu0 0
      %727 = vmatprep.subr.bf16.mxu0 0
      %728 = vmatpush1.bf16.msra.mxu0 0
      %729 = vmatprep.subr.bf16.mxu0 0
      %730 = vmatpush1.bf16.msra.mxu0 0
      %731 = vmatprep.subr.bf16.mxu0 0
      %732 = vmatpush1.bf16.msra.mxu0 0
      %733 = vmatprep.subr.bf16.mxu0 0
      %734 = vmatpush1.bf16.msra.mxu0 0
      %735 = vmatprep.subr.bf16.mxu0 0
      %736 = vmatpush1.bf16.msra.mxu0 0
      %737 = vmatprep.subr.bf16.mxu0 0
      %738 = vmatpush1.bf16.msra.mxu0 0
      %739 = vmatprep.subr.bf16.mxu0 0
      %740 = vmatpush1.bf16.msra.mxu0 0
      %741 = vmatprep.subr.bf16.mxu0 0
      %742 = vmatpush1.bf16.msra.mxu0 0
      %743 = vmatprep.subr.bf16.mxu0 0
      %744 = vmatpush1.bf16.msra.mxu0 0
      %745 = vmatprep.subr.bf16.mxu0 0
      %746 = vmatpush1.bf16.msra.mxu0 0
      %747 = vmatprep.subr.bf16.mxu0 0
      %748 = vmatpush1.bf16.msra.mxu0 0
      %749 = vmatprep.subr.bf16.mxu0 0
      %750 = vmatpush1.bf16.msra.mxu0 0
      %751 = vmatprep.subr.bf16.mxu0 0
      %752 = vmatpush1.bf16.msra.mxu0 0
      %753 = vmatprep.subr.bf16.mxu0 0
      %754 = vmatpush1.bf16.msra.mxu0 0
      %755 = vmatprep.mubr.bf16.mxu0 0
      %756 = vmatmul.mubr.bf16.gmra.mrb[0].mxu0 %v721
      %v757 = vpop.f32.mrb[0].mxu0
      %v758 = vadd.f32 0.0, %v757
      %v759 = vpop.f32.mrb[0].mxu0
      %v760 = vpop.f32.mrb[0].mxu0
      %v761 = vadd.f32 0.0, %v760
      %v762 = vpop.f32.mrb[0].mxu0
      %763 = vdwg.mxu0
      %v765 = vsel %vm379, %v674, 0
      %767 = vmatprep.subr.bf16.mxu0 0
      %768 = vmatpush1.bf16.msra.mxu0 %v375
      %769 = vmatprep.subr.bf16.mxu0 0
      %770 = vmatpush1.bf16.msra.mxu0 0
      %771 = vmatprep.subr.bf16.mxu0 0
      %772 = vmatpush1.bf16.msra.mxu0 0
      %773 = vmatprep.subr.bf16.mxu0 0
      %774 = vmatpush1.bf16.msra.mxu0 0
      %775 = vmatprep.subr.bf16.mxu0 0
      %776 = vmatpush1.bf16.msra.mxu0 0
      %777 = vmatprep.subr.bf16.mxu0 0
      %778 = vmatpush1.bf16.msra.mxu0 0
      %779 = vmatprep.subr.bf16.mxu0 0
      %780 = vmatpush1.bf16.msra.mxu0 0
      %781 = vmatprep.subr.bf16.mxu0 0
      %782 = vmatpush1.bf16.msra.mxu0 0
      %783 = vmatprep.subr.bf16.mxu0 0
      %784 = vmatpush1.bf16.msra.mxu0 0
      %785 = vmatprep.subr.bf16.mxu0 0
      %786 = vmatpush1.bf16.msra.mxu0 0
      %787 = vmatprep.subr.bf16.mxu0 0
      %788 = vmatpush1.bf16.msra.mxu0 0
      %789 = vmatprep.subr.bf16.mxu0 0
      %790 = vmatpush1.bf16.msra.mxu0 0
      %791 = vmatprep.subr.bf16.mxu0 0
      %792 = vmatpush1.bf16.msra.mxu0 0
      %793 = vmatprep.subr.bf16.mxu0 0
      %794 = vmatpush1.bf16.msra.mxu0 0
      %795 = vmatprep.subr.bf16.mxu0 0
      %796 = vmatpush1.bf16.msra.mxu0 0
      %797 = vmatprep.subr.bf16.mxu0 0
      %798 = vmatpush1.bf16.msra.mxu0 0
      %799 = vmatprep.mubr.bf16.mxu0 0
      %800 = vmatmul.mubr.bf16.gmra.mrb[0].mxu0 %v765
      %v801 = vpop.f32.mrb[0].mxu0
      %v802 = vadd.f32 0.0, %v801
      %v803 = vpop.f32.mrb[0].mxu0
      %v804 = vpop.f32.mrb[0].mxu0
      %v805 = vadd.f32 0.0, %v804
      %v806 = vpop.f32.mrb[0].mxu0
      %807 = vdwg.mxu0
      %v809 = vsel %vm379, %v675, 0
      %811 = vmatprep.subr.bf16.mxu0 0
      %812 = vmatpush1.bf16.msra.mxu0 %v376
      %813 = vmatprep.subr.bf16.mxu0 0
      %814 = vmatpush1.bf16.msra.mxu0 0
      %815 = vmatprep.subr.bf16.mxu0 0
      %816 = vmatpush1.bf16.msra.mxu0 0
      %817 = vmatprep.subr.bf16.mxu0 0
      %818 = vmatpush1.bf16.msra.mxu0 0
      %819 = vmatprep.subr.bf16.mxu0 0
      %820 = vmatpush1.bf16.msra.mxu0 0
      %821 = vmatprep.subr.bf16.mxu0 0
      %822 = vmatpush1.bf16.msra.mxu0 0
      %823 = vmatprep.subr.bf16.mxu0 0
      %824 = vmatpush1.bf16.msra.mxu0 0
      %825 = vmatprep.subr.bf16.mxu0 0
      %826 = vmatpush1.bf16.msra.mxu0 0
      %827 = vmatprep.subr.bf16.mxu0 0
      %828 = vmatpush1.bf16.msra.mxu0 0
      %829 = vmatprep.subr.bf16.mxu0 0
      %830 = vmatpush1.bf16.msra.mxu0 0
      %831 = vmatprep.subr.bf16.mxu0 0
      %832 = vmatpush1.bf16.msra.mxu0 0
      %833 = vmatprep.subr.bf16.mxu0 0
      %834 = vmatpush1.bf16.msra.mxu0 0
      %835 = vmatprep.subr.bf16.mxu0 0
      %836 = vmatpush1.bf16.msra.mxu0 0
      %837 = vmatprep.subr.bf16.mxu0 0
      %838 = vmatpush1.bf16.msra.mxu0 0
      %839 = vmatprep.subr.bf16.mxu0 0
      %840 = vmatpush1.bf16.msra.mxu0 0
      %841 = vmatprep.subr.bf16.mxu0 0
      %842 = vmatpush1.bf16.msra.mxu0 0
      %843 = vmatprep.mubr.bf16.mxu0 0
      %844 = vmatmul.mubr.bf16.gmra.mrb[0].mxu0 %v809
      %v845 = vpop.f32.mrb[0].mxu0
      %v846 = vadd.f32 0.0, %v845
      %v847 = vpop.f32.mrb[0].mxu0
      %v848 = vpop.f32.mrb[0].mxu0
      %v849 = vadd.f32 0.0, %v848
      %v850 = vpop.f32.mrb[0].mxu0
      %851 = vdwg.mxu0
      %852 = vst.msk [vmem:[%s338] sm:$0xff] %vm379, %v714
      %853 = vst.msk [vmem:[%s338 + $0x8] sm:$0xff] %vm379, %v717
      %854 = vst.msk [vmem:[%s338 + $0x10] sm:$0xff] %vm379, %v758
      %855 = vst.msk [vmem:[%s338 + $0x18] sm:$0xff] %vm379, %v761
      %856 = vst.msk [vmem:[%s338 + $0x20] sm:$0xff] %vm379, %v802
      %857 = vst.msk [vmem:[%s338 + $0x28] sm:$0xff] %vm379, %v805
      %858 = vst.msk [vmem:[%s338 + $0x30] sm:$0xff] %vm379, %v846
      %859 = vst.msk [vmem:[%s338 + $0x38] sm:$0xff] %vm379, %v849
      %s860 = smul.u32 4, %s20
      %p861 = scmp.lt.s32.totalorder %s19, 3
      %s862 = scalar_select %p861, %s19, 3
      %p863 = scmp.lt.s32.totalorder %s860, 3
      %s864 = scalar_select %p863, %s860, 3
      %s865 = smul.addr %s864, 2
      %s866 = smul.addr %s862, 8
      %s867 = sadd.s32 %s865, %s866
      %s868 = smul.addr %s867, 8
      %s869 = scalar_lea.vmem %s4, %s868
      // Predicated region
      $region37: #{stage_module_forward.13} parent=35 // pred_check
        %p870 = pneg %p157
      $region38: #{stage_module_forward.13} parent=35 // pred_check_branch
        %872 = sbr.rel (%p870) target = $region40
      $region39: #{stage_module_forward.13} parent=35 // pred_region
        %s873 = smul.u32 4, %s20
      $region40: #{stage_module_forward.13} parent=35 // pred_fallthru
        _
    $region36: #{stage_module_forward.13} parent=5 // pred_fallthru
      _
    %p874 = scmp.le.s32.totalorder 2, %s10
    // Predicated region
    $region41: #{stage_module_forward.13} parent=5 // pred_check
      %p875 = pneg %p874
    $region42: #{stage_module_forward.13} parent=5 // pred_check_branch
      %877 = sbr.rel (%p875) target = $region44
    $region43: #{stage_module_forward.13} parent=5 // pred_region
      %s878 = ssub.s32 %s10, 2
      // Predicated region
      $region45: #{stage_module_forward.13} parent=43 // pred_check
        %p879 = pneg %p163
      $region46: #{stage_module_forward.13} parent=43 // pred_check_branch
        %881 = sbr.rel (%p879) target = $region48
      $region47: #{stage_module_forward.13} parent=43 // pred_region
        %s882 = smul.u32 4, %s22
        %p883 = scmp.lt.s32.totalorder %s21, 3
        %s884 = scalar_select %p883, %s21, 3
        %p885 = scmp.lt.s32.totalorder %s882, 3
        %s886 = scalar_select %p885, %s882, 3
        %s887 = smul.addr %s886, 2
        %s888 = smul.addr %s884, 8
        %s889 = sadd.s32 %s887, %s888
        %s890 = smul.addr %s889, 8
        %s891 = scalar_lea.vmem %s4, %s890
      $region48: #{stage_module_forward.13} parent=43 // pred_fallthru
        _
    $region44: #{stage_module_forward.13} parent=5 // pred_fallthru
      _
  $region6: #{stage_module_forward.13} parent=0 // loop_footer
    %s14 = sadd.s32 1, %s10
  $region7: #{stage_module_forward.13} parent=0 // loop_footer_branch
    %9 = sbr.rel target = $region3
  $region8: #{stage_module_forward.13} parent=0 // loop_exit
    _

// kernel: stage_module_forward.14
$region0: #{stage_module_forward.14}
  #allocation0 [shape = 'u32[]', space=smem, size = 0x4, offset = 0x4, fixed_abs, tag = 'smem constant byte address 0x4 - core index']
  #allocation1 [shape = 'u32[144,128]{1,0:T(1,128)}', space=vmem, size = 0x12000, scoped, tag = 'internal scratch']
  %s0 = inlined_call_operand.vmem [shape: f32[128,32], index: 0, kind: input, shape index: {}]
  %s1 = inlined_call_operand.vmem [shape: f32[32,32], index: 1, kind: input, shape index: {}]
  %s2 = inlined_call_operand.vmem [shape: f32[1,32], index: 2, kind: input, shape index: {}]
  %s3 = inlined_call_operand.vmem [shape: f32[128,32], index: 3, kind: input, shape index: {}]
  %s4 = inlined_call_operand.vmem [shape: f32[128,32], index: 4, kind: output, shape index: {}]
  %s5 = sld [smem:[#allocation0]]
  $region26: #{stage_module_forward.14} parent=0
    _
  %s7 = ssub.s32 1, %s5
  %s8 = scalar_select 0, %s7, %s5
  // Predicated region
  $region2: #{stage_module_forward.14} parent=0 // pred_check
    _
  $region3: #{stage_module_forward.14} parent=0 // pred_check_branch
    %10 = sbr.rel (0) target = $region5
  $region4: #{stage_module_forward.14} parent=0 // pred_region
    _
  $region5: #{stage_module_forward.14} parent=0 // pred_fallthru
    _
  // Predicated region
  $region6: #{stage_module_forward.14} parent=0 // pred_check
    _
  $region7: #{stage_module_forward.14} parent=0 // pred_check_branch
    %12 = sbr.rel (0) target = $region9
  $region8: #{stage_module_forward.14} parent=0 // pred_region
    _
  $region9: #{stage_module_forward.14} parent=0 // pred_fallthru
    _
  // Predicated region
  $region10: #{stage_module_forward.14} parent=0 // pred_check
    _
  $region11: #{stage_module_forward.14} parent=0 // pred_check_branch
    %14 = sbr.rel (0) target = $region13
  $region12: #{stage_module_forward.14} parent=0 // pred_region
    _
  $region13: #{stage_module_forward.14} parent=0 // pred_fallthru
    _
  // Predicated region
  $region14: #{stage_module_forward.14} parent=0 // pred_check
    _
  $region15: #{stage_module_forward.14} parent=0 // pred_check_branch
    %16 = sbr.rel (0) target = $region17
  $region16: #{stage_module_forward.14} parent=0 // pred_region
    _
  $region17: #{stage_module_forward.14} parent=0 // pred_fallthru
    _
  %v18 = vld [vmem:[%s0] sm:$0xff]
  %v19 = vld [vmem:[%s0 + $0x8] sm:$0xff]
  %v20 = vld [vmem:[%s0 + $0x10] sm:$0xff]
  %v21 = vld [vmem:[%s0 + $0x18] sm:$0xff]
  %v22 = vld [vmem:[%s0 + $0x20] sm:$0xff]
  %v23 = vld [vmem:[%s0 + $0x28] sm:$0xff]
  %v24 = vld [vmem:[%s0 + $0x30] sm:$0xff]
  %v25 = vld [vmem:[%s0 + $0x38] sm:$0xff]
  %v26 = vld [vmem:[%s0 + $0x40] sm:$0xff]
  %v27 = vld [vmem:[%s0 + $0x48] sm:$0xff]
  %v28 = vld [vmem:[%s0 + $0x50] sm:$0xff]
  %v29 = vld [vmem:[%s0 + $0x58] sm:$0xff]
  %v30 = vld [vmem:[%s0 + $0x60] sm:$0xff]
  %v31 = vld [vmem:[%s0 + $0x68] sm:$0xff]
  %v32 = vld [vmem:[%s0 + $0x70] sm:$0xff]
  %v33 = vld [vmem:[%s0 + $0x78] sm:$0xff]
  %v34 = vpack.c.bf16 %v19, %v18
  %v35 = vpack.c.bf16 %v21, %v20
  %v36 = vpack.c.bf16 %v23, %v22
  %v37 = vpack.c.bf16 %v25, %v24
  %v38 = vpack.c.bf16 %v27, %v26
  %v39 = vpack.c.bf16 %v29, %v28
  %v40 = vpack.c.bf16 %v31, %v30
  %v41 = vpack.c.bf16 %v33, %v32
  %v42 = vld [vmem:[%s1] sm:$0xff]
  %v43 = vld [vmem:[%s1 + $0x8] sm:$0xff]
  %v44 = vld [vmem:[%s1 + $0x10] sm:$0xff]
  %v45 = vld [vmem:[%s1 + $0x18] sm:$0xff]
  %v46 = vpack.c.bf16 %v43, %v42
  %v47 = vpack.c.bf16 %v45, %v44
  %v48 = vld [vmem:[%s2] sm:$0x1]
  %v50 = vlaneseq
  %v51 = vshrl.u32 %v50, 7
  %v52 = vsub.s32 0, %v51
  %v53 = vrot.slane %v48, %v52
  %vm55 = vcmask 261120
  %v57 = vsel %vm55, %v34, 0
  %v60 = vsel %vm55, %v35, 0
  %v63 = vsel %vm55, %v36, 0
  %v66 = vsel %vm55, %v37, 0
  %v69 = vsel %vm55, %v38, 0
  %v72 = vsel %vm55, %v39, 0
  %v75 = vsel %vm55, %v40, 0
  %v78 = vsel %vm55, %v41, 0
  %80 = vmatprep.subr.bf16.mxu0 0
  %81 = vmatpush1.bf16.msra.mxu0 %v46
  %82 = vmatprep.subr.bf16.mxu0 0
  %83 = vmatpush1.bf16.msra.mxu0 %v47
  %84 = vmatprep.subr.bf16.mxu0 0
  %85 = vmatpush1.bf16.msra.mxu0 0
  %86 = vmatprep.subr.bf16.mxu0 0
  %87 = vmatpush1.bf16.msra.mxu0 0
  %88 = vmatprep.subr.bf16.mxu0 0
  %89 = vmatpush1.bf16.msra.mxu0 0
  %90 = vmatprep.subr.bf16.mxu0 0
  %91 = vmatpush1.bf16.msra.mxu0 0
  %92 = vmatprep.subr.bf16.mxu0 0
  %93 = vmatpush1.bf16.msra.mxu0 0
  %94 = vmatprep.subr.bf16.mxu0 0
  %95 = vmatpush1.bf16.msra.mxu0 0
  %96 = vmatprep.subr.bf16.mxu0 0
  %97 = vmatpush1.bf16.msra.mxu0 0
  %98 = vmatprep.subr.bf16.mxu0 0
  %99 = vmatpush1.bf16.msra.mxu0 0
  %100 = vmatprep.subr.bf16.mxu0 0
  %101 = vmatpush1.bf16.msra.mxu0 0
  %102 = vmatprep.subr.bf16.mxu0 0
  %103 = vmatpush1.bf16.msra.mxu0 0
  %104 = vmatprep.subr.bf16.mxu0 0
  %105 = vmatpush1.bf16.msra.mxu0 0
  %106 = vmatprep.subr.bf16.mxu0 0
  %107 = vmatpush1.bf16.msra.mxu0 0
  %108 = vmatprep.subr.bf16.mxu0 0
  %109 = vmatpush1.bf16.msra.mxu0 0
  %110 = vmatprep.subr.bf16.mxu0 0
  %111 = vmatpush1.bf16.msra.mxu0 0
  %112 = vmatprep.mubr.bf16.mxu0 0
  %113 = vmatmul.mubr.bf16.gmra.mrb[0].mxu0 %v57
  %v114 = vpop.f32.mrb[0].mxu0
  %v115 = vadd.f32 %v53, %v114
  %v116 = vpop.f32.mrb[0].mxu0
  %v117 = vpop.f32.mrb[0].mxu0
  %v118 = vadd.f32 %v53, %v117
  %v119 = vpop.f32.mrb[0].mxu0
  %120 = vmatprep.mubr.bf16.mxu0 0
  %121 = vmatmul.mubr.bf16.gmra.mrb[0].mxu0 %v60
  %v122 = vpop.f32.mrb[0].mxu0
  %v123 = vadd.f32 %v53, %v122
  %v124 = vpop.f32.mrb[0].mxu0
  %v125 = vpop.f32.mrb[0].mxu0
  %v126 = vadd.f32 %v53, %v125
  %v127 = vpop.f32.mrb[0].mxu0
  %128 = vmatprep.mubr.bf16.mxu0 0
  %129 = vmatmul.mubr.bf16.gmra.mrb[0].mxu0 %v63
  %v130 = vpop.f32.mrb[0].mxu0
  %v131 = vadd.f32 %v53, %v130
  %v132 = vpop.f32.mrb[0].mxu0
  %v133 = vpop.f32.mrb[0].mxu0
  %v134 = vadd.f32 %v53, %v133
  %v135 = vpop.f32.mrb[0].mxu0
  %136 = vmatprep.mubr.bf16.mxu0 0
  %137 = vmatmul.mubr.bf16.gmra.mrb[0].mxu0 %v66
  %v138 = vpop.f32.mrb[0].mxu0
  %v139 = vadd.f32 %v53, %v138
  %v140 = vpop.f32.mrb[0].mxu0
  %v141 = vpop.f32.mrb[0].mxu0
  %v142 = vadd.f32 %v53, %v141
  %v143 = vpop.f32.mrb[0].mxu0
  %144 = vmatprep.mubr.bf16.mxu0 0
  %145 = vmatmul.mubr.bf16.gmra.mrb[0].mxu0 %v69
  %v146 = vpop.f32.mrb[0].mxu0
  %v147 = vadd.f32 %v53, %v146
  %v148 = vpop.f32.mrb[0].mxu0
  %v149 = vpop.f32.mrb[0].mxu0
  %v150 = vadd.f32 %v53, %v149
  %v151 = vpop.f32.mrb[0].mxu0
  %152 = vmatprep.mubr.bf16.mxu0 0
  %153 = vmatmul.mubr.bf16.gmra.mrb[0].mxu0 %v72
  %v154 = vpop.f32.mrb[0].mxu0
  %v155 = vadd.f32 %v53, %v154
  %v156 = vpop.f32.mrb[0].mxu0
  %v157 = vpop.f32.mrb[0].mxu0
  %v158 = vadd.f32 %v53, %v157
  %v159 = vpop.f32.mrb[0].mxu0
  %160 = vmatprep.mubr.bf16.mxu0 0
  %161 = vmatmul.mubr.bf16.gmra.mrb[0].mxu0 %v75
  %v162 = vpop.f32.mrb[0].mxu0
  %v163 = vadd.f32 %v53, %v162
  %v164 = vpop.f32.mrb[0].mxu0
  %v165 = vpop.f32.mrb[0].mxu0
  %v166 = vadd.f32 %v53, %v165
  %v167 = vpop.f32.mrb[0].mxu0
  %168 = vmatprep.mubr.bf16.mxu0 0
  %169 = vmatmul.mubr.bf16.gmra.mrb[0].mxu0 %v78
  %v170 = vpop.f32.mrb[0].mxu0
  %v171 = vadd.f32 %v53, %v170
  %v172 = vpop.f32.mrb[0].mxu0
  %v173 = vpop.f32.mrb[0].mxu0
  %v174 = vadd.f32 %v53, %v173
  %v175 = vpop.f32.mrb[0].mxu0
  %176 = vdwg.mxu0
  %v177 = vld [vmem:[%s3] sm:$0xff]
  %v178 = vld [vmem:[%s3 + $0x8] sm:$0xff]
  %v179 = vld [vmem:[%s3 + $0x10] sm:$0xff]
  %v180 = vld [vmem:[%s3 + $0x18] sm:$0xff]
  %v181 = vld [vmem:[%s3 + $0x20] sm:$0xff]
  %v182 = vld [vmem:[%s3 + $0x28] sm:$0xff]
  %v183 = vld [vmem:[%s3 + $0x30] sm:$0xff]
  %v184 = vld [vmem:[%s3 + $0x38] sm:$0xff]
  %v185 = vld [vmem:[%s3 + $0x40] sm:$0xff]
  %v186 = vld [vmem:[%s3 + $0x48] sm:$0xff]
  %v187 = vld [vmem:[%s3 + $0x50] sm:$0xff]
  %v188 = vld [vmem:[%s3 + $0x58] sm:$0xff]
  %v189 = vld [vmem:[%s3 + $0x60] sm:$0xff]
  %v190 = vld [vmem:[%s3 + $0x68] sm:$0xff]
  %v191 = vld [vmem:[%s3 + $0x70] sm:$0xff]
  %v192 = vld [vmem:[%s3 + $0x78] sm:$0xff]
  %v193 = vadd.f32 %v115, %v177
  %v194 = vadd.f32 %v118, %v178
  %v195 = vadd.f32 %v123, %v179
  %v196 = vadd.f32 %v126, %v180
  %v197 = vadd.f32 %v131, %v181
  %v198 = vadd.f32 %v134, %v182
  %v199 = vadd.f32 %v139, %v183
  %v200 = vadd.f32 %v142, %v184
  %v201 = vadd.f32 %v147, %v185
  %v202 = vadd.f32 %v150, %v186
  %v203 = vadd.f32 %v155, %v187
  %v204 = vadd.f32 %v158, %v188
  %v205 = vadd.f32 %v163, %v189
  %v206 = vadd.f32 %v166, %v190
  %v207 = vadd.f32 %v171, %v191
  %v208 = vadd.f32 %v174, %v192
  %209 = vst.msk [vmem:[%s4] sm:$0xff] %vm55, %v193
  %210 = vst.msk [vmem:[%s4 + $0x8] sm:$0xff] %vm55, %v194
  %211 = vst.msk [vmem:[%s4 + $0x10] sm:$0xff] %vm55, %v195
  %212 = vst.msk [vmem:[%s4 + $0x18] sm:$0xff] %vm55, %v196
  %213 = vst.msk [vmem:[%s4 + $0x20] sm:$0xff] %vm55, %v197
  %214 = vst.msk [vmem:[%s4 + $0x28] sm:$0xff] %vm55, %v198
  %215 = vst.msk [vmem:[%s4 + $0x30] sm:$0xff] %vm55, %v199
  %216 = vst.msk [vmem:[%s4 + $0x38] sm:$0xff] %vm55, %v200
  %217 = vst.msk [vmem:[%s4 + $0x40] sm:$0xff] %vm55, %v201
  %218 = vst.msk [vmem:[%s4 + $0x48] sm:$0xff] %vm55, %v202
  %219 = vst.msk [vmem:[%s4 + $0x50] sm:$0xff] %vm55, %v203
  %220 = vst.msk [vmem:[%s4 + $0x58] sm:$0xff] %vm55, %v204
  %221 = vst.msk [vmem:[%s4 + $0x60] sm:$0xff] %vm55, %v205
  %222 = vst.msk [vmem:[%s4 + $0x68] sm:$0xff] %vm55, %v206
  %223 = vst.msk [vmem:[%s4 + $0x70] sm:$0xff] %vm55, %v207
  %224 = vst.msk [vmem:[%s4 + $0x78] sm:$0xff] %vm55, %v208
  // Predicated region
  $region18: #{stage_module_forward.14} parent=0 // pred_check
    _
  $region19: #{stage_module_forward.14} parent=0 // pred_check_branch
    %226 = sbr.rel (0) target = $region21
  $region20: #{stage_module_forward.14} parent=0 // pred_region
    _
  $region21: #{stage_module_forward.14} parent=0 // pred_fallthru
    _
  // Predicated region
  $region22: #{stage_module_forward.14} parent=0 // pred_check
    _
  $region23: #{stage_module_forward.14} parent=0 // pred_check_branch
    %228 = sbr.rel (0) target = $region25
  $region24: #{stage_module_forward.14} parent=0 // pred_region
    _
  $region25: #{stage_module_forward.14} parent=0 // pred_fallthru
    _

// kernel: stage_module_forward.15
$region0: #{stage_module_forward.15}
  #allocation0 [shape = 'u32[]', space=smem, size = 0x4, offset = 0x4, fixed_abs, tag = 'smem constant byte address 0x4 - core index']
  #allocation1 [shape = 'u32[144,128]{1,0:T(1,128)}', space=vmem, size = 0x12000, scoped, tag = 'internal scratch']
  %s0 = inlined_call_operand.vmem [shape: f32[128,32], index: 0, kind: input, shape index: {}]
  %s1 = inlined_call_operand.vmem [shape: f32[32,128], index: 1, kind: input, shape index: {}]
  %s2 = inlined_call_operand.vmem [shape: f32[1,32], index: 2, kind: input, shape index: {}]
  %s3 = inlined_call_operand.vmem [shape: f32[1,32], index: 3, kind: input, shape index: {}]
  %s4 = inlined_call_operand.vmem [shape: f32[1,128], index: 4, kind: input, shape index: {}]
  %s5 = inlined_call_operand.vmem [shape: f32[128,128], index: 5, kind: output, shape index: {}]
  %s6 = sld [smem:[#allocation0]]
  $region30: #{stage_module_forward.15} parent=0
    _
  %s8 = ssub.s32 1, %s6
  %s9 = scalar_select 0, %s8, %s6
  // Predicated region
  $region2: #{stage_module_forward.15} parent=0 // pred_check
    _
  $region3: #{stage_module_forward.15} parent=0 // pred_check_branch
    %11 = sbr.rel (0) target = $region5
  $region4: #{stage_module_forward.15} parent=0 // pred_region
    _
  $region5: #{stage_module_forward.15} parent=0 // pred_fallthru
    _
  // Predicated region
  $region6: #{stage_module_forward.15} parent=0 // pred_check
    _
  $region7: #{stage_module_forward.15} parent=0 // pred_check_branch
    %13 = sbr.rel (0) target = $region9
  $region8: #{stage_module_forward.15} parent=0 // pred_region
    _
  $region9: #{stage_module_forward.15} parent=0 // pred_fallthru
    _
  // Predicated region
  $region10: #{stage_module_forward.15} parent=0 // pred_check
    _
  $region11: #{stage_module_forward.15} parent=0 // pred_check_branch
    %15 = sbr.rel (0) target = $region13
  $region12: #{stage_module_forward.15} parent=0 // pred_region
    _
  $region13: #{stage_module_forward.15} parent=0 // pred_fallthru
    _
  // Predicated region
  $region14: #{stage_module_forward.15} parent=0 // pred_check
    _
  $region15: #{stage_module_forward.15} parent=0 // pred_check_branch
    %17 = sbr.rel (0) target = $region17
  $region16: #{stage_module_forward.15} parent=0 // pred_region
    _
  $region17: #{stage_module_forward.15} parent=0 // pred_fallthru
    _
  // Predicated region
  $region18: #{stage_module_forward.15} parent=0 // pred_check
    _
  $region19: #{stage_module_forward.15} parent=0 // pred_check_branch
    %19 = sbr.rel (0) target = $region21
  $region20: #{stage_module_forward.15} parent=0 // pred_region
    _
  $region21: #{stage_module_forward.15} parent=0 // pred_fallthru
    _
  %v21 = vld [vmem:[%s0] sm:$0xff]
  %v22 = vld [vmem:[%s0 + $0x8] sm:$0xff]
  %v23 = vld [vmem:[%s0 + $0x10] sm:$0xff]
  %v24 = vld [vmem:[%s0 + $0x18] sm:$0xff]
  %v25 = vld [vmem:[%s0 + $0x20] sm:$0xff]
  %v26 = vld [vmem:[%s0 + $0x28] sm:$0xff]
  %v27 = vld [vmem:[%s0 + $0x30] sm:$0xff]
  %v28 = vld [vmem:[%s0 + $0x38] sm:$0xff]
  %v29 = vld [vmem:[%s0 + $0x40] sm:$0xff]
  %v30 = vld [vmem:[%s0 + $0x48] sm:$0xff]
  %v31 = vld [vmem:[%s0 + $0x50] sm:$0xff]
  %v32 = vld [vmem:[%s0 + $0x58] sm:$0xff]
  %v33 = vld [vmem:[%s0 + $0x60] sm:$0xff]
  %v34 = vld [vmem:[%s0 + $0x68] sm:$0xff]
  %v35 = vld [vmem:[%s0 + $0x70] sm:$0xff]
  %v36 = vld [vmem:[%s0 + $0x78] sm:$0xff]
  %vm37 = vcmask 261120
  %v38 = vsel %vm37, %v21, 0.0
  %39 = vadd.xlane.f32.xlu0 %v38
  %v40 = vpop.xlane.xlu0 %39
  %v41 = vsel %vm37, %v22, 0.0
  %42 = vadd.xlane.f32.xlu0 %v41
  %v43 = vpop.xlane.xlu0 %42
  %v44 = vsel %vm37, %v23, 0.0
  %45 = vadd.xlane.f32.xlu0 %v44
  %v46 = vpop.xlane.xlu0 %45
  %v47 = vsel %vm37, %v24, 0.0
  %48 = vadd.xlane.f32.xlu0 %v47
  %v49 = vpop.xlane.xlu0 %48
  %v50 = vsel %vm37, %v25, 0.0
  %51 = vadd.xlane.f32.xlu0 %v50
  %v52 = vpop.xlane.xlu0 %51
  %v53 = vsel %vm37, %v26, 0.0
  %54 = vadd.xlane.f32.xlu0 %v53
  %v55 = vpop.xlane.xlu0 %54
  %v56 = vsel %vm37, %v27, 0.0
  %57 = vadd.xlane.f32.xlu0 %v56
  %v58 = vpop.xlane.xlu0 %57
  %v59 = vsel %vm37, %v28, 0.0
  %60 = vadd.xlane.f32.xlu0 %v59
  %v61 = vpop.xlane.xlu0 %60
  %v62 = vsel %vm37, %v29, 0.0
  %63 = vadd.xlane.f32.xlu0 %v62
  %v64 = vpop.xlane.xlu0 %63
  %v65 = vsel %vm37, %v30, 0.0
  %66 = vadd.xlane.f32.xlu0 %v65
  %v67 = vpop.xlane.xlu0 %66
  %v68 = vsel %vm37, %v31, 0.0
  %69 = vadd.xlane.f32.xlu0 %v68
  %v70 = vpop.xlane.xlu0 %69
  %v71 = vsel %vm37, %v32, 0.0
  %72 = vadd.xlane.f32.xlu0 %v71
  %v73 = vpop.xlane.xlu0 %72
  %v74 = vsel %vm37, %v33, 0.0
  %75 = vadd.xlane.f32.xlu0 %v74
  %v76 = vpop.xlane.xlu0 %75
  %v77 = vsel %vm37, %v34, 0.0
  %78 = vadd.xlane.f32.xlu0 %v77
  %v79 = vpop.xlane.xlu0 %78
  %v80 = vsel %vm37, %v35, 0.0
  %81 = vadd.xlane.f32.xlu0 %v80
  %v82 = vpop.xlane.xlu0 %81
  %v83 = vsel %vm37, %v36, 0.0
  %84 = vadd.xlane.f32.xlu0 %v83
  %v85 = vpop.xlane.xlu0 %84
  %v86 = vrcp.pop 32.0
  %v87 = vmul.f32 %v40, %v86
  %v88 = vmul.f32 %v43, %v86
  %v89 = vmul.f32 %v46, %v86
  %v90 = vmul.f32 %v49, %v86
  %v91 = vmul.f32 %v52, %v86
  %v92 = vmul.f32 %v55, %v86
  %v93 = vmul.f32 %v58, %v86
  %v94 = vmul.f32 %v61, %v86
  %v95 = vmul.f32 %v64, %v86
  %v96 = vmul.f32 %v67, %v86
  %v97 = vmul.f32 %v70, %v86
  %v98 = vmul.f32 %v73, %v86
  %v99 = vmul.f32 %v76, %v86
  %v100 = vmul.f32 %v79, %v86
  %v101 = vmul.f32 %v82, %v86
  %v102 = vmul.f32 %v85, %v86
  %v103 = vsub.f32 %v21, %v87
  %v104 = vsub.f32 %v22, %v88
  %v105 = vsub.f32 %v23, %v89
  %v106 = vsub.f32 %v24, %v90
  %v107 = vsub.f32 %v25, %v91
  %v108 = vsub.f32 %v26, %v92
  %v109 = vsub.f32 %v27, %v93
  %v110 = vsub.f32 %v28, %v94
  %v111 = vsub.f32 %v29, %v95
  %v112 = vsub.f32 %v30, %v96
  %v113 = vsub.f32 %v31, %v97
  %v114 = vsub.f32 %v32, %v98
  %v115 = vsub.f32 %v33, %v99
  %v116 = vsub.f32 %v34, %v100
  %v117 = vsub.f32 %v35, %v101
  %v118 = vsub.f32 %v36, %v102
  %v119 = vmul.f32 %v103, %v103
  %v120 = vmul.f32 %v104, %v104
  %v121 = vmul.f32 %v105, %v105
  %v122 = vmul.f32 %v106, %v106
  %v123 = vmul.f32 %v107, %v107
  %v124 = vmul.f32 %v108, %v108
  %v125 = vmul.f32 %v109, %v109
  %v126 = vmul.f32 %v110, %v110
  %v127 = vmul.f32 %v111, %v111
  %v128 = vmul.f32 %v112, %v112
  %v129 = vmul.f32 %v113, %v113
  %v130 = vmul.f32 %v114, %v114
  %v131 = vmul.f32 %v115, %v115
  %v132 = vmul.f32 %v116, %v116
  %v133 = vmul.f32 %v117, %v117
  %v134 = vmul.f32 %v118, %v118
  %v135 = vsel %vm37, %v119, 0.0
  %136 = vadd.xlane.f32.xlu0 %v135
  %v137 = vpop.xlane.xlu0 %136
  %v138 = vsel %vm37, %v120, 0.0
  %139 = vadd.xlane.f32.xlu0 %v138
  %v140 = vpop.xlane.xlu0 %139
  %v141 = vsel %vm37, %v121, 0.0
  %142 = vadd.xlane.f32.xlu0 %v141
  %v143 = vpop.xlane.xlu0 %142
  %v144 = vsel %vm37, %v122, 0.0
  %145 = vadd.xlane.f32.xlu0 %v144
  %v146 = vpop.xlane.xlu0 %145
  %v147 = vsel %vm37, %v123, 0.0
  %148 = vadd.xlane.f32.xlu0 %v147
  %v149 = vpop.xlane.xlu0 %148
  %v150 = vsel %vm37, %v124, 0.0
  %151 = vadd.xlane.f32.xlu0 %v150
  %v152 = vpop.xlane.xlu0 %151
  %v153 = vsel %vm37, %v125, 0.0
  %154 = vadd.xlane.f32.xlu0 %v153
  %v155 = vpop.xlane.xlu0 %154
  %v156 = vsel %vm37, %v126, 0.0
  %157 = vadd.xlane.f32.xlu0 %v156
  %v158 = vpop.xlane.xlu0 %157
  %v159 = vsel %vm37, %v127, 0.0
  %160 = vadd.xlane.f32.xlu0 %v159
  %v161 = vpop.xlane.xlu0 %160
  %v162 = vsel %vm37, %v128, 0.0
  %163 = vadd.xlane.f32.xlu0 %v162
  %v164 = vpop.xlane.xlu0 %163
  %v165 = vsel %vm37, %v129, 0.0
  %166 = vadd.xlane.f32.xlu0 %v165
  %v167 = vpop.xlane.xlu0 %166
  %v168 = vsel %vm37, %v130, 0.0
  %169 = vadd.xlane.f32.xlu0 %v168
  %v170 = vpop.xlane.xlu0 %169
  %v171 = vsel %vm37, %v131, 0.0
  %172 = vadd.xlane.f32.xlu0 %v171
  %v173 = vpop.xlane.xlu0 %172
  %v174 = vsel %vm37, %v132, 0.0
  %175 = vadd.xlane.f32.xlu0 %v174
  %v176 = vpop.xlane.xlu0 %175
  %v177 = vsel %vm37, %v133, 0.0
  %178 = vadd.xlane.f32.xlu0 %v177
  %v179 = vpop.xlane.xlu0 %178
  %v180 = vsel %vm37, %v134, 0.0
  %181 = vadd.xlane.f32.xlu0 %v180
  %v182 = vpop.xlane.xlu0 %181
  %v183 = vmul.f32 %v137, %v86
  %v184 = vmul.f32 %v140, %v86
  %v185 = vmul.f32 %v143, %v86
  %v186 = vmul.f32 %v146, %v86
  %v187 = vmul.f32 %v149, %v86
  %v188 = vmul.f32 %v152, %v86
  %v189 = vmul.f32 %v155, %v86
  %v190 = vmul.f32 %v158, %v86
  %v191 = vmul.f32 %v161, %v86
  %v192 = vmul.f32 %v164, %v86
  %v193 = vmul.f32 %v167, %v86
  %v194 = vmul.f32 %v170, %v86
  %v195 = vmul.f32 %v173, %v86
  %v196 = vmul.f32 %v176, %v86
  %v197 = vmul.f32 %v179, %v86
  %v198 = vmul.f32 %v182, %v86
  %v199 = vadd.f32 %v183, 1e-05
  %v200 = vadd.f32 %v184, 1e-05
  %v201 = vadd.f32 %v185, 1e-05
  %v202 = vadd.f32 %v186, 1e-05
  %v203 = vadd.f32 %v187, 1e-05
  %v204 = vadd.f32 %v188, 1e-05
  %v205 = vadd.f32 %v189, 1e-05
  %v206 = vadd.f32 %v190, 1e-05
  %v207 = vadd.f32 %v191, 1e-05
  %v208 = vadd.f32 %v192, 1e-05
  %v209 = vadd.f32 %v193, 1e-05
  %v210 = vadd.f32 %v194, 1e-05
  %v211 = vadd.f32 %v195, 1e-05
  %v212 = vadd.f32 %v196, 1e-05
  %v213 = vadd.f32 %v197, 1e-05
  %v214 = vadd.f32 %v198, 1e-05
  %v215 = vrsqrt.pop %v199
  %v216 = vrsqrt.pop %v200
  %v217 = vrsqrt.pop %v201
  %v218 = vrsqrt.pop %v202
  %v219 = vrsqrt.pop %v203
  %v220 = vrsqrt.pop %v204
  %v221 = vrsqrt.pop %v205
  %v222 = vrsqrt.pop %v206
  %v223 = vrsqrt.pop %v207
  %v224 = vrsqrt.pop %v208
  %v225 = vrsqrt.pop %v209
  %v226 = vrsqrt.pop %v210
  %v227 = vrsqrt.pop %v211
  %v228 = vrsqrt.pop %v212
  %v229 = vrsqrt.pop %v213
  %v230 = vrsqrt.pop %v214
  %v231 = vmul.f32 %v103, %v215
  %v232 = vmul.f32 %v104, %v216
  %v233 = vmul.f32 %v105, %v217
  %v234 = vmul.f32 %v106, %v218
  %v235 = vmul.f32 %v107, %v219
  %v236 = vmul.f32 %v108, %v220
  %v237 = vmul.f32 %v109, %v221
  %v238 = vmul.f32 %v110, %v222
  %v239 = vmul.f32 %v111, %v223
  %v240 = vmul.f32 %v112, %v224
  %v241 = vmul.f32 %v113, %v225
  %v242 = vmul.f32 %v114, %v226
  %v243 = vmul.f32 %v115, %v227
  %v244 = vmul.f32 %v116, %v228
  %v245 = vmul.f32 %v117, %v229
  %v246 = vmul.f32 %v118, %v230
  %v247 = vld [vmem:[%s2] sm:$0x1]
  %v249 = vlaneseq
  %v250 = vshrl.u32 %v249, 7
  %v251 = vsub.s32 0, %v250
  %v252 = vrot.slane %v247, %v251
  %v254 = vmul.f32 %v231, %v252
  %v255 = vmul.f32 %v232, %v252
  %v256 = vmul.f32 %v233, %v252
  %v257 = vmul.f32 %v234, %v252
  %v258 = vmul.f32 %v235, %v252
  %v259 = vmul.f32 %v236, %v252
  %v260 = vmul.f32 %v237, %v252
  %v261 = vmul.f32 %v238, %v252
  %v262 = vmul.f32 %v239, %v252
  %v263 = vmul.f32 %v240, %v252
  %v264 = vmul.f32 %v241, %v252
  %v265 = vmul.f32 %v242, %v252
  %v266 = vmul.f32 %v243, %v252
  %v267 = vmul.f32 %v244, %v252
  %v268 = vmul.f32 %v245, %v252
  %v269 = vmul.f32 %v246, %v252
  %v270 = vld [vmem:[%s3] sm:$0x1]
  %v272 = vlaneseq
  %v273 = vshrl.u32 %v272, 7
  %v274 = vsub.s32 0, %v273
  %v275 = vrot.slane %v270, %v274
  %v277 = vadd.f32 %v254, %v275
  %v278 = vadd.f32 %v255, %v275
  %v279 = vadd.f32 %v256, %v275
  %v280 = vadd.f32 %v257, %v275
  %v281 = vadd.f32 %v258, %v275
  %v282 = vadd.f32 %v259, %v275
  %v283 = vadd.f32 %v260, %v275
  %v284 = vadd.f32 %v261, %v275
  %v285 = vadd.f32 %v262, %v275
  %v286 = vadd.f32 %v263, %v275
  %v287 = vadd.f32 %v264, %v275
  %v288 = vadd.f32 %v265, %v275
  %v289 = vadd.f32 %v266, %v275
  %v290 = vadd.f32 %v267, %v275
  %v291 = vadd.f32 %v268, %v275
  %v292 = vadd.f32 %v269, %v275
  %v293 = vpack.c.bf16 %v278, %v277
  %v294 = vpack.c.bf16 %v280, %v279
  %v295 = vpack.c.bf16 %v282, %v281
  %v296 = vpack.c.bf16 %v284, %v283
  %v297 = vpack.c.bf16 %v286, %v285
  %v298 = vpack.c.bf16 %v288, %v287
  %v299 = vpack.c.bf16 %v290, %v289
  %v300 = vpack.c.bf16 %v292, %v291
  %v301 = vld [vmem:[%s1] sm:$0xff]
  %v302 = vld [vmem:[%s1 + $0x8] sm:$0xff]
  %v303 = vld [vmem:[%s1 + $0x10] sm:$0xff]
  %v304 = vld [vmem:[%s1 + $0x18] sm:$0xff]
  %v305 = vpack.c.bf16 %v302, %v301
  %v306 = vpack.c.bf16 %v304, %v303
  %v307 = vld [vmem:[%s4] sm:$0x1]
  %v309 = vlaneseq
  %v310 = vshrl.u32 %v309, 7
  %v311 = vsub.s32 0, %v310
  %v312 = vrot.slane %v307, %v311
  %v315 = vsel %vm37, %v293, 0
  %v318 = vsel %vm37, %v294, 0
  %v321 = vsel %vm37, %v295, 0
  %v324 = vsel %vm37, %v296, 0
  %v327 = vsel %vm37, %v297, 0
  %v330 = vsel %vm37, %v298, 0
  %v333 = vsel %vm37, %v299, 0
  %v336 = vsel %vm37, %v300, 0
  %338 = vmatprep.subr.bf16.mxu0 0
  %339 = vmatpush1.bf16.msra.mxu0 %v305
  %340 = vmatprep.subr.bf16.mxu0 0
  %341 = vmatpush1.bf16.msra.mxu0 %v306
  %342 = vmatprep.subr.bf16.mxu0 0
  %343 = vmatpush1.bf16.msra.mxu0 0
  %344 = vmatprep.subr.bf16.mxu0 0
  %345 = vmatpush1.bf16.msra.mxu0 0
  %346 = vmatprep.subr.bf16.mxu0 0
  %347 = vmatpush1.bf16.msra.mxu0 0
  %348 = vmatprep.subr.bf16.mxu0 0
  %349 = vmatpush1.bf16.msra.mxu0 0
  %350 = vmatprep.subr.bf16.mxu0 0
  %351 = vmatpush1.bf16.msra.mxu0 0
  %352 = vmatprep.subr.bf16.mxu0 0
  %353 = vmatpush1.bf16.msra.mxu0 0
  %354 = vmatprep.subr.bf16.mxu0 0
  %355 = vmatpush1.bf16.msra.mxu0 0
  %356 = vmatprep.subr.bf16.mxu0 0
  %357 = vmatpush1.bf16.msra.mxu0 0
  %358 = vmatprep.subr.bf16.mxu0 0
  %359 = vmatpush1.bf16.msra.mxu0 0
  %360 = vmatprep.subr.bf16.mxu0 0
  %361 = vmatpush1.bf16.msra.mxu0 0
  %362 = vmatprep.subr.bf16.mxu0 0
  %363 = vmatpush1.bf16.msra.mxu0 0
  %364 = vmatprep.subr.bf16.mxu0 0
  %365 = vmatpush1.bf16.msra.mxu0 0
  %366 = vmatprep.subr.bf16.mxu0 0
  %367 = vmatpush1.bf16.msra.mxu0 0
  %368 = vmatprep.subr.bf16.mxu0 0
  %369 = vmatpush1.bf16.msra.mxu0 0
  %370 = vmatprep.mubr.bf16.mxu0 0
  %371 = vmatmul.mubr.bf16.gmra.mrb[0].mxu0 %v315
  %v372 = vpop.f32.mrb[0].mxu0
  %v373 = vadd.f32 %v312, %v372
  %v374 = vpop.f32.mrb[0].mxu0
  %v375 = vpop.f32.mrb[0].mxu0
  %v376 = vadd.f32 %v312, %v375
  %v377 = vpop.f32.mrb[0].mxu0
  %378 = vmatprep.mubr.bf16.mxu0 0
  %379 = vmatmul.mubr.bf16.gmra.mrb[0].mxu0 %v318
  %v380 = vpop.f32.mrb[0].mxu0
  %v381 = vadd.f32 %v312, %v380
  %v382 = vpop.f32.mrb[0].mxu0
  %v383 = vpop.f32.mrb[0].mxu0
  %v384 = vadd.f32 %v312, %v383
  %v385 = vpop.f32.mrb[0].mxu0
  %386 = vmatprep.mubr.bf16.mxu0 0
  %387 = vmatmul.mubr.bf16.gmra.mrb[0].mxu0 %v321
  %v388 = vpop.f32.mrb[0].mxu0
  %v389 = vadd.f32 %v312, %v388
  %v390 = vpop.f32.mrb[0].mxu0
  %v391 = vpop.f32.mrb[0].mxu0
  %v392 = vadd.f32 %v312, %v391
  %v393 = vpop.f32.mrb[0].mxu0
  %394 = vmatprep.mubr.bf16.mxu0 0
  %395 = vmatmul.mubr.bf16.gmra.mrb[0].mxu0 %v324
  %v396 = vpop.f32.mrb[0].mxu0
  %v397 = vadd.f32 %v312, %v396
  %v398 = vpop.f32.mrb[0].mxu0
  %v399 = vpop.f32.mrb[0].mxu0
  %v400 = vadd.f32 %v312, %v399
  %v401 = vpop.f32.mrb[0].mxu0
  %402 = vmatprep.mubr.bf16.mxu0 0
  %403 = vmatmul.mubr.bf16.gmra.mrb[0].mxu0 %v327
  %v404 = vpop.f32.mrb[0].mxu0
  %v405 = vadd.f32 %v312, %v404
  %v406 = vpop.f32.mrb[0].mxu0
  %v407 = vpop.f32.mrb[0].mxu0
  %v408 = vadd.f32 %v312, %v407
  %v409 = vpop.f32.mrb[0].mxu0
  %410 = vmatprep.mubr.bf16.mxu0 0
  %411 = vmatmul.mubr.bf16.gmra.mrb[0].mxu0 %v330
  %v412 = vpop.f32.mrb[0].mxu0
  %v413 = vadd.f32 %v312, %v412
  %v414 = vpop.f32.mrb[0].mxu0
  %v415 = vpop.f32.mrb[0].mxu0
  %v416 = vadd.f32 %v312, %v415
  %v417 = vpop.f32.mrb[0].mxu0
  %418 = vmatprep.mubr.bf16.mxu0 0
  %419 = vmatmul.mubr.bf16.gmra.mrb[0].mxu0 %v333
  %v420 = vpop.f32.mrb[0].mxu0
  %v421 = vadd.f32 %v312, %v420
  %v422 = vpop.f32.mrb[0].mxu0
  %v423 = vpop.f32.mrb[0].mxu0
  %v424 = vadd.f32 %v312, %v423
  %v425 = vpop.f32.mrb[0].mxu0
  %426 = vmatprep.mubr.bf16.mxu0 0
  %427 = vmatmul.mubr.bf16.gmra.mrb[0].mxu0 %v336
  %v428 = vpop.f32.mrb[0].mxu0
  %v429 = vadd.f32 %v312, %v428
  %v430 = vpop.f32.mrb[0].mxu0
  %v431 = vpop.f32.mrb[0].mxu0
  %v432 = vadd.f32 %v312, %v431
  %v433 = vpop.f32.mrb[0].mxu0
  %434 = vdwg.mxu0
  %v435 = vmul.f32 %v373, 0.5
  %v436 = vmul.f32 %v376, 0.5
  %v437 = vmul.f32 %v381, 0.5
  %v438 = vmul.f32 %v384, 0.5
  %v439 = vmul.f32 %v389, 0.5
  %v440 = vmul.f32 %v392, 0.5
  %v441 = vmul.f32 %v397, 0.5
  %v442 = vmul.f32 %v400, 0.5
  %v443 = vmul.f32 %v405, 0.5
  %v444 = vmul.f32 %v408, 0.5
  %v445 = vmul.f32 %v413, 0.5
  %v446 = vmul.f32 %v416, 0.5
  %v447 = vmul.f32 %v421, 0.5
  %v448 = vmul.f32 %v424, 0.5
  %v449 = vmul.f32 %v429, 0.5
  %v450 = vmul.f32 %v432, 0.5
  %v451 = vmul.f32 %v373, 0.70710677
  %v452 = vmul.f32 %v376, 0.70710677
  %v453 = vmul.f32 %v381, 0.70710677
  %v454 = vmul.f32 %v384, 0.70710677
  %v455 = vmul.f32 %v389, 0.70710677
  %v456 = vmul.f32 %v392, 0.70710677
  %v457 = vmul.f32 %v397, 0.70710677
  %v458 = vmul.f32 %v400, 0.70710677
  %v459 = vmul.f32 %v405, 0.70710677
  %v460 = vmul.f32 %v408, 0.70710677
  %v461 = vmul.f32 %v413, 0.70710677
  %v462 = vmul.f32 %v416, 0.70710677
  %v463 = vmul.f32 %v421, 0.70710677
  %v464 = vmul.f32 %v424, 0.70710677
  %v465 = vmul.f32 %v429, 0.70710677
  %v466 = vmul.f32 %v432, 0.70710677
  %v467 = verf.f32.pop %v451
  %v468 = verf.f32.pop %v452
  %v469 = verf.f32.pop %v453
  %v470 = verf.f32.pop %v454
  %v471 = verf.f32.pop %v455
  %v472 = verf.f32.pop %v456
  %v473 = verf.f32.pop %v457
  %v474 = verf.f32.pop %v458
  %v475 = verf.f32.pop %v459
  %v476 = verf.f32.pop %v460
  %v477 = verf.f32.pop %v461
  %v478 = verf.f32.pop %v462
  %v479 = verf.f32.pop %v463
  %v480 = verf.f32.pop %v464
  %v481 = verf.f32.pop %v465
  %v482 = verf.f32.pop %v466
  %v483 = vadd.f32 %v467, 1.0
  %v484 = vadd.f32 %v468, 1.0
  %v485 = vadd.f32 %v469, 1.0
  %v486 = vadd.f32 %v470, 1.0
  %v487 = vadd.f32 %v471, 1.0
  %v488 = vadd.f32 %v472, 1.0
  %v489 = vadd.f32 %v473, 1.0
  %v490 = vadd.f32 %v474, 1.0
  %v491 = vadd.f32 %v475, 1.0
  %v492 = vadd.f32 %v476, 1.0
  %v493 = vadd.f32 %v477, 1.0
  %v494 = vadd.f32 %v478, 1.0
  %v495 = vadd.f32 %v479, 1.0
  %v496 = vadd.f32 %v480, 1.0
  %v497 = vadd.f32 %v481, 1.0
  %v498 = vadd.f32 %v482, 1.0
  %v499 = vmul.f32 %v435, %v483
  %v500 = vmul.f32 %v436, %v484
  %v501 = vmul.f32 %v437, %v485
  %v502 = vmul.f32 %v438, %v486
  %v503 = vmul.f32 %v439, %v487
  %v504 = vmul.f32 %v440, %v488
  %v505 = vmul.f32 %v441, %v489
  %v506 = vmul.f32 %v442, %v490
  %v507 = vmul.f32 %v443, %v491
  %v508 = vmul.f32 %v444, %v492
  %v509 = vmul.f32 %v445, %v493
  %v510 = vmul.f32 %v446, %v494
  %v511 = vmul.f32 %v447, %v495
  %v512 = vmul.f32 %v448, %v496
  %v513 = vmul.f32 %v449, %v497
  %v514 = vmul.f32 %v450, %v498
  %515 = vst [vmem:[%s5] sm:$0xff] %v499
  %516 = vst [vmem:[%s5 + $0x8] sm:$0xff] %v500
  %517 = vst [vmem:[%s5 + $0x10] sm:$0xff] %v501
  %518 = vst [vmem:[%s5 + $0x18] sm:$0xff] %v502
  %519 = vst [vmem:[%s5 + $0x20] sm:$0xff] %v503
  %520 = vst [vmem:[%s5 + $0x28] sm:$0xff] %v504
  %521 = vst [vmem:[%s5 + $0x30] sm:$0xff] %v505
  %522 = vst [vmem:[%s5 + $0x38] sm:$0xff] %v506
  %523 = vst [vmem:[%s5 + $0x40] sm:$0xff] %v507
  %524 = vst [vmem:[%s5 + $0x48] sm:$0xff] %v508
  %525 = vst [vmem:[%s5 + $0x50] sm:$0xff] %v509
  %526 = vst [vmem:[%s5 + $0x58] sm:$0xff] %v510
  %527 = vst [vmem:[%s5 + $0x60] sm:$0xff] %v511
  %528 = vst [vmem:[%s5 + $0x68] sm:$0xff] %v512
  %529 = vst [vmem:[%s5 + $0x70] sm:$0xff] %v513
  %530 = vst [vmem:[%s5 + $0x78] sm:$0xff] %v514
  // Predicated region
  $region22: #{stage_module_forward.15} parent=0 // pred_check
    _
  $region23: #{stage_module_forward.15} parent=0 // pred_check_branch
    %532 = sbr.rel (0) target = $region25
  $region24: #{stage_module_forward.15} parent=0 // pred_region
    _
  $region25: #{stage_module_forward.15} parent=0 // pred_fallthru
    _
  // Predicated region
  $region26: #{stage_module_forward.15} parent=0 // pred_check
    _
  $region27: #{stage_module_forward.15} parent=0 // pred_check_branch
    %534 = sbr.rel (0) target = $region29
  $region28: #{stage_module_forward.15} parent=0 // pred_region
    _
  $region29: #{stage_module_forward.15} parent=0 // pred_fallthru
    _

// kernel: stage_module_forward.16
$region0: #{stage_module_forward.16}
  #allocation0 [shape = 'u32[]', space=smem, size = 0x4, offset = 0x4, fixed_abs, tag = 'smem constant byte address 0x4 - core index']
  #allocation1 [shape = 'u32[144,128]{1,0:T(1,128)}', space=vmem, size = 0x12000, scoped, tag = 'internal scratch']
  %s0 = inlined_call_operand.vmem [shape: f32[128,128], index: 0, kind: input, shape index: {}]
  %s1 = inlined_call_operand.vmem [shape: f32[128,32], index: 1, kind: input, shape index: {}]
  %s2 = inlined_call_operand.vmem [shape: f32[1,32], index: 2, kind: input, shape index: {}]
  %s3 = inlined_call_operand.vmem [shape: f32[128,32], index: 3, kind: input, shape index: {}]
  %s4 = inlined_call_operand.vmem [shape: f32[128,32], index: 4, kind: output, shape index: {}]
  %s5 = sld [smem:[#allocation0]]
  $region26: #{stage_module_forward.16} parent=0
    _
  %s7 = ssub.s32 1, %s5
  %s8 = scalar_select 0, %s7, %s5
  // Predicated region
  $region2: #{stage_module_forward.16} parent=0 // pred_check
    _
  $region3: #{stage_module_forward.16} parent=0 // pred_check_branch
    %10 = sbr.rel (0) target = $region5
  $region4: #{stage_module_forward.16} parent=0 // pred_region
    _
  $region5: #{stage_module_forward.16} parent=0 // pred_fallthru
    _
  // Predicated region
  $region6: #{stage_module_forward.16} parent=0 // pred_check
    _
  $region7: #{stage_module_forward.16} parent=0 // pred_check_branch
    %12 = sbr.rel (0) target = $region9
  $region8: #{stage_module_forward.16} parent=0 // pred_region
    _
  $region9: #{stage_module_forward.16} parent=0 // pred_fallthru
    _
  // Predicated region
  $region10: #{stage_module_forward.16} parent=0 // pred_check
    _
  $region11: #{stage_module_forward.16} parent=0 // pred_check_branch
    %14 = sbr.rel (0) target = $region13
  $region12: #{stage_module_forward.16} parent=0 // pred_region
    _
  $region13: #{stage_module_forward.16} parent=0 // pred_fallthru
    _
  // Predicated region
  $region14: #{stage_module_forward.16} parent=0 // pred_check
    _
  $region15: #{stage_module_forward.16} parent=0 // pred_check_branch
    %16 = sbr.rel (0) target = $region17
  $region16: #{stage_module_forward.16} parent=0 // pred_region
    _
  $region17: #{stage_module_forward.16} parent=0 // pred_fallthru
    _
  %v18 = vld [vmem:[%s0] sm:$0xff]
  %v19 = vld [vmem:[%s0 + $0x8] sm:$0xff]
  %v20 = vld [vmem:[%s0 + $0x10] sm:$0xff]
  %v21 = vld [vmem:[%s0 + $0x18] sm:$0xff]
  %v22 = vld [vmem:[%s0 + $0x20] sm:$0xff]
  %v23 = vld [vmem:[%s0 + $0x28] sm:$0xff]
  %v24 = vld [vmem:[%s0 + $0x30] sm:$0xff]
  %v25 = vld [vmem:[%s0 + $0x38] sm:$0xff]
  %v26 = vld [vmem:[%s0 + $0x40] sm:$0xff]
  %v27 = vld [vmem:[%s0 + $0x48] sm:$0xff]
  %v28 = vld [vmem:[%s0 + $0x50] sm:$0xff]
  %v29 = vld [vmem:[%s0 + $0x58] sm:$0xff]
  %v30 = vld [vmem:[%s0 + $0x60] sm:$0xff]
  %v31 = vld [vmem:[%s0 + $0x68] sm:$0xff]
  %v32 = vld [vmem:[%s0 + $0x70] sm:$0xff]
  %v33 = vld [vmem:[%s0 + $0x78] sm:$0xff]
  %v34 = vpack.c.bf16 %v19, %v18
  %v35 = vpack.c.bf16 %v21, %v20
  %v36 = vpack.c.bf16 %v23, %v22
  %v37 = vpack.c.bf16 %v25, %v24
  %v38 = vpack.c.bf16 %v27, %v26
  %v39 = vpack.c.bf16 %v29, %v28
  %v40 = vpack.c.bf16 %v31, %v30
  %v41 = vpack.c.bf16 %v33, %v32
  %v42 = vld [vmem:[%s1] sm:$0xff]
  %v43 = vld [vmem:[%s1 + $0x8] sm:$0xff]
  %v44 = vld [vmem:[%s1 + $0x10] sm:$0xff]
  %v45 = vld [vmem:[%s1 + $0x18] sm:$0xff]
  %v46 = vld [vmem:[%s1 + $0x20] sm:$0xff]
  %v47 = vld [vmem:[%s1 + $0x28] sm:$0xff]
  %v48 = vld [vmem:[%s1 + $0x30] sm:$0xff]
  %v49 = vld [vmem:[%s1 + $0x38] sm:$0xff]
  %v50 = vld [vmem:[%s1 + $0x40] sm:$0xff]
  %v51 = vld [vmem:[%s1 + $0x48] sm:$0xff]
  %v52 = vld [vmem:[%s1 + $0x50] sm:$0xff]
  %v53 = vld [vmem:[%s1 + $0x58] sm:$0xff]
  %v54 = vld [vmem:[%s1 + $0x60] sm:$0xff]
  %v55 = vld [vmem:[%s1 + $0x68] sm:$0xff]
  %v56 = vld [vmem:[%s1 + $0x70] sm:$0xff]
  %v57 = vld [vmem:[%s1 + $0x78] sm:$0xff]
  %v58 = vpack.c.bf16 %v43, %v42
  %v59 = vpack.c.bf16 %v45, %v44
  %v60 = vpack.c.bf16 %v47, %v46
  %v61 = vpack.c.bf16 %v49, %v48
  %v62 = vpack.c.bf16 %v51, %v50
  %v63 = vpack.c.bf16 %v53, %v52
  %v64 = vpack.c.bf16 %v55, %v54
  %v65 = vpack.c.bf16 %v57, %v56
  %v66 = vld [vmem:[%s2] sm:$0x1]
  %v68 = vlaneseq
  %v69 = vshrl.u32 %v68, 7
  %v70 = vsub.s32 0, %v69
  %v71 = vrot.slane %v66, %v70
  %73 = vmatprep.subr.bf16.mxu0 0
  %74 = vmatpush1.bf16.msra.mxu0 %v58
  %75 = vmatprep.subr.bf16.mxu0 0
  %76 = vmatpush1.bf16.msra.mxu0 %v59
  %77 = vmatprep.subr.bf16.mxu0 0
  %78 = vmatpush1.bf16.msra.mxu0 %v60
  %79 = vmatprep.subr.bf16.mxu0 0
  %80 = vmatpush1.bf16.msra.mxu0 %v61
  %81 = vmatprep.subr.bf16.mxu0 0
  %82 = vmatpush1.bf16.msra.mxu0 %v62
  %83 = vmatprep.subr.bf16.mxu0 0
  %84 = vmatpush1.bf16.msra.mxu0 %v63
  %85 = vmatprep.subr.bf16.mxu0 0
  %86 = vmatpush1.bf16.msra.mxu0 %v64
  %87 = vmatprep.subr.bf16.mxu0 0
  %88 = vmatpush1.bf16.msra.mxu0 %v65
  %89 = vmatprep.subr.bf16.mxu0 0
  %90 = vmatpush1.bf16.msra.mxu0 0
  %91 = vmatprep.subr.bf16.mxu0 0
  %92 = vmatpush1.bf16.msra.mxu0 0
  %93 = vmatprep.subr.bf16.mxu0 0
  %94 = vmatpush1.bf16.msra.mxu0 0
  %95 = vmatprep.subr.bf16.mxu0 0
  %96 = vmatpush1.bf16.msra.mxu0 0
  %97 = vmatprep.subr.bf16.mxu0 0
  %98 = vmatpush1.bf16.msra.mxu0 0
  %99 = vmatprep.subr.bf16.mxu0 0
  %100 = vmatpush1.bf16.msra.mxu0 0
  %101 = vmatprep.subr.bf16.mxu0 0
  %102 = vmatpush1.bf16.msra.mxu0 0
  %103 = vmatprep.subr.bf16.mxu0 0
  %104 = vmatpush1.bf16.msra.mxu0 0
  %105 = vmatprep.mubr.bf16.mxu0 0
  %106 = vmatmul.mubr.bf16.gmra.mrb[0].mxu0 %v34
  %v107 = vpop.f32.mrb[0].mxu0
  %v108 = vadd.f32 %v71, %v107
  %v109 = vpop.f32.mrb[0].mxu0
  %v110 = vpop.f32.mrb[0].mxu0
  %v111 = vadd.f32 %v71, %v110
  %v112 = vpop.f32.mrb[0].mxu0
  %113 = vmatprep.mubr.bf16.mxu0 0
  %114 = vmatmul.mubr.bf16.gmra.mrb[0].mxu0 %v35
  %v115 = vpop.f32.mrb[0].mxu0
  %v116 = vadd.f32 %v71, %v115
  %v117 = vpop.f32.mrb[0].mxu0
  %v118 = vpop.f32.mrb[0].mxu0
  %v119 = vadd.f32 %v71, %v118
  %v120 = vpop.f32.mrb[0].mxu0
  %121 = vmatprep.mubr.bf16.mxu0 0
  %122 = vmatmul.mubr.bf16.gmra.mrb[0].mxu0 %v36
  %v123 = vpop.f32.mrb[0].mxu0
  %v124 = vadd.f32 %v71, %v123
  %v125 = vpop.f32.mrb[0].mxu0
  %v126 = vpop.f32.mrb[0].mxu0
  %v127 = vadd.f32 %v71, %v126
  %v128 = vpop.f32.mrb[0].mxu0
  %129 = vmatprep.mubr.bf16.mxu0 0
  %130 = vmatmul.mubr.bf16.gmra.mrb[0].mxu0 %v37
  %v131 = vpop.f32.mrb[0].mxu0
  %v132 = vadd.f32 %v71, %v131
  %v133 = vpop.f32.mrb[0].mxu0
  %v134 = vpop.f32.mrb[0].mxu0
  %v135 = vadd.f32 %v71, %v134
  %v136 = vpop.f32.mrb[0].mxu0
  %137 = vmatprep.mubr.bf16.mxu0 0
  %138 = vmatmul.mubr.bf16.gmra.mrb[0].mxu0 %v38
  %v139 = vpop.f32.mrb[0].mxu0
  %v140 = vadd.f32 %v71, %v139
  %v141 = vpop.f32.mrb[0].mxu0
  %v142 = vpop.f32.mrb[0].mxu0
  %v143 = vadd.f32 %v71, %v142
  %v144 = vpop.f32.mrb[0].mxu0
  %145 = vmatprep.mubr.bf16.mxu0 0
  %146 = vmatmul.mubr.bf16.gmra.mrb[0].mxu0 %v39
  %v147 = vpop.f32.mrb[0].mxu0
  %v148 = vadd.f32 %v71, %v147
  %v149 = vpop.f32.mrb[0].mxu0
  %v150 = vpop.f32.mrb[0].mxu0
  %v151 = vadd.f32 %v71, %v150
  %v152 = vpop.f32.mrb[0].mxu0
  %153 = vmatprep.mubr.bf16.mxu0 0
  %154 = vmatmul.mubr.bf16.gmra.mrb[0].mxu0 %v40
  %v155 = vpop.f32.mrb[0].mxu0
  %v156 = vadd.f32 %v71, %v155
  %v157 = vpop.f32.mrb[0].mxu0
  %v158 = vpop.f32.mrb[0].mxu0
  %v159 = vadd.f32 %v71, %v158
  %v160 = vpop.f32.mrb[0].mxu0
  %161 = vmatprep.mubr.bf16.mxu0 0
  %162 = vmatmul.mubr.bf16.gmra.mrb[0].mxu0 %v41
  %v163 = vpop.f32.mrb[0].mxu0
  %v164 = vadd.f32 %v71, %v163
  %v165 = vpop.f32.mrb[0].mxu0
  %v166 = vpop.f32.mrb[0].mxu0
  %v167 = vadd.f32 %v71, %v166
  %v168 = vpop.f32.mrb[0].mxu0
  %169 = vdwg.mxu0
  %v170 = vld [vmem:[%s3] sm:$0xff]
  %v171 = vld [vmem:[%s3 + $0x8] sm:$0xff]
  %v172 = vld [vmem:[%s3 + $0x10] sm:$0xff]
  %v173 = vld [vmem:[%s3 + $0x18] sm:$0xff]
  %v174 = vld [vmem:[%s3 + $0x20] sm:$0xff]
  %v175 = vld [vmem:[%s3 + $0x28] sm:$0xff]
  %v176 = vld [vmem:[%s3 + $0x30] sm:$0xff]
  %v177 = vld [vmem:[%s3 + $0x38] sm:$0xff]
  %v178 = vld [vmem:[%s3 + $0x40] sm:$0xff]
  %v179 = vld [vmem:[%s3 + $0x48] sm:$0xff]
  %v180 = vld [vmem:[%s3 + $0x50] sm:$0xff]
  %v181 = vld [vmem:[%s3 + $0x58] sm:$0xff]
  %v182 = vld [vmem:[%s3 + $0x60] sm:$0xff]
  %v183 = vld [vmem:[%s3 + $0x68] sm:$0xff]
  %v184 = vld [vmem:[%s3 + $0x70] sm:$0xff]
  %v185 = vld [vmem:[%s3 + $0x78] sm:$0xff]
  %v186 = vadd.f32 %v108, %v170
  %v187 = vadd.f32 %v111, %v171
  %v188 = vadd.f32 %v116, %v172
  %v189 = vadd.f32 %v119, %v173
  %v190 = vadd.f32 %v124, %v174
  %v191 = vadd.f32 %v127, %v175
  %v192 = vadd.f32 %v132, %v176
  %v193 = vadd.f32 %v135, %v177
  %v194 = vadd.f32 %v140, %v178
  %v195 = vadd.f32 %v143, %v179
  %v196 = vadd.f32 %v148, %v180
  %v197 = vadd.f32 %v151, %v181
  %v198 = vadd.f32 %v156, %v182
  %v199 = vadd.f32 %v159, %v183
  %v200 = vadd.f32 %v164, %v184
  %v201 = vadd.f32 %v167, %v185
  %vm202 = vcmask 261120
  %203 = vst.msk [vmem:[%s4] sm:$0xff] %vm202, %v186
  %204 = vst.msk [vmem:[%s4 + $0x8] sm:$0xff] %vm202, %v187
  %205 = vst.msk [vmem:[%s4 + $0x10] sm:$0xff] %vm202, %v188
  %206 = vst.msk [vmem:[%s4 + $0x18] sm:$0xff] %vm202, %v189
  %207 = vst.msk [vmem:[%s4 + $0x20] sm:$0xff] %vm202, %v190
  %208 = vst.msk [vmem:[%s4 + $0x28] sm:$0xff] %vm202, %v191
  %209 = vst.msk [vmem:[%s4 + $0x30] sm:$0xff] %vm202, %v192
  %210 = vst.msk [vmem:[%s4 + $0x38] sm:$0xff] %vm202, %v193
  %211 = vst.msk [vmem:[%s4 + $0x40] sm:$0xff] %vm202, %v194
  %212 = vst.msk [vmem:[%s4 + $0x48] sm:$0xff] %vm202, %v195
  %213 = vst.msk [vmem:[%s4 + $0x50] sm:$0xff] %vm202, %v196
  %214 = vst.msk [vmem:[%s4 + $0x58] sm:$0xff] %vm202, %v197
  %215 = vst.msk [vmem:[%s4 + $0x60] sm:$0xff] %vm202, %v198
  %216 = vst.msk [vmem:[%s4 + $0x68] sm:$0xff] %vm202, %v199
  %217 = vst.msk [vmem:[%s4 + $0x70] sm:$0xff] %vm202, %v200
  %218 = vst.msk [vmem:[%s4 + $0x78] sm:$0xff] %vm202, %v201
  // Predicated region
  $region18: #{stage_module_forward.16} parent=0 // pred_check
    _
  $region19: #{stage_module_forward.16} parent=0 // pred_check_branch
    %220 = sbr.rel (0) target = $region21
  $region20: #{stage_module_forward.16} parent=0 // pred_region
    _
  $region21: #{stage_module_forward.16} parent=0 // pred_fallthru
    _
  // Predicated region
  $region22: #{stage_module_forward.16} parent=0 // pred_check
    _
  $region23: #{stage_module_forward.16} parent=0 // pred_check_branch
    %222 = sbr.rel (0) target = $region25
  $region24: #{stage_module_forward.16} parent=0 // pred_region
    _
  $region25: #{stage_module_forward.16} parent=0 // pred_fallthru
    _

// kernel: stage_module_forward.21
$region0: #{stage_module_forward.21}
  #allocation0 [shape = 'u32[]', space=smem, size = 0x4, offset = 0x4, fixed_abs, tag = 'smem constant byte address 0x4 - core index']
  #allocation1 [shape = 'u32[144,128]{1,0:T(1,128)}', space=vmem, size = 0x12000, scoped, tag = 'internal scratch']
  %s0 = inlined_call_operand.vmem [shape: f32[128,128], index: 0, kind: input, shape index: {}]
  %s1 = inlined_call_operand.vmem [shape: f32[128,32], index: 1, kind: input, shape index: {}]
  %s2 = inlined_call_operand.vmem [shape: f32[1,32], index: 2, kind: input, shape index: {}]
  %s3 = inlined_call_operand.vmem [shape: f32[128,32], index: 3, kind: input, shape index: {}]
  %s4 = inlined_call_operand.hbm [shape: f32[128,32], index: 4, kind: output, shape index: {}]
  %s5 = sld [smem:[#allocation0]]
  $region26: #{stage_module_forward.21} parent=0
    _
  %s7 = ssub.s32 1, %s5
  %s8 = scalar_select 0, %s7, %s5
  $region1: #{stage_module_forward.21} parent=0
    #allocation2 [shape = 'u8[65536]{0}', space=vmem, size = 0x10000, scoped, tag = 'output window, operand 0, single buffered']
    #allocation3 [shape = 's32[1]{0}', space=sflag, size = 0x4, scoped, tag = 'scoped memory for stage_module_forward.21']
    %9 = vsyncpa [#allocation3], 0
    // Predicated region
    $region2: #{stage_module_forward.21} parent=1 // pred_check
      _
    $region3: #{stage_module_forward.21} parent=1 // pred_check_branch
      %11 = sbr.rel (0) target = $region5
    $region4: #{stage_module_forward.21} parent=1 // pred_region
      _
    $region5: #{stage_module_forward.21} parent=1 // pred_fallthru
      _
    // Predicated region
    $region6: #{stage_module_forward.21} parent=1 // pred_check
      _
    $region7: #{stage_module_forward.21} parent=1 // pred_check_branch
      %13 = sbr.rel (0) target = $region9
    $region8: #{stage_module_forward.21} parent=1 // pred_region
      _
    $region9: #{stage_module_forward.21} parent=1 // pred_fallthru
      _
    // Predicated region
    $region10: #{stage_module_forward.21} parent=1 // pred_check
      _
    $region11: #{stage_module_forward.21} parent=1 // pred_check_branch
      %15 = sbr.rel (0) target = $region13
    $region12: #{stage_module_forward.21} parent=1 // pred_region
      _
    $region13: #{stage_module_forward.21} parent=1 // pred_fallthru
      _
    // Predicated region
    $region14: #{stage_module_forward.21} parent=1 // pred_check
      _
    $region15: #{stage_module_forward.21} parent=1 // pred_check_branch
      %17 = sbr.rel (0) target = $region17
    $region16: #{stage_module_forward.21} parent=1 // pred_region
      _
    $region17: #{stage_module_forward.21} parent=1 // pred_fallthru
      _
    %v19 = vld [vmem:[%s0] sm:$0xff]
    %v20 = vld [vmem:[%s0 + $0x8] sm:$0xff]
    %v21 = vld [vmem:[%s0 + $0x10] sm:$0xff]
    %v22 = vld [vmem:[%s0 + $0x18] sm:$0xff]
    %v23 = vld [vmem:[%s0 + $0x20] sm:$0xff]
    %v24 = vld [vmem:[%s0 + $0x28] sm:$0xff]
    %v25 = vld [vmem:[%s0 + $0x30] sm:$0xff]
    %v26 = vld [vmem:[%s0 + $0x38] sm:$0xff]
    %v27 = vld [vmem:[%s0 + $0x40] sm:$0xff]
    %v28 = vld [vmem:[%s0 + $0x48] sm:$0xff]
    %v29 = vld [vmem:[%s0 + $0x50] sm:$0xff]
    %v30 = vld [vmem:[%s0 + $0x58] sm:$0xff]
    %v31 = vld [vmem:[%s0 + $0x60] sm:$0xff]
    %v32 = vld [vmem:[%s0 + $0x68] sm:$0xff]
    %v33 = vld [vmem:[%s0 + $0x70] sm:$0xff]
    %v34 = vld [vmem:[%s0 + $0x78] sm:$0xff]
    %v35 = vpack.c.bf16 %v20, %v19
    %v36 = vpack.c.bf16 %v22, %v21
    %v37 = vpack.c.bf16 %v24, %v23
    %v38 = vpack.c.bf16 %v26, %v25
    %v39 = vpack.c.bf16 %v28, %v27
    %v40 = vpack.c.bf16 %v30, %v29
    %v41 = vpack.c.bf16 %v32, %v31
    %v42 = vpack.c.bf16 %v34, %v33
    %v43 = vld [vmem:[%s1] sm:$0xff]
    %v44 = vld [vmem:[%s1 + $0x8] sm:$0xff]
    %v45 = vld [vmem:[%s1 + $0x10] sm:$0xff]
    %v46 = vld [vmem:[%s1 + $0x18] sm:$0xff]
    %v47 = vld [vmem:[%s1 + $0x20] sm:$0xff]
    %v48 = vld [vmem:[%s1 + $0x28] sm:$0xff]
    %v49 = vld [vmem:[%s1 + $0x30] sm:$0xff]
    %v50 = vld [vmem:[%s1 + $0x38] sm:$0xff]
    %v51 = vld [vmem:[%s1 + $0x40] sm:$0xff]
    %v52 = vld [vmem:[%s1 + $0x48] sm:$0xff]
    %v53 = vld [vmem:[%s1 + $0x50] sm:$0xff]
    %v54 = vld [vmem:[%s1 + $0x58] sm:$0xff]
    %v55 = vld [vmem:[%s1 + $0x60] sm:$0xff]
    %v56 = vld [vmem:[%s1 + $0x68] sm:$0xff]
    %v57 = vld [vmem:[%s1 + $0x70] sm:$0xff]
    %v58 = vld [vmem:[%s1 + $0x78] sm:$0xff]
    %v59 = vpack.c.bf16 %v44, %v43
    %v60 = vpack.c.bf16 %v46, %v45
    %v61 = vpack.c.bf16 %v48, %v47
    %v62 = vpack.c.bf16 %v50, %v49
    %v63 = vpack.c.bf16 %v52, %v51
    %v64 = vpack.c.bf16 %v54, %v53
    %v65 = vpack.c.bf16 %v56, %v55
    %v66 = vpack.c.bf16 %v58, %v57
    %v67 = vld [vmem:[%s2] sm:$0x1]
    %v69 = vlaneseq
    %v70 = vshrl.u32 %v69, 7
    %v71 = vsub.s32 0, %v70
    %v72 = vrot.slane %v67, %v71
    %74 = vmatprep.subr.bf16.mxu0 0
    %75 = vmatpush1.bf16.msra.mxu0 %v59
    %76 = vmatprep.subr.bf16.mxu0 0
    %77 = vmatpush1.bf16.msra.mxu0 %v60
    %78 = vmatprep.subr.bf16.mxu0 0
    %79 = vmatpush1.bf16.msra.mxu0 %v61
    %80 = vmatprep.subr.bf16.mxu0 0
    %81 = vmatpush1.bf16.msra.mxu0 %v62
    %82 = vmatprep.subr.bf16.mxu0 0
    %83 = vmatpush1.bf16.msra.mxu0 %v63
    %84 = vmatprep.subr.bf16.mxu0 0
    %85 = vmatpush1.bf16.msra.mxu0 %v64
    %86 = vmatprep.subr.bf16.mxu0 0
    %87 = vmatpush1.bf16.msra.mxu0 %v65
    %88 = vmatprep.subr.bf16.mxu0 0
    %89 = vmatpush1.bf16.msra.mxu0 %v66
    %90 = vmatprep.subr.bf16.mxu0 0
    %91 = vmatpush1.bf16.msra.mxu0 0
    %92 = vmatprep.subr.bf16.mxu0 0
    %93 = vmatpush1.bf16.msra.mxu0 0
    %94 = vmatprep.subr.bf16.mxu0 0
    %95 = vmatpush1.bf16.msra.mxu0 0
    %96 = vmatprep.subr.bf16.mxu0 0
    %97 = vmatpush1.bf16.msra.mxu0 0
    %98 = vmatprep.subr.bf16.mxu0 0
    %99 = vmatpush1.bf16.msra.mxu0 0
    %100 = vmatprep.subr.bf16.mxu0 0
    %101 = vmatpush1.bf16.msra.mxu0 0
    %102 = vmatprep.subr.bf16.mxu0 0
    %103 = vmatpush1.bf16.msra.mxu0 0
    %104 = vmatprep.subr.bf16.mxu0 0
    %105 = vmatpush1.bf16.msra.mxu0 0
    %106 = vmatprep.mubr.bf16.mxu0 0
    %107 = vmatmul.mubr.bf16.gmra.mrb[0].mxu0 %v35
    %v108 = vpop.f32.mrb[0].mxu0
    %v109 = vadd.f32 %v72, %v108
    %v110 = vpop.f32.mrb[0].mxu0
    %v111 = vpop.f32.mrb[0].mxu0
    %v112 = vadd.f32 %v72, %v111
    %v113 = vpop.f32.mrb[0].mxu0
    %114 = vmatprep.mubr.bf16.mxu0 0
    %115 = vmatmul.mubr.bf16.gmra.mrb[0].mxu0 %v36
    %v116 = vpop.f32.mrb[0].mxu0
    %v117 = vadd.f32 %v72, %v116
    %v118 = vpop.f32.mrb[0].mxu0
    %v119 = vpop.f32.mrb[0].mxu0
    %v120 = vadd.f32 %v72, %v119
    %v121 = vpop.f32.mrb[0].mxu0
    %122 = vmatprep.mubr.bf16.mxu0 0
    %123 = vmatmul.mubr.bf16.gmra.mrb[0].mxu0 %v37
    %v124 = vpop.f32.mrb[0].mxu0
    %v125 = vadd.f32 %v72, %v124
    %v126 = vpop.f32.mrb[0].mxu0
    %v127 = vpop.f32.mrb[0].mxu0
    %v128 = vadd.f32 %v72, %v127
    %v129 = vpop.f32.mrb[0].mxu0
    %130 = vmatprep.mubr.bf16.mxu0 0
    %131 = vmatmul.mubr.bf16.gmra.mrb[0].mxu0 %v38
    %v132 = vpop.f32.mrb[0].mxu0
    %v133 = vadd.f32 %v72, %v132
    %v134 = vpop.f32.mrb[0].mxu0
    %v135 = vpop.f32.mrb[0].mxu0
    %v136 = vadd.f32 %v72, %v135
    %v137 = vpop.f32.mrb[0].mxu0
    %138 = vmatprep.mubr.bf16.mxu0 0
    %139 = vmatmul.mubr.bf16.gmra.mrb[0].mxu0 %v39
    %v140 = vpop.f32.mrb[0].mxu0
    %v141 = vadd.f32 %v72, %v140
    %v142 = vpop.f32.mrb[0].mxu0
    %v143 = vpop.f32.mrb[0].mxu0
    %v144 = vadd.f32 %v72, %v143
    %v145 = vpop.f32.mrb[0].mxu0
    %146 = vmatprep.mubr.bf16.mxu0 0
    %147 = vmatmul.mubr.bf16.gmra.mrb[0].mxu0 %v40
    %v148 = vpop.f32.mrb[0].mxu0
    %v149 = vadd.f32 %v72, %v148
    %v150 = vpop.f32.mrb[0].mxu0
    %v151 = vpop.f32.mrb[0].mxu0
    %v152 = vadd.f32 %v72, %v151
    %v153 = vpop.f32.mrb[0].mxu0
    %154 = vmatprep.mubr.bf16.mxu0 0
    %155 = vmatmul.mubr.bf16.gmra.mrb[0].mxu0 %v41
    %v156 = vpop.f32.mrb[0].mxu0
    %v157 = vadd.f32 %v72, %v156
    %v158 = vpop.f32.mrb[0].mxu0
    %v159 = vpop.f32.mrb[0].mxu0
    %v160 = vadd.f32 %v72, %v159
    %v161 = vpop.f32.mrb[0].mxu0
    %162 = vmatprep.mubr.bf16.mxu0 0
    %163 = vmatmul.mubr.bf16.gmra.mrb[0].mxu0 %v42
    %v164 = vpop.f32.mrb[0].mxu0
    %v165 = vadd.f32 %v72, %v164
    %v166 = vpop.f32.mrb[0].mxu0
    %v167 = vpop.f32.mrb[0].mxu0
    %v168 = vadd.f32 %v72, %v167
    %v169 = vpop.f32.mrb[0].mxu0
    %170 = vdwg.mxu0
    %v171 = vld [vmem:[%s3] sm:$0xff]
    %v172 = vld [vmem:[%s3 + $0x8] sm:$0xff]
    %v173 = vld [vmem:[%s3 + $0x10] sm:$0xff]
    %v174 = vld [vmem:[%s3 + $0x18] sm:$0xff]
    %v175 = vld [vmem:[%s3 + $0x20] sm:$0xff]
    %v176 = vld [vmem:[%s3 + $0x28] sm:$0xff]
    %v177 = vld [vmem:[%s3 + $0x30] sm:$0xff]
    %v178 = vld [vmem:[%s3 + $0x38] sm:$0xff]
    %v179 = vld [vmem:[%s3 + $0x40] sm:$0xff]
    %v180 = vld [vmem:[%s3 + $0x48] sm:$0xff]
    %v181 = vld [vmem:[%s3 + $0x50] sm:$0xff]
    %v182 = vld [vmem:[%s3 + $0x58] sm:$0xff]
    %v183 = vld [vmem:[%s3 + $0x60] sm:$0xff]
    %v184 = vld [vmem:[%s3 + $0x68] sm:$0xff]
    %v185 = vld [vmem:[%s3 + $0x70] sm:$0xff]
    %v186 = vld [vmem:[%s3 + $0x78] sm:$0xff]
    %v187 = vadd.f32 %v109, %v171
    %v188 = vadd.f32 %v112, %v172
    %v189 = vadd.f32 %v117, %v173
    %v190 = vadd.f32 %v120, %v174
    %v191 = vadd.f32 %v125, %v175
    %v192 = vadd.f32 %v128, %v176
    %v193 = vadd.f32 %v133, %v177
    %v194 = vadd.f32 %v136, %v178
    %v195 = vadd.f32 %v141, %v179
    %v196 = vadd.f32 %v144, %v180
    %v197 = vadd.f32 %v149, %v181
    %v198 = vadd.f32 %v152, %v182
    %v199 = vadd.f32 %v157, %v183
    %v200 = vadd.f32 %v160, %v184
    %v201 = vadd.f32 %v165, %v185
    %v202 = vadd.f32 %v168, %v186
    %vm203 = vcmask 261120
    %204 = vst.msk [vmem:[#allocation2] sm:$0xff] %vm203, %v187
    %205 = vst.msk [vmem:[#allocation2 + $0x8] sm:$0xff] %vm203, %v188
    %206 = vst.msk [vmem:[#allocation2 + $0x10] sm:$0xff] %vm203, %v189
    %207 = vst.msk [vmem:[#allocation2 + $0x18] sm:$0xff] %vm203, %v190
    %208 = vst.msk [vmem:[#allocation2 + $0x20] sm:$0xff] %vm203, %v191
    %209 = vst.msk [vmem:[#allocation2 + $0x28] sm:$0xff] %vm203, %v192
    %210 = vst.msk [vmem:[#allocation2 + $0x30] sm:$0xff] %vm203, %v193
    %211 = vst.msk [vmem:[#allocation2 + $0x38] sm:$0xff] %vm203, %v194
    %212 = vst.msk [vmem:[#allocation2 + $0x40] sm:$0xff] %vm203, %v195
    %213 = vst.msk [vmem:[#allocation2 + $0x48] sm:$0xff] %vm203, %v196
    %214 = vst.msk [vmem:[#allocation2 + $0x50] sm:$0xff] %vm203, %v197
    %215 = vst.msk [vmem:[#allocation2 + $0x58] sm:$0xff] %vm203, %v198
    %216 = vst.msk [vmem:[#allocation2 + $0x60] sm:$0xff] %vm203, %v199
    %217 = vst.msk [vmem:[#allocation2 + $0x68] sm:$0xff] %vm203, %v200
    %218 = vst.msk [vmem:[#allocation2 + $0x70] sm:$0xff] %vm203, %v201
    %219 = vst.msk [vmem:[#allocation2 + $0x78] sm:$0xff] %vm203, %v202
    // Predicated region
    $region18: #{stage_module_forward.21} parent=1 // pred_check
      _
    $region19: #{stage_module_forward.21} parent=1 // pred_check_branch
      %221 = sbr.rel (0) target = $region21
    $region20: #{stage_module_forward.21} parent=1 // pred_region
      %s223 = ssub.s32 2048, 2048
      %224 = vsyncadd [#allocation3], %s223
      %s225 = sshll.u32 [#allocation2], 4
      %s226 = int_to_ptr.vmem [resolvable:$true] %s225
      %231 = dma.vmem_to_hbm [thread:$0]  %s226, 2048, %s4, [#allocation3], 128, 128, 8
    $region21: #{stage_module_forward.21} parent=1 // pred_fallthru
      _
    // Predicated region
    $region22: #{stage_module_forward.21} parent=1 // pred_check
      _
    $region23: #{stage_module_forward.21} parent=1 // pred_check_branch
      %233 = sbr.rel (0) target = $region25
    $region24: #{stage_module_forward.21} parent=1 // pred_region
      %234 = dma.done [#allocation3], 2048
    $region25: #{stage_module_forward.21} parent=1 // pred_fallthru
      _
    %235 = vsyncpa [#allocation3], 1

</llo_original>
